<compile_context>
chip_gen: v6e
topology: v6e:2x2x1
jax: 0.10.0
libtpu: 0.0.40
codegen_flags: <defaults>
</compile_context>

<pallas_src>
import functools
import math

import jax
import jax.numpy as jnp
from jax.experimental import pallas as pl
from jax.experimental.pallas import tpu as pltpu


# ---------------------------------------------------------------------------
# Kernel: one full encoder layer for a (Bt, S, D) batch tile
# ---------------------------------------------------------------------------
def encoder_layer_kernel(
    x_ref,
    wqkv_ref, bqkv_ref, wo_ref, bo_ref,
    ln1_g_ref, ln1_b_ref,
    w1_ref, b1_ref, w2_ref, b2_ref,
    ln2_g_ref, ln2_b_ref,
    o_ref,
    *, num_heads, ff_tile, eps=1e-5,
):
    Bt, S, D = x_ref.shape
    H = num_heads
    dh = D // H
    N = Bt * S
    d_ff = w1_ref.shape[1]

    # Single read of the input tile; f32 residual base, bf16 MXU operand.
    x2 = x_ref[...].reshape(N, D).astype(jnp.float32)           # (N, D) residual
    xb = x2.astype(jnp.bfloat16)

    # ---- fused QKV projection: one lane-dense (N, D) @ (D, 3D) MXU matmul ----
    # 1/sqrt(dh) is pre-folded into the Wq/bq third of the fused weight.
    qkv = (jnp.dot(xb, wqkv_ref[...], preferred_element_type=jnp.float32)
           + bqkv_ref[...])                                      # (N, 3D) f32

    # ---- per-head attention on lane slices of the fused projection -----------
    # TODO(synk): attention-mask path (masked_fill with -1e9) not implemented;
    # the module is exercised with mask=None (inference semantics).
    # TODO(synk): for very large S, switch to flash-style KV tiling (online
    # softmax) so VMEM is O(S * block) instead of O(S^2).
    # TODO(synk): for large H (8-16), convert this static unroll into a
    # lax.fori_loop writing into a VMEM scratch to bound live ranges.
    heads = []
    for h in range(H):
        q = qkv[:, h * dh:(h + 1) * dh].reshape(Bt, S, dh).astype(jnp.bfloat16)
        k = qkv[:, D + h * dh:D + (h + 1) * dh].reshape(Bt, S, dh).astype(jnp.bfloat16)
        v = qkv[:, 2 * D + h * dh:2 * D + (h + 1) * dh].reshape(Bt, S, dh).astype(jnp.bfloat16)

        s = jnp.einsum("bqe,bke->bqk", q, k,
                       preferred_element_type=jnp.float32)       # (Bt, S, S)
        m = jnp.max(s, axis=-1, keepdims=True)
        e = jnp.exp(s - m)                                       # f32 exp (EUP)
        p = e * pl.reciprocal(jnp.sum(e, axis=-1, keepdims=True), approx=True)
        a = jnp.einsum("bqk,bke->bqe", p.astype(jnp.bfloat16), v,
                       preferred_element_type=jnp.float32)       # (Bt, S, dh)
        heads.append(a.reshape(N, dh))

    # concat-of-heads is lane-contiguous -> one full-K output projection.
    attn = jnp.concatenate(heads, axis=-1)                       # (N, D)
    mha = (jnp.dot(attn.astype(jnp.bfloat16), wo_ref[...],
                   preferred_element_type=jnp.float32) + bo_ref[...])

    # ---- residual 1 + LayerNorm 1 --------------------------------------------
    r1 = x2 + mha
    mu1 = jnp.mean(r1, axis=-1, keepdims=True)
    d1 = r1 - mu1
    h1 = d1 * jax.lax.rsqrt(jnp.mean(d1 * d1, axis=-1, keepdims=True) + eps)
    h1 = h1 * ln1_g_ref[...] + ln1_b_ref[...]
    h1b = h1.astype(jnp.bfloat16)

    # ---- FFN, chunked over d_ff (bounds the f32 intermediate to N x ff_tile) --
    ffn = jnp.zeros((N, D), jnp.float32)
    for j in range(0, d_ff, ff_tile):
        f = (jnp.dot(h1b, w1_ref[:, j:j + ff_tile],
                     preferred_element_type=jnp.float32) + b1_ref[:, j:j + ff_tile])
        f = jnp.maximum(f, 0.0).astype(jnp.bfloat16)
        ffn = ffn + jnp.dot(f, w2_ref[j:j + ff_tile, :],
                            preferred_element_type=jnp.float32)
    ffn = ffn + b2_ref[...]

    # ---- residual 2 + LayerNorm 2 --------------------------------------------
    # Residual base is r1 (= x + MHA), matching the reference module where the
    # second add is `x = x + dropout2(ff(layernorm1(x)))` with x still == r1.
    r2 = r1 + ffn
    mu2 = jnp.mean(r2, axis=-1, keepdims=True)
    d2 = r2 - mu2
    out = d2 * jax.lax.rsqrt(jnp.mean(d2 * d2, axis=-1, keepdims=True) + eps)
    out = out * ln2_g_ref[...] + ln2_b_ref[...]

    o_ref[...] = out.reshape(Bt, S, D).astype(o_ref.dtype)


# ---------------------------------------------------------------------------
# pallas_call wrapper
# ---------------------------------------------------------------------------
_FF_TILE_MAX = 1024
_WEIGHT_SINGLE_BUFFER_OK = True  # flipped to False if pl.Buffered(1) is rejected


def _ff_tile(d_ff):
    if d_ff <= _FF_TILE_MAX:
        return d_ff
    for t in range(_FF_TILE_MAX, 0, -1):
        if d_ff % t == 0:
            return t
    return d_ff


def _vmem_capacity_bytes():
    """Physical VMEM per TensorCore; conservative 64 MiB (v7x) fallback."""
    try:
        info = pltpu.get_tpu_info()
        for attr in ("vmem_capacity_bytes", "vmem_size_bytes", "vmem_bytes"):
            v = getattr(info, attr, None)
            if v:
                return int(v)
    except Exception:
        pass
    return 64 * 1024 * 1024


def _select_batch_tile(B, S, D, d_ff, ff_tile, x_itemsize, weight_bytes, budget):
    """Largest divisor of B whose per-step VMEM footprint fits the byte budget."""
    def step_bytes(bt):
        n = bt * S
        io = 2 * 2 * bt * S * D * x_itemsize      # double-buffered in + out tiles
        qkv = n * 3 * D * 4                       # fused-projection f32 slab
        scores = 3 * bt * S * S * 4               # s / e / p live for one head
        attn = 2 * n * D * 4                      # head outputs + concat + mha
        ffn = n * ff_tile * 4 + n * D * 4         # chunked FFN intermediates
        resid = 4 * n * D * 4                     # x2 / r1 / h1 / out f32
        return io + qkv + scores + attn + ffn + resid

    best = 1
    for cand in range(1, B + 1):
        if B % cand == 0 and weight_bytes + step_bytes(cand) <= budget:
            best = cand
    # Keep the grid >= 2 when possible so ("parallel",) can shard across the
    # two TensorCores on v7x-class parts.
    if best == B and B > 1 and B % 2 == 0:
        best = B // 2
    return best


def _cost_estimate(B, S, D, d_ff, H, x_itemsize, weight_bytes):
    n = B * S
    flops = (2 * n * D * 3 * D          # fused QKV projection
             + 2 * B * S * S * D * 2    # QK^T + P@V over all heads
             + 2 * n * D * D            # output projection
             + 2 * n * D * d_ff * 2)    # FFN
    transcendentals = B * H * S * S     # softmax exp
    bytes_accessed = 2 * B * S * D * x_itemsize + weight_bytes
    return pl.CostEstimate(flops=int(flops),
                           transcendentals=int(transcendentals),
                           bytes_accessed=int(bytes_accessed))


def _full_spec(arr, pipeline_mode):
    nd = arr.ndim
    if pipeline_mode is None:
        return pl.BlockSpec(arr.shape, lambda b, _nd=nd: (0,) * _nd)
    return pl.BlockSpec(arr.shape, lambda b, _nd=nd: (0,) * _nd,
                        pipeline_mode=pipeline_mode)


def run_encoder_layer(x, p, *, num_heads, batch_tile=None):
    global _WEIGHT_SINGLE_BUFFER_OK
    B, S, D = x.shape
    d_ff = p["w1"].shape[1]
    ff_tile = _ff_tile(d_ff)

    weights = (p["wqkv"], p["bqkv"], p["wo"], p["bo"],
               p["ln1_g"], p["ln1_b"],
               p["w1"], p["b1"], p["w2"], p["b2"],
               p["ln2_g"], p["ln2_b"])
    weight_bytes = sum(int(w.size) * w.dtype.itemsize for w in weights)

    vmem_cap = _vmem_capacity_bytes()
    vmem_limit = min(int(0.75 * vmem_cap), 128 * 1024 * 1024)  # ~96 MiB v5e/v6e, ~48 MiB v7x
    budget = int(0.85 * vmem_limit)
    if batch_tile is None:
        # Count weights x2 in the budget in case the single-buffer request is rejected.
        batch_tile = _select_batch_tile(B, S, D, d_ff, ff_tile,
                                        x.dtype.itemsize, 2 * weight_bytes, budget)
    grid = (B // batch_tile,)

    kernel = functools.partial(encoder_layer_kernel, num_heads=num_heads,
                               ff_tile=ff_tile, eps=1e-5)
    cost = _cost_estimate(B, S, D, d_ff, num_heads, x.dtype.itemsize, weight_bytes)

    def build(weight_mode):
        in_specs = [pl.BlockSpec((batch_tile, S, D), lambda b: (b, 0, 0))]
        in_specs += [_full_spec(w, weight_mode) for w in weights]
        return pl.pallas_call(
            kernel,
            out_shape=jax.ShapeDtypeStruct((B, S, D), x.dtype),
            grid=grid,
            in_specs=in_specs,
            out_specs=pl.BlockSpec((batch_tile, S, D), lambda b: (b, 0, 0)),
            compiler_params=pltpu.CompilerParams(
                dimension_semantics=("parallel",),
                vmem_limit_bytes=vmem_limit,
            ),
            cost_estimate=cost,
        )

    # Weight index maps are constant across the grid -> request single buffering
    # (pure VMEM saving); fall back gracefully if the pipeline mode is rejected.
    if _WEIGHT_SINGLE_BUFFER_OK:
        try:
            return build(pl.Buffered(1))(x, *weights)
        except Exception:
            _WEIGHT_SINGLE_BUFFER_OK = False
    return build(None)(x, *weights)


# ---------------------------------------------------------------------------
# Parameter init (PyTorch-style) + kernel-side layout preparation
# ---------------------------------------------------------------------------
def _linear_init(key, fan_in, fan_out):
    kw, kb = jax.random.split(key)
    bound = 1.0 / math.sqrt(fan_in)
    w = jax.random.uniform(kw, (fan_in, fan_out), jnp.float32, -bound, bound)
    b = jax.random.uniform(kb, (fan_out,), jnp.float32, -bound, bound)
    return w, b


def init_encoder_params(key, d_model, num_heads, d_ff, num_layers):
    """Canonical parameters: Linear weights stored (in, out) so y = x @ W + b."""
    layers = []
    for _ in range(num_layers):
        key, k1, k2, k3, k4, k5, k6 = jax.random.split(key, 7)
        wq, bq = _linear_init(k1, d_model, d_model)
        wk, bk = _linear_init(k2, d_model, d_model)
        wv, bv = _linear_init(k3, d_model, d_model)
        wo, bo = _linear_init(k4, d_model, d_model)
        w1, b1 = _linear_init(k5, d_model, d_ff)
        w2, b2 = _linear_init(k6, d_ff, d_model)
        layers.append(dict(
            wq=wq, bq=bq, wk=wk, bk=bk, wv=wv, bv=bv, wo=wo, bo=bo,
            ln1_g=jnp.ones((d_model,), jnp.float32),
            ln1_b=jnp.zeros((d_model,), jnp.float32),
            w1=w1, b1=b1, w2=w2, b2=b2,
            ln2_g=jnp.ones((d_model,), jnp.float32),
            ln2_b=jnp.zeros((d_model,), jnp.float32),
        ))
    return layers


def prepare_layer_params(raw, num_heads, compute_dtype=jnp.bfloat16):
    """Kernel layout: fused Wq|Wk|Wv -> (D, 3D) bf16 slab (1/sqrt(dh) folded into
    the Wq/bq third), Wo kept as (D, D), matmul weights bf16 (f32 accumulation
    in-kernel), biases / LayerNorm params f32 and lane-shaped (1, n).
    NOTE: real configs should use D, dh, d_ff as multiples of 128 for lane-dense
    MXU tiles; small demo shapes are padded by the compiler (correct but slow)."""
    D = raw["wq"].shape[0]
    d_ff = raw["w1"].shape[1]
    dh = D // num_heads
    scale = 1.0 / math.sqrt(dh)

    wqkv = jnp.concatenate([raw["wq"] * scale, raw["wk"], raw["wv"]], axis=1)
    bqkv = jnp.concatenate([raw["bq"] * scale, raw["bk"], raw["bv"]]).reshape(1, 3 * D)

    return dict(
        wqkv=wqkv.astype(compute_dtype),
        bqkv=bqkv,
        wo=raw["wo"].astype(compute_dtype),
        bo=raw["bo"].reshape(1, D),
        ln1_g=raw["ln1_g"].reshape(1, D),
        ln1_b=raw["ln1_b"].reshape(1, D),
        w1=raw["w1"].astype(compute_dtype),
        b1=raw["b1"].reshape(1, d_ff),
        w2=raw["w2"].astype(compute_dtype),
        b2=raw["b2"].reshape(1, D),
        ln2_g=raw["ln2_g"].reshape(1, D),
        ln2_b=raw["ln2_b"].reshape(1, D),
    )


# ---------------------------------------------------------------------------
# Positional encoding + full forward (mask=None, dropout=identity)
# ---------------------------------------------------------------------------
def positional_encoding(seq_len, d_model):
    position = jnp.arange(seq_len, dtype=jnp.float32)[:, None]
    div_term = jnp.exp(jnp.arange(0, d_model, 2, dtype=jnp.float32)
                       * (-math.log(10000.0) / d_model))
    pe = jnp.zeros((seq_len, d_model), jnp.float32)
    pe = pe.at[:, 0::2].set(jnp.sin(position * div_term))
    pe = pe.at[:, 1::2].set(jnp.cos(position * div_term))
    return pe[None]                      # (1, seq_len, d_model)


def transformer_encoder_forward(x, layer_params, num_heads):
    B, S, D = x.shape
    x = x + positional_encoding(S, D)    # glue: tiny elementwise add
    for p in layer_params:
        x = run_encoder_layer(x, p, num_heads=num_heads)   # one Pallas kernel per layer
    return x


# ---------------------------------------------------------------------------
if __name__ == "__main__":
    d_model, num_heads, d_ff, num_layers = 32, 4, 64, 2
    B, S = 2, 8

    key = jax.random.PRNGKey(0)
    k_x, k_p = jax.random.split(key)
    x = jax.random.normal(k_x, (B, S, d_model), jnp.float32)

    raw_layers = init_encoder_params(k_p, d_model, num_heads, d_ff, num_layers)
    layers = [prepare_layer_params(r, num_heads) for r in raw_layers]

    out = transformer_encoder_forward(x, layers, num_heads)
    out = jax.block_until_ready(out)
    assert out.shape == (B, S, d_model), out.shape
    print("KERNEL_OK")
</pallas_src>

<mosaic_0001>
module attributes {stable_mosaic.version = 11 : i64} {
  func.func @encoder_layer_kernel(%arg0: i32, %arg1: memref<1x8x32xf32, #tpu.memory_space<vmem>>, %arg2: memref<32x96xbf16, #tpu.memory_space<vmem>>, %arg3: memref<1x96xf32, #tpu.memory_space<vmem>>, %arg4: memref<32x32xbf16, #tpu.memory_space<vmem>>, %arg5: memref<1x32xf32, #tpu.memory_space<vmem>>, %arg6: memref<1x32xf32, #tpu.memory_space<vmem>>, %arg7: memref<1x32xf32, #tpu.memory_space<vmem>>, %arg8: memref<32x64xbf16, #tpu.memory_space<vmem>>, %arg9: memref<1x64xf32, #tpu.memory_space<vmem>>, %arg10: memref<64x32xbf16, #tpu.memory_space<vmem>>, %arg11: memref<1x32xf32, #tpu.memory_space<vmem>>, %arg12: memref<1x32xf32, #tpu.memory_space<vmem>>, %arg13: memref<1x32xf32, #tpu.memory_space<vmem>>, %arg14: memref<1x8x32xf32, #tpu.memory_space<vmem>>) attributes {dimension_semantics = [#tpu.dimension_semantics<parallel>], iteration_bounds = array<i64: 2>, scalar_prefetch = 0 : i64, scratch_operands = 0 : i64, tpu.core_type = #tpu.core_type<tc>, window_params = [{transform_indices = @transform_0, window_bounds = array<i64: 1, 8, 32>}, {pipeline_mode = #tpu.pipeline_mode<synchronous>, transform_indices = @transform_1, window_bounds = array<i64: 32, 96>}, {pipeline_mode = #tpu.pipeline_mode<synchronous>, transform_indices = @transform_2, window_bounds = array<i64: 1, 96>}, {pipeline_mode = #tpu.pipeline_mode<synchronous>, transform_indices = @transform_3, window_bounds = array<i64: 32, 32>}, {pipeline_mode = #tpu.pipeline_mode<synchronous>, transform_indices = @transform_4, window_bounds = array<i64: 1, 32>}, {pipeline_mode = #tpu.pipeline_mode<synchronous>, transform_indices = @transform_5, window_bounds = array<i64: 1, 32>}, {pipeline_mode = #tpu.pipeline_mode<synchronous>, transform_indices = @transform_6, window_bounds = array<i64: 1, 32>}, {pipeline_mode = #tpu.pipeline_mode<synchronous>, transform_indices = @transform_7, window_bounds = array<i64: 32, 64>}, {pipeline_mode = #tpu.pipeline_mode<synchronous>, transform_indices = @transform_8, window_bounds = array<i64: 1, 64>}, {pipeline_mode = #tpu.pipeline_mode<synchronous>, transform_indices = @transform_9, window_bounds = array<i64: 64, 32>}, {pipeline_mode = #tpu.pipeline_mode<synchronous>, transform_indices = @transform_10, window_bounds = array<i64: 1, 32>}, {pipeline_mode = #tpu.pipeline_mode<synchronous>, transform_indices = @transform_11, window_bounds = array<i64: 1, 32>}, {pipeline_mode = #tpu.pipeline_mode<synchronous>, transform_indices = @transform_12, window_bounds = array<i64: 1, 32>}, {transform_indices = @transform_13, window_bounds = array<i64: 1, 8, 32>}]} {
    %c0 = arith.constant 0 : index
    %c0_0 = arith.constant 0 : index
    %c0_1 = arith.constant 0 : index
    %0 = vector.load %arg1[%c0, %c0_0, %c0_1] : memref<1x8x32xf32, #tpu.memory_space<vmem>>, vector<1x8x32xf32>
    %1 = vector.shape_cast %0 : vector<1x8x32xf32> to vector<8x32xf32>
    %2 = arith.truncf %1 : vector<8x32xf32> to vector<8x32xbf16>
    %c0_2 = arith.constant 0 : index
    %c0_3 = arith.constant 0 : index
    %3 = vector.load %arg2[%c0_2, %c0_3] : memref<32x96xbf16, #tpu.memory_space<vmem>>, vector<32x96xbf16>
    %cst = arith.constant dense<0.000000e+00> : vector<8x96xf32>
    %4 = tpu.matmul %2, %3, %cst {dimension_numbers = #tpu.dot_dimension_numbers<[1], [0], [0], [1], [0, 0, 1, 1], [], []>} : vector<8x32xbf16>, vector<32x96xbf16>, vector<8x96xf32> -> vector<8x96xf32>
    %c0_4 = arith.constant 0 : index
    %c0_5 = arith.constant 0 : index
    %5 = vector.load %arg3[%c0_4, %c0_5] : memref<1x96xf32, #tpu.memory_space<vmem>>, vector<1x96xf32>
    %6 = vector.broadcast %5 : vector<1x96xf32> to vector<8x96xf32>
    %7 = arith.addf %4, %6 : vector<8x96xf32>
    %8 = vector.extract_strided_slice %7 {offsets = [0, 0], sizes = [8, 8], strides = [1, 1]} : vector<8x96xf32> to vector<8x8xf32>
    %9 = vector.shape_cast %8 : vector<8x8xf32> to vector<1x8x8xf32>
    %10 = arith.truncf %9 : vector<1x8x8xf32> to vector<1x8x8xbf16>
    %11 = vector.extract_strided_slice %7 {offsets = [0, 32], sizes = [8, 8], strides = [1, 1]} : vector<8x96xf32> to vector<8x8xf32>
    %12 = vector.shape_cast %11 : vector<8x8xf32> to vector<1x8x8xf32>
    %13 = arith.truncf %12 : vector<1x8x8xf32> to vector<1x8x8xbf16>
    %14 = vector.extract_strided_slice %7 {offsets = [0, 64], sizes = [8, 8], strides = [1, 1]} : vector<8x96xf32> to vector<8x8xf32>
    %15 = vector.shape_cast %14 : vector<8x8xf32> to vector<1x8x8xf32>
    %16 = arith.truncf %15 : vector<1x8x8xf32> to vector<1x8x8xbf16>
    "tpu.trace_start"() <{level = 10 : i32, message = "bqe,bke->bqk"}> : () -> ()
    %cst_6 = arith.constant dense<0.000000e+00> : vector<1x8x8xf32>
    %17 = tpu.matmul %10, %13, %cst_6 {dimension_numbers = #tpu.dot_dimension_numbers<[2], [2], [1], [1], [0, 0, 0, 1, 1, 1], [0], [0]>} : vector<1x8x8xbf16>, vector<1x8x8xbf16>, vector<1x8x8xf32> -> vector<1x8x8xf32>
    "tpu.trace_stop"() : () -> ()
    %cst_7 = arith.constant dense<0xFF800000> : vector<1x8xf32>
    %18 = vector.multi_reduction <maximumf>, %17, %cst_7 [2] : vector<1x8x8xf32> to vector<1x8xf32>
    %19 = vector.shape_cast %18 : vector<1x8xf32> to vector<1x8x1xf32>
    %20 = vector.broadcast %19 : vector<1x8x1xf32> to vector<1x8x8xf32>
    %21 = arith.subf %17, %20 : vector<1x8x8xf32>
    %22 = math.exp %21 : vector<1x8x8xf32>
    %cst_8 = arith.constant dense<0.000000e+00> : vector<1x8xf32>
    %23 = vector.multi_reduction <add>, %22, %cst_8 [2] : vector<1x8x8xf32> to vector<1x8xf32>
    %24 = vector.shape_cast %23 : vector<1x8xf32> to vector<1x8x1xf32>
    %25 = tpu.reciprocal %24 {approx = true} : vector<1x8x1xf32> -> vector<1x8x1xf32>
    %26 = vector.broadcast %25 : vector<1x8x1xf32> to vector<1x8x8xf32>
    %27 = arith.mulf %22, %26 : vector<1x8x8xf32>
    %28 = arith.truncf %27 : vector<1x8x8xf32> to vector<1x8x8xbf16>
    "tpu.trace_start"() <{level = 10 : i32, message = "bqk,bke->bqe"}> : () -> ()
    %cst_9 = arith.constant dense<0.000000e+00> : vector<1x8x8xf32>
    %29 = tpu.matmul %28, %16, %cst_9 {dimension_numbers = #tpu.dot_dimension_numbers<[2], [1], [1], [2], [0, 0, 0, 1, 1, 2], [0], [0]>} : vector<1x8x8xbf16>, vector<1x8x8xbf16>, vector<1x8x8xf32> -> vector<1x8x8xf32>
    "tpu.trace_stop"() : () -> ()
    %30 = vector.shape_cast %29 : vector<1x8x8xf32> to vector<8x8xf32>
    %31 = vector.extract_strided_slice %7 {offsets = [0, 8], sizes = [8, 8], strides = [1, 1]} : vector<8x96xf32> to vector<8x8xf32>
    %32 = vector.shape_cast %31 : vector<8x8xf32> to vector<1x8x8xf32>
    %33 = arith.truncf %32 : vector<1x8x8xf32> to vector<1x8x8xbf16>
    %34 = vector.extract_strided_slice %7 {offsets = [0, 40], sizes = [8, 8], strides = [1, 1]} : vector<8x96xf32> to vector<8x8xf32>
    %35 = vector.shape_cast %34 : vector<8x8xf32> to vector<1x8x8xf32>
    %36 = arith.truncf %35 : vector<1x8x8xf32> to vector<1x8x8xbf16>
    %37 = vector.extract_strided_slice %7 {offsets = [0, 72], sizes = [8, 8], strides = [1, 1]} : vector<8x96xf32> to vector<8x8xf32>
    %38 = vector.shape_cast %37 : vector<8x8xf32> to vector<1x8x8xf32>
    %39 = arith.truncf %38 : vector<1x8x8xf32> to vector<1x8x8xbf16>
    "tpu.trace_start"() <{level = 10 : i32, message = "bqe,bke->bqk"}> : () -> ()
    %cst_10 = arith.constant dense<0.000000e+00> : vector<1x8x8xf32>
    %40 = tpu.matmul %33, %36, %cst_10 {dimension_numbers = #tpu.dot_dimension_numbers<[2], [2], [1], [1], [0, 0, 0, 1, 1, 1], [0], [0]>} : vector<1x8x8xbf16>, vector<1x8x8xbf16>, vector<1x8x8xf32> -> vector<1x8x8xf32>
    "tpu.trace_stop"() : () -> ()
    %cst_11 = arith.constant dense<0xFF800000> : vector<1x8xf32>
    %41 = vector.multi_reduction <maximumf>, %40, %cst_11 [2] : vector<1x8x8xf32> to vector<1x8xf32>
    %42 = vector.shape_cast %41 : vector<1x8xf32> to vector<1x8x1xf32>
    %43 = vector.broadcast %42 : vector<1x8x1xf32> to vector<1x8x8xf32>
    %44 = arith.subf %40, %43 : vector<1x8x8xf32>
    %45 = math.exp %44 : vector<1x8x8xf32>
    %cst_12 = arith.constant dense<0.000000e+00> : vector<1x8xf32>
    %46 = vector.multi_reduction <add>, %45, %cst_12 [2] : vector<1x8x8xf32> to vector<1x8xf32>
    %47 = vector.shape_cast %46 : vector<1x8xf32> to vector<1x8x1xf32>
    %48 = tpu.reciprocal %47 {approx = true} : vector<1x8x1xf32> -> vector<1x8x1xf32>
    %49 = vector.broadcast %48 : vector<1x8x1xf32> to vector<1x8x8xf32>
    %50 = arith.mulf %45, %49 : vector<1x8x8xf32>
    %51 = arith.truncf %50 : vector<1x8x8xf32> to vector<1x8x8xbf16>
    "tpu.trace_start"() <{level = 10 : i32, message = "bqk,bke->bqe"}> : () -> ()
    %cst_13 = arith.constant dense<0.000000e+00> : vector<1x8x8xf32>
    %52 = tpu.matmul %51, %39, %cst_13 {dimension_numbers = #tpu.dot_dimension_numbers<[2], [1], [1], [2], [0, 0, 0, 1, 1, 2], [0], [0]>} : vector<1x8x8xbf16>, vector<1x8x8xbf16>, vector<1x8x8xf32> -> vector<1x8x8xf32>
    "tpu.trace_stop"() : () -> ()
    %53 = vector.shape_cast %52 : vector<1x8x8xf32> to vector<8x8xf32>
    %54 = vector.extract_strided_slice %7 {offsets = [0, 16], sizes = [8, 8], strides = [1, 1]} : vector<8x96xf32> to vector<8x8xf32>
    %55 = vector.shape_cast %54 : vector<8x8xf32> to vector<1x8x8xf32>
    %56 = arith.truncf %55 : vector<1x8x8xf32> to vector<1x8x8xbf16>
    %57 = vector.extract_strided_slice %7 {offsets = [0, 48], sizes = [8, 8], strides = [1, 1]} : vector<8x96xf32> to vector<8x8xf32>
    %58 = vector.shape_cast %57 : vector<8x8xf32> to vector<1x8x8xf32>
    %59 = arith.truncf %58 : vector<1x8x8xf32> to vector<1x8x8xbf16>
    %60 = vector.extract_strided_slice %7 {offsets = [0, 80], sizes = [8, 8], strides = [1, 1]} : vector<8x96xf32> to vector<8x8xf32>
    %61 = vector.shape_cast %60 : vector<8x8xf32> to vector<1x8x8xf32>
    %62 = arith.truncf %61 : vector<1x8x8xf32> to vector<1x8x8xbf16>
    "tpu.trace_start"() <{level = 10 : i32, message = "bqe,bke->bqk"}> : () -> ()
    %cst_14 = arith.constant dense<0.000000e+00> : vector<1x8x8xf32>
    %63 = tpu.matmul %56, %59, %cst_14 {dimension_numbers = #tpu.dot_dimension_numbers<[2], [2], [1], [1], [0, 0, 0, 1, 1, 1], [0], [0]>} : vector<1x8x8xbf16>, vector<1x8x8xbf16>, vector<1x8x8xf32> -> vector<1x8x8xf32>
    "tpu.trace_stop"() : () -> ()
    %cst_15 = arith.constant dense<0xFF800000> : vector<1x8xf32>
    %64 = vector.multi_reduction <maximumf>, %63, %cst_15 [2] : vector<1x8x8xf32> to vector<1x8xf32>
    %65 = vector.shape_cast %64 : vector<1x8xf32> to vector<1x8x1xf32>
    %66 = vector.broadcast %65 : vector<1x8x1xf32> to vector<1x8x8xf32>
    %67 = arith.subf %63, %66 : vector<1x8x8xf32>
    %68 = math.exp %67 : vector<1x8x8xf32>
    %cst_16 = arith.constant dense<0.000000e+00> : vector<1x8xf32>
    %69 = vector.multi_reduction <add>, %68, %cst_16 [2] : vector<1x8x8xf32> to vector<1x8xf32>
    %70 = vector.shape_cast %69 : vector<1x8xf32> to vector<1x8x1xf32>
    %71 = tpu.reciprocal %70 {approx = true} : vector<1x8x1xf32> -> vector<1x8x1xf32>
    %72 = vector.broadcast %71 : vector<1x8x1xf32> to vector<1x8x8xf32>
    %73 = arith.mulf %68, %72 : vector<1x8x8xf32>
    %74 = arith.truncf %73 : vector<1x8x8xf32> to vector<1x8x8xbf16>
    "tpu.trace_start"() <{level = 10 : i32, message = "bqk,bke->bqe"}> : () -> ()
    %cst_17 = arith.constant dense<0.000000e+00> : vector<1x8x8xf32>
    %75 = tpu.matmul %74, %62, %cst_17 {dimension_numbers = #tpu.dot_dimension_numbers<[2], [1], [1], [2], [0, 0, 0, 1, 1, 2], [0], [0]>} : vector<1x8x8xbf16>, vector<1x8x8xbf16>, vector<1x8x8xf32> -> vector<1x8x8xf32>
    "tpu.trace_stop"() : () -> ()
    %76 = vector.shape_cast %75 : vector<1x8x8xf32> to vector<8x8xf32>
    %77 = vector.extract_strided_slice %7 {offsets = [0, 24], sizes = [8, 8], strides = [1, 1]} : vector<8x96xf32> to vector<8x8xf32>
    %78 = vector.shape_cast %77 : vector<8x8xf32> to vector<1x8x8xf32>
    %79 = arith.truncf %78 : vector<1x8x8xf32> to vector<1x8x8xbf16>
    %80 = vector.extract_strided_slice %7 {offsets = [0, 56], sizes = [8, 8], strides = [1, 1]} : vector<8x96xf32> to vector<8x8xf32>
    %81 = vector.shape_cast %80 : vector<8x8xf32> to vector<1x8x8xf32>
    %82 = arith.truncf %81 : vector<1x8x8xf32> to vector<1x8x8xbf16>
    %83 = vector.extract_strided_slice %7 {offsets = [0, 88], sizes = [8, 8], strides = [1, 1]} : vector<8x96xf32> to vector<8x8xf32>
    %84 = vector.shape_cast %83 : vector<8x8xf32> to vector<1x8x8xf32>
    %85 = arith.truncf %84 : vector<1x8x8xf32> to vector<1x8x8xbf16>
    "tpu.trace_start"() <{level = 10 : i32, message = "bqe,bke->bqk"}> : () -> ()
    %cst_18 = arith.constant dense<0.000000e+00> : vector<1x8x8xf32>
    %86 = tpu.matmul %79, %82, %cst_18 {dimension_numbers = #tpu.dot_dimension_numbers<[2], [2], [1], [1], [0, 0, 0, 1, 1, 1], [0], [0]>} : vector<1x8x8xbf16>, vector<1x8x8xbf16>, vector<1x8x8xf32> -> vector<1x8x8xf32>
    "tpu.trace_stop"() : () -> ()
    %cst_19 = arith.constant dense<0xFF800000> : vector<1x8xf32>
    %87 = vector.multi_reduction <maximumf>, %86, %cst_19 [2] : vector<1x8x8xf32> to vector<1x8xf32>
    %88 = vector.shape_cast %87 : vector<1x8xf32> to vector<1x8x1xf32>
    %89 = vector.broadcast %88 : vector<1x8x1xf32> to vector<1x8x8xf32>
    %90 = arith.subf %86, %89 : vector<1x8x8xf32>
    %91 = math.exp %90 : vector<1x8x8xf32>
    %cst_20 = arith.constant dense<0.000000e+00> : vector<1x8xf32>
    %92 = vector.multi_reduction <add>, %91, %cst_20 [2] : vector<1x8x8xf32> to vector<1x8xf32>
    %93 = vector.shape_cast %92 : vector<1x8xf32> to vector<1x8x1xf32>
    %94 = tpu.reciprocal %93 {approx = true} : vector<1x8x1xf32> -> vector<1x8x1xf32>
    %95 = vector.broadcast %94 : vector<1x8x1xf32> to vector<1x8x8xf32>
    %96 = arith.mulf %91, %95 : vector<1x8x8xf32>
    %97 = arith.truncf %96 : vector<1x8x8xf32> to vector<1x8x8xbf16>
    "tpu.trace_start"() <{level = 10 : i32, message = "bqk,bke->bqe"}> : () -> ()
    %cst_21 = arith.constant dense<0.000000e+00> : vector<1x8x8xf32>
    %98 = tpu.matmul %97, %85, %cst_21 {dimension_numbers = #tpu.dot_dimension_numbers<[2], [1], [1], [2], [0, 0, 0, 1, 1, 2], [0], [0]>} : vector<1x8x8xbf16>, vector<1x8x8xbf16>, vector<1x8x8xf32> -> vector<1x8x8xf32>
    "tpu.trace_stop"() : () -> ()
    %99 = vector.shape_cast %98 : vector<1x8x8xf32> to vector<8x8xf32>
    %100 = tpu.concatenate %30, %53, %76, %99 in 1 : vector<8x8xf32>, vector<8x8xf32>, vector<8x8xf32>, vector<8x8xf32> -> vector<8x32xf32>
    %101 = arith.truncf %100 : vector<8x32xf32> to vector<8x32xbf16>
    %c0_22 = arith.constant 0 : index
    %c0_23 = arith.constant 0 : index
    %102 = vector.load %arg4[%c0_22, %c0_23] : memref<32x32xbf16, #tpu.memory_space<vmem>>, vector<32x32xbf16>
    %cst_24 = arith.constant dense<0.000000e+00> : vector<8x32xf32>
    %103 = tpu.matmul %101, %102, %cst_24 {dimension_numbers = #tpu.dot_dimension_numbers<[1], [0], [0], [1], [0, 0, 1, 1], [], []>} : vector<8x32xbf16>, vector<32x32xbf16>, vector<8x32xf32> -> vector<8x32xf32>
    %c0_25 = arith.constant 0 : index
    %c0_26 = arith.constant 0 : index
    %104 = vector.load %arg5[%c0_25, %c0_26] : memref<1x32xf32, #tpu.memory_space<vmem>>, vector<1x32xf32>
    %105 = vector.broadcast %104 : vector<1x32xf32> to vector<8x32xf32>
    %106 = arith.addf %103, %105 : vector<8x32xf32>
    %107 = arith.addf %1, %106 : vector<8x32xf32>
    %cst_27 = arith.constant dense<0.000000e+00> : vector<8xf32>
    %108 = vector.multi_reduction <add>, %107, %cst_27 [1] : vector<8x32xf32> to vector<8xf32>
    %109 = vector.shape_cast %108 : vector<8xf32> to vector<8x1xf32>
    %cst_28 = arith.constant 3.200000e+01 : f32
    %110 = vector.broadcast %cst_28 : f32 to vector<8x1xf32>
    %111 = arith.divf %109, %110 : vector<8x1xf32>
    %112 = vector.broadcast %111 : vector<8x1xf32> to vector<8x32xf32>
    %113 = arith.subf %107, %112 : vector<8x32xf32>
    %114 = arith.mulf %113, %113 : vector<8x32xf32>
    %cst_29 = arith.constant dense<0.000000e+00> : vector<8xf32>
    %115 = vector.multi_reduction <add>, %114, %cst_29 [1] : vector<8x32xf32> to vector<8xf32>
    %116 = vector.shape_cast %115 : vector<8xf32> to vector<8x1xf32>
    %cst_30 = arith.constant 3.200000e+01 : f32
    %117 = vector.broadcast %cst_30 : f32 to vector<8x1xf32>
    %118 = arith.divf %116, %117 : vector<8x1xf32>
    %cst_31 = arith.constant 9.99999974E-6 : f32
    %119 = vector.broadcast %cst_31 : f32 to vector<8x1xf32>
    %120 = arith.addf %118, %119 : vector<8x1xf32>
    %121 = math.rsqrt %120 : vector<8x1xf32>
    %122 = vector.broadcast %121 : vector<8x1xf32> to vector<8x32xf32>
    %123 = arith.mulf %113, %122 : vector<8x32xf32>
    %c0_32 = arith.constant 0 : index
    %c0_33 = arith.constant 0 : index
    %124 = vector.load %arg6[%c0_32, %c0_33] : memref<1x32xf32, #tpu.memory_space<vmem>>, vector<1x32xf32>
    %125 = vector.broadcast %124 : vector<1x32xf32> to vector<8x32xf32>
    %126 = arith.mulf %123, %125 : vector<8x32xf32>
    %c0_34 = arith.constant 0 : index
    %c0_35 = arith.constant 0 : index
    %127 = vector.load %arg7[%c0_34, %c0_35] : memref<1x32xf32, #tpu.memory_space<vmem>>, vector<1x32xf32>
    %128 = vector.broadcast %127 : vector<1x32xf32> to vector<8x32xf32>
    %129 = arith.addf %126, %128 : vector<8x32xf32>
    %130 = arith.truncf %129 : vector<8x32xf32> to vector<8x32xbf16>
    %cst_36 = arith.constant 0.000000e+00 : f32
    %131 = vector.broadcast %cst_36 : f32 to vector<8x32xf32>
    %c0_37 = arith.constant 0 : index
    %c0_38 = arith.constant 0 : index
    %132 = vector.load %arg8[%c0_37, %c0_38] : memref<32x64xbf16, #tpu.memory_space<vmem>>, vector<32x64xbf16>
    %cst_39 = arith.constant dense<0.000000e+00> : vector<8x64xf32>
    %133 = tpu.matmul %130, %132, %cst_39 {dimension_numbers = #tpu.dot_dimension_numbers<[1], [0], [0], [1], [0, 0, 1, 1], [], []>} : vector<8x32xbf16>, vector<32x64xbf16>, vector<8x64xf32> -> vector<8x64xf32>
    %c0_40 = arith.constant 0 : index
    %c0_41 = arith.constant 0 : index
    %134 = vector.load %arg9[%c0_40, %c0_41] : memref<1x64xf32, #tpu.memory_space<vmem>>, vector<1x64xf32>
    %135 = vector.broadcast %134 : vector<1x64xf32> to vector<8x64xf32>
    %136 = arith.addf %133, %135 : vector<8x64xf32>
    %cst_42 = arith.constant 0.000000e+00 : f32
    %137 = vector.broadcast %cst_42 : f32 to vector<8x64xf32>
    %138 = arith.maximumf %136, %137 : vector<8x64xf32>
    %139 = arith.truncf %138 : vector<8x64xf32> to vector<8x64xbf16>
    %c0_43 = arith.constant 0 : index
    %c0_44 = arith.constant 0 : index
    %140 = vector.load %arg10[%c0_43, %c0_44] : memref<64x32xbf16, #tpu.memory_space<vmem>>, vector<64x32xbf16>
    %cst_45 = arith.constant dense<0.000000e+00> : vector<8x32xf32>
    %141 = tpu.matmul %139, %140, %cst_45 {dimension_numbers = #tpu.dot_dimension_numbers<[1], [0], [0], [1], [0, 0, 1, 1], [], []>} : vector<8x64xbf16>, vector<64x32xbf16>, vector<8x32xf32> -> vector<8x32xf32>
    %142 = arith.addf %131, %141 : vector<8x32xf32>
    %c0_46 = arith.constant 0 : index
    %c0_47 = arith.constant 0 : index
    %143 = vector.load %arg11[%c0_46, %c0_47] : memref<1x32xf32, #tpu.memory_space<vmem>>, vector<1x32xf32>
    %144 = vector.broadcast %143 : vector<1x32xf32> to vector<8x32xf32>
    %145 = arith.addf %142, %144 : vector<8x32xf32>
    %146 = arith.addf %107, %145 : vector<8x32xf32>
    %cst_48 = arith.constant dense<0.000000e+00> : vector<8xf32>
    %147 = vector.multi_reduction <add>, %146, %cst_48 [1] : vector<8x32xf32> to vector<8xf32>
    %148 = vector.shape_cast %147 : vector<8xf32> to vector<8x1xf32>
    %cst_49 = arith.constant 3.200000e+01 : f32
    %149 = vector.broadcast %cst_49 : f32 to vector<8x1xf32>
    %150 = arith.divf %148, %149 : vector<8x1xf32>
    %151 = vector.broadcast %150 : vector<8x1xf32> to vector<8x32xf32>
    %152 = arith.subf %146, %151 : vector<8x32xf32>
    %153 = arith.mulf %152, %152 : vector<8x32xf32>
    %cst_50 = arith.constant dense<0.000000e+00> : vector<8xf32>
    %154 = vector.multi_reduction <add>, %153, %cst_50 [1] : vector<8x32xf32> to vector<8xf32>
    %155 = vector.shape_cast %154 : vector<8xf32> to vector<8x1xf32>
    %cst_51 = arith.constant 3.200000e+01 : f32
    %156 = vector.broadcast %cst_51 : f32 to vector<8x1xf32>
    %157 = arith.divf %155, %156 : vector<8x1xf32>
    %cst_52 = arith.constant 9.99999974E-6 : f32
    %158 = vector.broadcast %cst_52 : f32 to vector<8x1xf32>
    %159 = arith.addf %157, %158 : vector<8x1xf32>
    %160 = math.rsqrt %159 : vector<8x1xf32>
    %161 = vector.broadcast %160 : vector<8x1xf32> to vector<8x32xf32>
    %162 = arith.mulf %152, %161 : vector<8x32xf32>
    %c0_53 = arith.constant 0 : index
    %c0_54 = arith.constant 0 : index
    %163 = vector.load %arg12[%c0_53, %c0_54] : memref<1x32xf32, #tpu.memory_space<vmem>>, vector<1x32xf32>
    %164 = vector.broadcast %163 : vector<1x32xf32> to vector<8x32xf32>
    %165 = arith.mulf %162, %164 : vector<8x32xf32>
    %c0_55 = arith.constant 0 : index
    %c0_56 = arith.constant 0 : index
    %166 = vector.load %arg13[%c0_55, %c0_56] : memref<1x32xf32, #tpu.memory_space<vmem>>, vector<1x32xf32>
    %167 = vector.broadcast %166 : vector<1x32xf32> to vector<8x32xf32>
    %168 = arith.addf %165, %167 : vector<8x32xf32>
    %169 = vector.shape_cast %168 : vector<8x32xf32> to vector<1x8x32xf32>
    %c0_57 = arith.constant 0 : index
    %c0_58 = arith.constant 0 : index
    %c0_59 = arith.constant 0 : index
    %170 = vector.load %arg14[%c0_57, %c0_58, %c0_59] : memref<1x8x32xf32, #tpu.memory_space<vmem>>, vector<1x8x32xf32>
    tpu.vector_store %arg14[%c0_57, %c0_58, %c0_59], %169 {strides = array<i32>} : memref<1x8x32xf32, #tpu.memory_space<vmem>>, vector<1x8x32xf32>,
    return
  }
  func.func @transform_0(%arg0: i32) -> (i32, i32, i32) {
    %c0_i32 = arith.constant 0 : i32
    %c0_i32_0 = arith.constant 0 : i32
    %c0_i32_1 = arith.constant 0 : i32
    return %arg0, %c0_i32, %c0_i32_0 : i32, i32, i32
  }
  func.func @transform_1(%arg0: i32) -> (i32, i32) {
    %c0_i32 = arith.constant 0 : i32
    %c0_i32_0 = arith.constant 0 : i32
    %c0_i32_1 = arith.constant 0 : i32
    return %c0_i32, %c0_i32_0 : i32, i32
  }
  func.func @transform_2(%arg0: i32) -> (i32, i32) {
    %c0_i32 = arith.constant 0 : i32
    %c0_i32_0 = arith.constant 0 : i32
    %c0_i32_1 = arith.constant 0 : i32
    return %c0_i32, %c0_i32_0 : i32, i32
  }
  func.func @transform_3(%arg0: i32) -> (i32, i32) {
    %c0_i32 = arith.constant 0 : i32
    %c0_i32_0 = arith.constant 0 : i32
    %c0_i32_1 = arith.constant 0 : i32
    return %c0_i32, %c0_i32_0 : i32, i32
  }
  func.func @transform_4(%arg0: i32) -> (i32, i32) {
    %c0_i32 = arith.constant 0 : i32
    %c0_i32_0 = arith.constant 0 : i32
    %c0_i32_1 = arith.constant 0 : i32
    return %c0_i32, %c0_i32_0 : i32, i32
  }
  func.func @transform_5(%arg0: i32) -> (i32, i32) {
    %c0_i32 = arith.constant 0 : i32
    %c0_i32_0 = arith.constant 0 : i32
    %c0_i32_1 = arith.constant 0 : i32
    return %c0_i32, %c0_i32_0 : i32, i32
  }
  func.func @transform_6(%arg0: i32) -> (i32, i32) {
    %c0_i32 = arith.constant 0 : i32
    %c0_i32_0 = arith.constant 0 : i32
    %c0_i32_1 = arith.constant 0 : i32
    return %c0_i32, %c0_i32_0 : i32, i32
  }
  func.func @transform_7(%arg0: i32) -> (i32, i32) {
    %c0_i32 = arith.constant 0 : i32
    %c0_i32_0 = arith.constant 0 : i32
    %c0_i32_1 = arith.constant 0 : i32
    return %c0_i32, %c0_i32_0 : i32, i32
  }
  func.func @transform_8(%arg0: i32) -> (i32, i32) {
    %c0_i32 = arith.constant 0 : i32
    %c0_i32_0 = arith.constant 0 : i32
    %c0_i32_1 = arith.constant 0 : i32
    return %c0_i32, %c0_i32_0 : i32, i32
  }
  func.func @transform_9(%arg0: i32) -> (i32, i32) {
    %c0_i32 = arith.constant 0 : i32
    %c0_i32_0 = arith.constant 0 : i32
    %c0_i32_1 = arith.constant 0 : i32
    return %c0_i32, %c0_i32_0 : i32, i32
  }
  func.func @transform_10(%arg0: i32) -> (i32, i32) {
    %c0_i32 = arith.constant 0 : i32
    %c0_i32_0 = arith.constant 0 : i32
    %c0_i32_1 = arith.constant 0 : i32
    return %c0_i32, %c0_i32_0 : i32, i32
  }
  func.func @transform_11(%arg0: i32) -> (i32, i32) {
    %c0_i32 = arith.constant 0 : i32
    %c0_i32_0 = arith.constant 0 : i32
    %c0_i32_1 = arith.constant 0 : i32
    return %c0_i32, %c0_i32_0 : i32, i32
  }
  func.func @transform_12(%arg0: i32) -> (i32, i32) {
    %c0_i32 = arith.constant 0 : i32
    %c0_i32_0 = arith.constant 0 : i32
    %c0_i32_1 = arith.constant 0 : i32
    return %c0_i32, %c0_i32_0 : i32, i32
  }
  func.func @transform_13(%arg0: i32) -> (i32, i32, i32) {
    %c0_i32 = arith.constant 0 : i32
    %c0_i32_0 = arith.constant 0 : i32
    %c0_i32_1 = arith.constant 0 : i32
    return %arg0, %c0_i32, %c0_i32_0 : i32, i32, i32
  }
}

module attributes {stable_mosaic.version = 11 : i64} {
  func.func @encoder_layer_kernel(%arg0: i32, %arg1: memref<1x8x32xf32, #tpu.memory_space<vmem>>, %arg2: memref<32x96xbf16, #tpu.memory_space<vmem>>, %arg3: memref<1x96xf32, #tpu.memory_space<vmem>>, %arg4: memref<32x32xbf16, #tpu.memory_space<vmem>>, %arg5: memref<1x32xf32, #tpu.memory_space<vmem>>, %arg6: memref<1x32xf32, #tpu.memory_space<vmem>>, %arg7: memref<1x32xf32, #tpu.memory_space<vmem>>, %arg8: memref<32x64xbf16, #tpu.memory_space<vmem>>, %arg9: memref<1x64xf32, #tpu.memory_space<vmem>>, %arg10: memref<64x32xbf16, #tpu.memory_space<vmem>>, %arg11: memref<1x32xf32, #tpu.memory_space<vmem>>, %arg12: memref<1x32xf32, #tpu.memory_space<vmem>>, %arg13: memref<1x32xf32, #tpu.memory_space<vmem>>, %arg14: memref<1x8x32xf32, #tpu.memory_space<vmem>>) attributes {dimension_semantics = [#tpu.dimension_semantics<parallel>], iteration_bounds = array<i64: 2>, scalar_prefetch = 0 : i64, scratch_operands = 0 : i64, tpu.core_type = #tpu.core_type<tc>, window_params = [{transform_indices = @transform_0, window_bounds = array<i64: 1, 8, 32>}, {pipeline_mode = #tpu.pipeline_mode<synchronous>, transform_indices = @transform_1, window_bounds = array<i64: 32, 96>}, {pipeline_mode = #tpu.pipeline_mode<synchronous>, transform_indices = @transform_2, window_bounds = array<i64: 1, 96>}, {pipeline_mode = #tpu.pipeline_mode<synchronous>, transform_indices = @transform_3, window_bounds = array<i64: 32, 32>}, {pipeline_mode = #tpu.pipeline_mode<synchronous>, transform_indices = @transform_4, window_bounds = array<i64: 1, 32>}, {pipeline_mode = #tpu.pipeline_mode<synchronous>, transform_indices = @transform_5, window_bounds = array<i64: 1, 32>}, {pipeline_mode = #tpu.pipeline_mode<synchronous>, transform_indices = @transform_6, window_bounds = array<i64: 1, 32>}, {pipeline_mode = #tpu.pipeline_mode<synchronous>, transform_indices = @transform_7, window_bounds = array<i64: 32, 64>}, {pipeline_mode = #tpu.pipeline_mode<synchronous>, transform_indices = @transform_8, window_bounds = array<i64: 1, 64>}, {pipeline_mode = #tpu.pipeline_mode<synchronous>, transform_indices = @transform_9, window_bounds = array<i64: 64, 32>}, {pipeline_mode = #tpu.pipeline_mode<synchronous>, transform_indices = @transform_10, window_bounds = array<i64: 1, 32>}, {pipeline_mode = #tpu.pipeline_mode<synchronous>, transform_indices = @transform_11, window_bounds = array<i64: 1, 32>}, {pipeline_mode = #tpu.pipeline_mode<synchronous>, transform_indices = @transform_12, window_bounds = array<i64: 1, 32>}, {transform_indices = @transform_13, window_bounds = array<i64: 1, 8, 32>}]} {
    %c0 = arith.constant 0 : index
    %c0_0 = arith.constant 0 : index
    %c0_1 = arith.constant 0 : index
    %0 = vector.load %arg1[%c0, %c0_0, %c0_1] : memref<1x8x32xf32, #tpu.memory_space<vmem>>, vector<1x8x32xf32>
    %1 = vector.shape_cast %0 : vector<1x8x32xf32> to vector<8x32xf32>
    %2 = arith.truncf %1 : vector<8x32xf32> to vector<8x32xbf16>
    %c0_2 = arith.constant 0 : index
    %c0_3 = arith.constant 0 : index
    %3 = vector.load %arg2[%c0_2, %c0_3] : memref<32x96xbf16, #tpu.memory_space<vmem>>, vector<32x96xbf16>
    %cst = arith.constant dense<0.000000e+00> : vector<8x96xf32>
    %4 = tpu.matmul %2, %3, %cst {dimension_numbers = #tpu.dot_dimension_numbers<[1], [0], [0], [1], [0, 0, 1, 1], [], []>} : vector<8x32xbf16>, vector<32x96xbf16>, vector<8x96xf32> -> vector<8x96xf32>
    %c0_4 = arith.constant 0 : index
    %c0_5 = arith.constant 0 : index
    %5 = vector.load %arg3[%c0_4, %c0_5] : memref<1x96xf32, #tpu.memory_space<vmem>>, vector<1x96xf32>
    %6 = vector.broadcast %5 : vector<1x96xf32> to vector<8x96xf32>
    %7 = arith.addf %4, %6 : vector<8x96xf32>
    %8 = vector.extract_strided_slice %7 {offsets = [0, 0], sizes = [8, 8], strides = [1, 1]} : vector<8x96xf32> to vector<8x8xf32>
    %9 = vector.shape_cast %8 : vector<8x8xf32> to vector<1x8x8xf32>
    %10 = arith.truncf %9 : vector<1x8x8xf32> to vector<1x8x8xbf16>
    %11 = vector.extract_strided_slice %7 {offsets = [0, 32], sizes = [8, 8], strides = [1, 1]} : vector<8x96xf32> to vector<8x8xf32>
    %12 = vector.shape_cast %11 : vector<8x8xf32> to vector<1x8x8xf32>
    %13 = arith.truncf %12 : vector<1x8x8xf32> to vector<1x8x8xbf16>
    %14 = vector.extract_strided_slice %7 {offsets = [0, 64], sizes = [8, 8], strides = [1, 1]} : vector<8x96xf32> to vector<8x8xf32>
    %15 = vector.shape_cast %14 : vector<8x8xf32> to vector<1x8x8xf32>
    %16 = arith.truncf %15 : vector<1x8x8xf32> to vector<1x8x8xbf16>
    "tpu.trace_start"() <{level = 10 : i32, message = "bqe,bke->bqk"}> : () -> ()
    %cst_6 = arith.constant dense<0.000000e+00> : vector<1x8x8xf32>
    %17 = tpu.matmul %10, %13, %cst_6 {dimension_numbers = #tpu.dot_dimension_numbers<[2], [2], [1], [1], [0, 0, 0, 1, 1, 1], [0], [0]>} : vector<1x8x8xbf16>, vector<1x8x8xbf16>, vector<1x8x8xf32> -> vector<1x8x8xf32>
    "tpu.trace_stop"() : () -> ()
    %cst_7 = arith.constant dense<0xFF800000> : vector<1x8xf32>
    %18 = vector.multi_reduction <maximumf>, %17, %cst_7 [2] : vector<1x8x8xf32> to vector<1x8xf32>
    %19 = vector.shape_cast %18 : vector<1x8xf32> to vector<1x8x1xf32>
    %20 = vector.broadcast %19 : vector<1x8x1xf32> to vector<1x8x8xf32>
    %21 = arith.subf %17, %20 : vector<1x8x8xf32>
    %22 = math.exp %21 : vector<1x8x8xf32>
    %cst_8 = arith.constant dense<0.000000e+00> : vector<1x8xf32>
    %23 = vector.multi_reduction <add>, %22, %cst_8 [2] : vector<1x8x8xf32> to vector<1x8xf32>
    %24 = vector.shape_cast %23 : vector<1x8xf32> to vector<1x8x1xf32>
    %25 = tpu.reciprocal %24 {approx = true} : vector<1x8x1xf32> -> vector<1x8x1xf32>
    %26 = vector.broadcast %25 : vector<1x8x1xf32> to vector<1x8x8xf32>
    %27 = arith.mulf %22, %26 : vector<1x8x8xf32>
    %28 = arith.truncf %27 : vector<1x8x8xf32> to vector<1x8x8xbf16>
    "tpu.trace_start"() <{level = 10 : i32, message = "bqk,bke->bqe"}> : () -> ()
    %cst_9 = arith.constant dense<0.000000e+00> : vector<1x8x8xf32>
    %29 = tpu.matmul %28, %16, %cst_9 {dimension_numbers = #tpu.dot_dimension_numbers<[2], [1], [1], [2], [0, 0, 0, 1, 1, 2], [0], [0]>} : vector<1x8x8xbf16>, vector<1x8x8xbf16>, vector<1x8x8xf32> -> vector<1x8x8xf32>
    "tpu.trace_stop"() : () -> ()
    %30 = vector.shape_cast %29 : vector<1x8x8xf32> to vector<8x8xf32>
    %31 = vector.extract_strided_slice %7 {offsets = [0, 8], sizes = [8, 8], strides = [1, 1]} : vector<8x96xf32> to vector<8x8xf32>
    %32 = vector.shape_cast %31 : vector<8x8xf32> to vector<1x8x8xf32>
    %33 = arith.truncf %32 : vector<1x8x8xf32> to vector<1x8x8xbf16>
    %34 = vector.extract_strided_slice %7 {offsets = [0, 40], sizes = [8, 8], strides = [1, 1]} : vector<8x96xf32> to vector<8x8xf32>
    %35 = vector.shape_cast %34 : vector<8x8xf32> to vector<1x8x8xf32>
    %36 = arith.truncf %35 : vector<1x8x8xf32> to vector<1x8x8xbf16>
    %37 = vector.extract_strided_slice %7 {offsets = [0, 72], sizes = [8, 8], strides = [1, 1]} : vector<8x96xf32> to vector<8x8xf32>
    %38 = vector.shape_cast %37 : vector<8x8xf32> to vector<1x8x8xf32>
    %39 = arith.truncf %38 : vector<1x8x8xf32> to vector<1x8x8xbf16>
    "tpu.trace_start"() <{level = 10 : i32, message = "bqe,bke->bqk"}> : () -> ()
    %cst_10 = arith.constant dense<0.000000e+00> : vector<1x8x8xf32>
    %40 = tpu.matmul %33, %36, %cst_10 {dimension_numbers = #tpu.dot_dimension_numbers<[2], [2], [1], [1], [0, 0, 0, 1, 1, 1], [0], [0]>} : vector<1x8x8xbf16>, vector<1x8x8xbf16>, vector<1x8x8xf32> -> vector<1x8x8xf32>
    "tpu.trace_stop"() : () -> ()
    %cst_11 = arith.constant dense<0xFF800000> : vector<1x8xf32>
    %41 = vector.multi_reduction <maximumf>, %40, %cst_11 [2] : vector<1x8x8xf32> to vector<1x8xf32>
    %42 = vector.shape_cast %41 : vector<1x8xf32> to vector<1x8x1xf32>
    %43 = vector.broadcast %42 : vector<1x8x1xf32> to vector<1x8x8xf32>
    %44 = arith.subf %40, %43 : vector<1x8x8xf32>
    %45 = math.exp %44 : vector<1x8x8xf32>
    %cst_12 = arith.constant dense<0.000000e+00> : vector<1x8xf32>
    %46 = vector.multi_reduction <add>, %45, %cst_12 [2] : vector<1x8x8xf32> to vector<1x8xf32>
    %47 = vector.shape_cast %46 : vector<1x8xf32> to vector<1x8x1xf32>
    %48 = tpu.reciprocal %47 {approx = true} : vector<1x8x1xf32> -> vector<1x8x1xf32>
    %49 = vector.broadcast %48 : vector<1x8x1xf32> to vector<1x8x8xf32>
    %50 = arith.mulf %45, %49 : vector<1x8x8xf32>
    %51 = arith.truncf %50 : vector<1x8x8xf32> to vector<1x8x8xbf16>
    "tpu.trace_start"() <{level = 10 : i32, message = "bqk,bke->bqe"}> : () -> ()
    %cst_13 = arith.constant dense<0.000000e+00> : vector<1x8x8xf32>
    %52 = tpu.matmul %51, %39, %cst_13 {dimension_numbers = #tpu.dot_dimension_numbers<[2], [1], [1], [2], [0, 0, 0, 1, 1, 2], [0], [0]>} : vector<1x8x8xbf16>, vector<1x8x8xbf16>, vector<1x8x8xf32> -> vector<1x8x8xf32>
    "tpu.trace_stop"() : () -> ()
    %53 = vector.shape_cast %52 : vector<1x8x8xf32> to vector<8x8xf32>
    %54 = vector.extract_strided_slice %7 {offsets = [0, 16], sizes = [8, 8], strides = [1, 1]} : vector<8x96xf32> to vector<8x8xf32>
    %55 = vector.shape_cast %54 : vector<8x8xf32> to vector<1x8x8xf32>
    %56 = arith.truncf %55 : vector<1x8x8xf32> to vector<1x8x8xbf16>
    %57 = vector.extract_strided_slice %7 {offsets = [0, 48], sizes = [8, 8], strides = [1, 1]} : vector<8x96xf32> to vector<8x8xf32>
    %58 = vector.shape_cast %57 : vector<8x8xf32> to vector<1x8x8xf32>
    %59 = arith.truncf %58 : vector<1x8x8xf32> to vector<1x8x8xbf16>
    %60 = vector.extract_strided_slice %7 {offsets = [0, 80], sizes = [8, 8], strides = [1, 1]} : vector<8x96xf32> to vector<8x8xf32>
    %61 = vector.shape_cast %60 : vector<8x8xf32> to vector<1x8x8xf32>
    %62 = arith.truncf %61 : vector<1x8x8xf32> to vector<1x8x8xbf16>
    "tpu.trace_start"() <{level = 10 : i32, message = "bqe,bke->bqk"}> : () -> ()
    %cst_14 = arith.constant dense<0.000000e+00> : vector<1x8x8xf32>
    %63 = tpu.matmul %56, %59, %cst_14 {dimension_numbers = #tpu.dot_dimension_numbers<[2], [2], [1], [1], [0, 0, 0, 1, 1, 1], [0], [0]>} : vector<1x8x8xbf16>, vector<1x8x8xbf16>, vector<1x8x8xf32> -> vector<1x8x8xf32>
    "tpu.trace_stop"() : () -> ()
    %cst_15 = arith.constant dense<0xFF800000> : vector<1x8xf32>
    %64 = vector.multi_reduction <maximumf>, %63, %cst_15 [2] : vector<1x8x8xf32> to vector<1x8xf32>
    %65 = vector.shape_cast %64 : vector<1x8xf32> to vector<1x8x1xf32>
    %66 = vector.broadcast %65 : vector<1x8x1xf32> to vector<1x8x8xf32>
    %67 = arith.subf %63, %66 : vector<1x8x8xf32>
    %68 = math.exp %67 : vector<1x8x8xf32>
    %cst_16 = arith.constant dense<0.000000e+00> : vector<1x8xf32>
    %69 = vector.multi_reduction <add>, %68, %cst_16 [2] : vector<1x8x8xf32> to vector<1x8xf32>
    %70 = vector.shape_cast %69 : vector<1x8xf32> to vector<1x8x1xf32>
    %71 = tpu.reciprocal %70 {approx = true} : vector<1x8x1xf32> -> vector<1x8x1xf32>
    %72 = vector.broadcast %71 : vector<1x8x1xf32> to vector<1x8x8xf32>
    %73 = arith.mulf %68, %72 : vector<1x8x8xf32>
    %74 = arith.truncf %73 : vector<1x8x8xf32> to vector<1x8x8xbf16>
    "tpu.trace_start"() <{level = 10 : i32, message = "bqk,bke->bqe"}> : () -> ()
    %cst_17 = arith.constant dense<0.000000e+00> : vector<1x8x8xf32>
    %75 = tpu.matmul %74, %62, %cst_17 {dimension_numbers = #tpu.dot_dimension_numbers<[2], [1], [1], [2], [0, 0, 0, 1, 1, 2], [0], [0]>} : vector<1x8x8xbf16>, vector<1x8x8xbf16>, vector<1x8x8xf32> -> vector<1x8x8xf32>
    "tpu.trace_stop"() : () -> ()
    %76 = vector.shape_cast %75 : vector<1x8x8xf32> to vector<8x8xf32>
    %77 = vector.extract_strided_slice %7 {offsets = [0, 24], sizes = [8, 8], strides = [1, 1]} : vector<8x96xf32> to vector<8x8xf32>
    %78 = vector.shape_cast %77 : vector<8x8xf32> to vector<1x8x8xf32>
    %79 = arith.truncf %78 : vector<1x8x8xf32> to vector<1x8x8xbf16>
    %80 = vector.extract_strided_slice %7 {offsets = [0, 56], sizes = [8, 8], strides = [1, 1]} : vector<8x96xf32> to vector<8x8xf32>
    %81 = vector.shape_cast %80 : vector<8x8xf32> to vector<1x8x8xf32>
    %82 = arith.truncf %81 : vector<1x8x8xf32> to vector<1x8x8xbf16>
    %83 = vector.extract_strided_slice %7 {offsets = [0, 88], sizes = [8, 8], strides = [1, 1]} : vector<8x96xf32> to vector<8x8xf32>
    %84 = vector.shape_cast %83 : vector<8x8xf32> to vector<1x8x8xf32>
    %85 = arith.truncf %84 : vector<1x8x8xf32> to vector<1x8x8xbf16>
    "tpu.trace_start"() <{level = 10 : i32, message = "bqe,bke->bqk"}> : () -> ()
    %cst_18 = arith.constant dense<0.000000e+00> : vector<1x8x8xf32>
    %86 = tpu.matmul %79, %82, %cst_18 {dimension_numbers = #tpu.dot_dimension_numbers<[2], [2], [1], [1], [0, 0, 0, 1, 1, 1], [0], [0]>} : vector<1x8x8xbf16>, vector<1x8x8xbf16>, vector<1x8x8xf32> -> vector<1x8x8xf32>
    "tpu.trace_stop"() : () -> ()
    %cst_19 = arith.constant dense<0xFF800000> : vector<1x8xf32>
    %87 = vector.multi_reduction <maximumf>, %86, %cst_19 [2] : vector<1x8x8xf32> to vector<1x8xf32>
    %88 = vector.shape_cast %87 : vector<1x8xf32> to vector<1x8x1xf32>
    %89 = vector.broadcast %88 : vector<1x8x1xf32> to vector<1x8x8xf32>
    %90 = arith.subf %86, %89 : vector<1x8x8xf32>
    %91 = math.exp %90 : vector<1x8x8xf32>
    %cst_20 = arith.constant dense<0.000000e+00> : vector<1x8xf32>
    %92 = vector.multi_reduction <add>, %91, %cst_20 [2] : vector<1x8x8xf32> to vector<1x8xf32>
    %93 = vector.shape_cast %92 : vector<1x8xf32> to vector<1x8x1xf32>
    %94 = tpu.reciprocal %93 {approx = true} : vector<1x8x1xf32> -> vector<1x8x1xf32>
    %95 = vector.broadcast %94 : vector<1x8x1xf32> to vector<1x8x8xf32>
    %96 = arith.mulf %91, %95 : vector<1x8x8xf32>
    %97 = arith.truncf %96 : vector<1x8x8xf32> to vector<1x8x8xbf16>
    "tpu.trace_start"() <{level = 10 : i32, message = "bqk,bke->bqe"}> : () -> ()
    %cst_21 = arith.constant dense<0.000000e+00> : vector<1x8x8xf32>
    %98 = tpu.matmul %97, %85, %cst_21 {dimension_numbers = #tpu.dot_dimension_numbers<[2], [1], [1], [2], [0, 0, 0, 1, 1, 2], [0], [0]>} : vector<1x8x8xbf16>, vector<1x8x8xbf16>, vector<1x8x8xf32> -> vector<1x8x8xf32>
    "tpu.trace_stop"() : () -> ()
    %99 = vector.shape_cast %98 : vector<1x8x8xf32> to vector<8x8xf32>
    %100 = tpu.concatenate %30, %53, %76, %99 in 1 : vector<8x8xf32>, vector<8x8xf32>, vector<8x8xf32>, vector<8x8xf32> -> vector<8x32xf32>
    %101 = arith.truncf %100 : vector<8x32xf32> to vector<8x32xbf16>
    %c0_22 = arith.constant 0 : index
    %c0_23 = arith.constant 0 : index
    %102 = vector.load %arg4[%c0_22, %c0_23] : memref<32x32xbf16, #tpu.memory_space<vmem>>, vector<32x32xbf16>
    %cst_24 = arith.constant dense<0.000000e+00> : vector<8x32xf32>
    %103 = tpu.matmul %101, %102, %cst_24 {dimension_numbers = #tpu.dot_dimension_numbers<[1], [0], [0], [1], [0, 0, 1, 1], [], []>} : vector<8x32xbf16>, vector<32x32xbf16>, vector<8x32xf32> -> vector<8x32xf32>
    %c0_25 = arith.constant 0 : index
    %c0_26 = arith.constant 0 : index
    %104 = vector.load %arg5[%c0_25, %c0_26] : memref<1x32xf32, #tpu.memory_space<vmem>>, vector<1x32xf32>
    %105 = vector.broadcast %104 : vector<1x32xf32> to vector<8x32xf32>
    %106 = arith.addf %103, %105 : vector<8x32xf32>
    %107 = arith.addf %1, %106 : vector<8x32xf32>
    %cst_27 = arith.constant dense<0.000000e+00> : vector<8xf32>
    %108 = vector.multi_reduction <add>, %107, %cst_27 [1] : vector<8x32xf32> to vector<8xf32>
    %109 = vector.shape_cast %108 : vector<8xf32> to vector<8x1xf32>
    %cst_28 = arith.constant 3.200000e+01 : f32
    %110 = vector.broadcast %cst_28 : f32 to vector<8x1xf32>
    %111 = arith.divf %109, %110 : vector<8x1xf32>
    %112 = vector.broadcast %111 : vector<8x1xf32> to vector<8x32xf32>
    %113 = arith.subf %107, %112 : vector<8x32xf32>
    %114 = arith.mulf %113, %113 : vector<8x32xf32>
    %cst_29 = arith.constant dense<0.000000e+00> : vector<8xf32>
    %115 = vector.multi_reduction <add>, %114, %cst_29 [1] : vector<8x32xf32> to vector<8xf32>
    %116 = vector.shape_cast %115 : vector<8xf32> to vector<8x1xf32>
    %cst_30 = arith.constant 3.200000e+01 : f32
    %117 = vector.broadcast %cst_30 : f32 to vector<8x1xf32>
    %118 = arith.divf %116, %117 : vector<8x1xf32>
    %cst_31 = arith.constant 9.99999974E-6 : f32
    %119 = vector.broadcast %cst_31 : f32 to vector<8x1xf32>
    %120 = arith.addf %118, %119 : vector<8x1xf32>
    %121 = math.rsqrt %120 : vector<8x1xf32>
    %122 = vector.broadcast %121 : vector<8x1xf32> to vector<8x32xf32>
    %123 = arith.mulf %113, %122 : vector<8x32xf32>
    %c0_32 = arith.constant 0 : index
    %c0_33 = arith.constant 0 : index
    %124 = vector.load %arg6[%c0_32, %c0_33] : memref<1x32xf32, #tpu.memory_space<vmem>>, vector<1x32xf32>
    %125 = vector.broadcast %124 : vector<1x32xf32> to vector<8x32xf32>
    %126 = arith.mulf %123, %125 : vector<8x32xf32>
    %c0_34 = arith.constant 0 : index
    %c0_35 = arith.constant 0 : index
    %127 = vector.load %arg7[%c0_34, %c0_35] : memref<1x32xf32, #tpu.memory_space<vmem>>, vector<1x32xf32>
    %128 = vector.broadcast %127 : vector<1x32xf32> to vector<8x32xf32>
    %129 = arith.addf %126, %128 : vector<8x32xf32>
    %130 = arith.truncf %129 : vector<8x32xf32> to vector<8x32xbf16>
    %cst_36 = arith.constant 0.000000e+00 : f32
    %131 = vector.broadcast %cst_36 : f32 to vector<8x32xf32>
    %c0_37 = arith.constant 0 : index
    %c0_38 = arith.constant 0 : index
    %132 = vector.load %arg8[%c0_37, %c0_38] : memref<32x64xbf16, #tpu.memory_space<vmem>>, vector<32x64xbf16>
    %cst_39 = arith.constant dense<0.000000e+00> : vector<8x64xf32>
    %133 = tpu.matmul %130, %132, %cst_39 {dimension_numbers = #tpu.dot_dimension_numbers<[1], [0], [0], [1], [0, 0, 1, 1], [], []>} : vector<8x32xbf16>, vector<32x64xbf16>, vector<8x64xf32> -> vector<8x64xf32>
    %c0_40 = arith.constant 0 : index
    %c0_41 = arith.constant 0 : index
    %134 = vector.load %arg9[%c0_40, %c0_41] : memref<1x64xf32, #tpu.memory_space<vmem>>, vector<1x64xf32>
    %135 = vector.broadcast %134 : vector<1x64xf32> to vector<8x64xf32>
    %136 = arith.addf %133, %135 : vector<8x64xf32>
    %cst_42 = arith.constant 0.000000e+00 : f32
    %137 = vector.broadcast %cst_42 : f32 to vector<8x64xf32>
    %138 = arith.maximumf %136, %137 : vector<8x64xf32>
    %139 = arith.truncf %138 : vector<8x64xf32> to vector<8x64xbf16>
    %c0_43 = arith.constant 0 : index
    %c0_44 = arith.constant 0 : index
    %140 = vector.load %arg10[%c0_43, %c0_44] : memref<64x32xbf16, #tpu.memory_space<vmem>>, vector<64x32xbf16>
    %cst_45 = arith.constant dense<0.000000e+00> : vector<8x32xf32>
    %141 = tpu.matmul %139, %140, %cst_45 {dimension_numbers = #tpu.dot_dimension_numbers<[1], [0], [0], [1], [0, 0, 1, 1], [], []>} : vector<8x64xbf16>, vector<64x32xbf16>, vector<8x32xf32> -> vector<8x32xf32>
    %142 = arith.addf %131, %141 : vector<8x32xf32>
    %c0_46 = arith.constant 0 : index
    %c0_47 = arith.constant 0 : index
    %143 = vector.load %arg11[%c0_46, %c0_47] : memref<1x32xf32, #tpu.memory_space<vmem>>, vector<1x32xf32>
    %144 = vector.broadcast %143 : vector<1x32xf32> to vector<8x32xf32>
    %145 = arith.addf %142, %144 : vector<8x32xf32>
    %146 = arith.addf %107, %145 : vector<8x32xf32>
    %cst_48 = arith.constant dense<0.000000e+00> : vector<8xf32>
    %147 = vector.multi_reduction <add>, %146, %cst_48 [1] : vector<8x32xf32> to vector<8xf32>
    %148 = vector.shape_cast %147 : vector<8xf32> to vector<8x1xf32>
    %cst_49 = arith.constant 3.200000e+01 : f32
    %149 = vector.broadcast %cst_49 : f32 to vector<8x1xf32>
    %150 = arith.divf %148, %149 : vector<8x1xf32>
    %151 = vector.broadcast %150 : vector<8x1xf32> to vector<8x32xf32>
    %152 = arith.subf %146, %151 : vector<8x32xf32>
    %153 = arith.mulf %152, %152 : vector<8x32xf32>
    %cst_50 = arith.constant dense<0.000000e+00> : vector<8xf32>
    %154 = vector.multi_reduction <add>, %153, %cst_50 [1] : vector<8x32xf32> to vector<8xf32>
    %155 = vector.shape_cast %154 : vector<8xf32> to vector<8x1xf32>
    %cst_51 = arith.constant 3.200000e+01 : f32
    %156 = vector.broadcast %cst_51 : f32 to vector<8x1xf32>
    %157 = arith.divf %155, %156 : vector<8x1xf32>
    %cst_52 = arith.constant 9.99999974E-6 : f32
    %158 = vector.broadcast %cst_52 : f32 to vector<8x1xf32>
    %159 = arith.addf %157, %158 : vector<8x1xf32>
    %160 = math.rsqrt %159 : vector<8x1xf32>
    %161 = vector.broadcast %160 : vector<8x1xf32> to vector<8x32xf32>
    %162 = arith.mulf %152, %161 : vector<8x32xf32>
    %c0_53 = arith.constant 0 : index
    %c0_54 = arith.constant 0 : index
    %163 = vector.load %arg12[%c0_53, %c0_54] : memref<1x32xf32, #tpu.memory_space<vmem>>, vector<1x32xf32>
    %164 = vector.broadcast %163 : vector<1x32xf32> to vector<8x32xf32>
    %165 = arith.mulf %162, %164 : vector<8x32xf32>
    %c0_55 = arith.constant 0 : index
    %c0_56 = arith.constant 0 : index
    %166 = vector.load %arg13[%c0_55, %c0_56] : memref<1x32xf32, #tpu.memory_space<vmem>>, vector<1x32xf32>
    %167 = vector.broadcast %166 : vector<1x32xf32> to vector<8x32xf32>
    %168 = arith.addf %165, %167 : vector<8x32xf32>
    %169 = vector.shape_cast %168 : vector<8x32xf32> to vector<1x8x32xf32>
    %c0_57 = arith.constant 0 : index
    %c0_58 = arith.constant 0 : index
    %c0_59 = arith.constant 0 : index
    %170 = vector.load %arg14[%c0_57, %c0_58, %c0_59] : memref<1x8x32xf32, #tpu.memory_space<vmem>>, vector<1x8x32xf32>
    tpu.vector_store %arg14[%c0_57, %c0_58, %c0_59], %169 {strides = array<i32>} : memref<1x8x32xf32, #tpu.memory_space<vmem>>, vector<1x8x32xf32>,
    return
  }
  func.func @transform_0(%arg0: i32) -> (i32, i32, i32) {
    %c0_i32 = arith.constant 0 : i32
    %c0_i32_0 = arith.constant 0 : i32
    %c0_i32_1 = arith.constant 0 : i32
    return %arg0, %c0_i32, %c0_i32_0 : i32, i32, i32
  }
  func.func @transform_1(%arg0: i32) -> (i32, i32) {
    %c0_i32 = arith.constant 0 : i32
    %c0_i32_0 = arith.constant 0 : i32
    %c0_i32_1 = arith.constant 0 : i32
    return %c0_i32, %c0_i32_0 : i32, i32
  }
  func.func @transform_2(%arg0: i32) -> (i32, i32) {
    %c0_i32 = arith.constant 0 : i32
    %c0_i32_0 = arith.constant 0 : i32
    %c0_i32_1 = arith.constant 0 : i32
    return %c0_i32, %c0_i32_0 : i32, i32
  }
  func.func @transform_3(%arg0: i32) -> (i32, i32) {
    %c0_i32 = arith.constant 0 : i32
    %c0_i32_0 = arith.constant 0 : i32
    %c0_i32_1 = arith.constant 0 : i32
    return %c0_i32, %c0_i32_0 : i32, i32
  }
  func.func @transform_4(%arg0: i32) -> (i32, i32) {
    %c0_i32 = arith.constant 0 : i32
    %c0_i32_0 = arith.constant 0 : i32
    %c0_i32_1 = arith.constant 0 : i32
    return %c0_i32, %c0_i32_0 : i32, i32
  }
  func.func @transform_5(%arg0: i32) -> (i32, i32) {
    %c0_i32 = arith.constant 0 : i32
    %c0_i32_0 = arith.constant 0 : i32
    %c0_i32_1 = arith.constant 0 : i32
    return %c0_i32, %c0_i32_0 : i32, i32
  }
  func.func @transform_6(%arg0: i32) -> (i32, i32) {
    %c0_i32 = arith.constant 0 : i32
    %c0_i32_0 = arith.constant 0 : i32
    %c0_i32_1 = arith.constant 0 : i32
    return %c0_i32, %c0_i32_0 : i32, i32
  }
  func.func @transform_7(%arg0: i32) -> (i32, i32) {
    %c0_i32 = arith.constant 0 : i32
    %c0_i32_0 = arith.constant 0 : i32
    %c0_i32_1 = arith.constant 0 : i32
    return %c0_i32, %c0_i32_0 : i32, i32
  }
  func.func @transform_8(%arg0: i32) -> (i32, i32) {
    %c0_i32 = arith.constant 0 : i32
    %c0_i32_0 = arith.constant 0 : i32
    %c0_i32_1 = arith.constant 0 : i32
    return %c0_i32, %c0_i32_0 : i32, i32
  }
  func.func @transform_9(%arg0: i32) -> (i32, i32) {
    %c0_i32 = arith.constant 0 : i32
    %c0_i32_0 = arith.constant 0 : i32
    %c0_i32_1 = arith.constant 0 : i32
    return %c0_i32, %c0_i32_0 : i32, i32
  }
  func.func @transform_10(%arg0: i32) -> (i32, i32) {
    %c0_i32 = arith.constant 0 : i32
    %c0_i32_0 = arith.constant 0 : i32
    %c0_i32_1 = arith.constant 0 : i32
    return %c0_i32, %c0_i32_0 : i32, i32
  }
  func.func @transform_11(%arg0: i32) -> (i32, i32) {
    %c0_i32 = arith.constant 0 : i32
    %c0_i32_0 = arith.constant 0 : i32
    %c0_i32_1 = arith.constant 0 : i32
    return %c0_i32, %c0_i32_0 : i32, i32
  }
  func.func @transform_12(%arg0: i32) -> (i32, i32) {
    %c0_i32 = arith.constant 0 : i32
    %c0_i32_0 = arith.constant 0 : i32
    %c0_i32_1 = arith.constant 0 : i32
    return %c0_i32, %c0_i32_0 : i32, i32
  }
  func.func @transform_13(%arg0: i32) -> (i32, i32, i32) {
    %c0_i32 = arith.constant 0 : i32
    %c0_i32_0 = arith.constant 0 : i32
    %c0_i32_1 = arith.constant 0 : i32
    return %arg0, %c0_i32, %c0_i32_0 : i32, i32, i32
  }
}

</mosaic_0001>

<llo_original>
// kernel: tpu_custom_call.1
$region0: #{tpu_custom_call.1}
  #allocation0 [shape = 'u32[]', space=smem, size = 0x4, offset = 0x4, fixed_abs, tag = 'smem constant byte address 0x4 - core index']
  #allocation1 [shape = 'u32[144,128]{1,0:T(1,128)}', space=vmem, size = 0x12000, scoped, tag = 'internal scratch']
  %s0 = inlined_call_operand.vmem [shape: f32[2,8,32], index: 0, kind: input, shape index: {}]
  %s1 = inlined_call_operand.vmem [shape: bf16[32,96], index: 1, kind: input, shape index: {}]
  %s2 = inlined_call_operand.hbm [shape: f32[1,96], index: 2, kind: input, shape index: {}]
  %s3 = inlined_call_operand.vmem [shape: bf16[32,32], index: 3, kind: input, shape index: {}]
  %s4 = inlined_call_operand.hbm [shape: f32[1,32], index: 4, kind: input, shape index: {}]
  %s5 = inlined_call_operand.hbm [shape: f32[1,32], index: 5, kind: input, shape index: {}]
  %s6 = inlined_call_operand.hbm [shape: f32[1,32], index: 6, kind: input, shape index: {}]
  %s7 = inlined_call_operand.hbm [shape: bf16[32,64], index: 7, kind: input, shape index: {}]
  %s8 = inlined_call_operand.hbm [shape: f32[1,64], index: 8, kind: input, shape index: {}]
  %s9 = inlined_call_operand.vmem [shape: bf16[64,32], index: 9, kind: input, shape index: {}]
  %s10 = inlined_call_operand.vmem [shape: f32[1,32], index: 10, kind: input, shape index: {}]
  %s11 = inlined_call_operand.vmem [shape: f32[1,32], index: 11, kind: input, shape index: {}]
  %s12 = inlined_call_operand.vmem [shape: f32[1,32], index: 12, kind: input, shape index: {}]
  %s13 = inlined_call_operand.hbm [shape: f32[2,8,32], index: 13, kind: output, shape index: {}]
  %s14 = sld [smem:[#allocation0]]
  $region109: #{tpu_custom_call.1} parent=0
    _
  %s16 = ssub.s32 1, %s14
  %s17 = scalar_select 0, %s16, %s14
  $region1: #{tpu_custom_call.1} parent=0
    #allocation2 [shape = 'u8[512]{0}', space=vmem, size = 0x400, scoped, tag = 'input window, operand 2, single buffered']
    #allocation3 [shape = 's32[2]{0}', space=sflag, size = 0x8, scoped, tag = 'scoped memory for tpu_custom_call.1']
    #allocation4 [shape = 's32[2]{0}', space=sflag, size = 0x8, scoped, tag = 'scoped memory for tpu_custom_call.1']
    #allocation5 [shape = 'u8[512]{0}', space=vmem, size = 0x400, scoped, tag = 'input window, operand 4, single buffered']
    #allocation6 [shape = 's32[1]{0}', space=sflag, size = 0x4, scoped, tag = 'scoped memory for tpu_custom_call.1']
    #allocation7 [shape = 'u8[512]{0}', space=vmem, size = 0x400, scoped, tag = 'input window, operand 5, single buffered']
    #allocation8 [shape = 'u8[512]{0}', space=vmem, size = 0x400, scoped, tag = 'input window, operand 6, single buffered']
    #allocation9 [shape = 's32[1]{0}', space=sflag, size = 0x4, scoped, tag = 'scoped memory for tpu_custom_call.1']
    #allocation10 [shape = 'u8[8192]{0}', space=vmem, size = 0x2000, scoped, tag = 'input window, operand 7, single buffered']
    #allocation11 [shape = 'u8[512]{0}', space=vmem, size = 0x400, scoped, tag = 'input window, operand 8, single buffered']
    #allocation12 [shape = 's32[1]{0}', space=sflag, size = 0x4, scoped, tag = 'scoped memory for tpu_custom_call.1']
    #allocation13 [shape = 'u8[8192]{0}', space=vmem, size = 0x2000, scoped, tag = 'output window, operand 0']
    %18 = vsyncpa [#allocation3], 0
    %19 = vsyncpa [#allocation6], 0
    %20 = vsyncpa [#allocation9], 0
    %21 = vsyncpa [#allocation12], 0
    %22 = vsyncpa [#allocation4], 0
    %s23 = scalar_lea.sflag [#allocation4], 1
    %24 = vsyncpa %s23, 0
    loop: start=0, step=1, limit=4
    $region2: #{tpu_custom_call.1} parent=1 // loop_pre_header
      _
    $region3: #{tpu_custom_call.1} parent=1 // loop_header
      %s26 = sphi 0, %s30
      %p27 = scmp.ge.s32.totalorder %s26, 4
      %s36 = sphi 0, %s38
      %s39 = sphi 0, %s36
      %s40 = sphi 0, %s39
      %s56 = sphi 0, %s40
      %s60 = sphi 0, %s60
      %s62 = sphi 0, %s60
      %s63 = sphi 0, %s62
      %s77 = sphi 0, %s63
      %s81 = sphi 0, %s81
      %s83 = sphi 0, %s81
      %s84 = sphi 0, %s83
      %s98 = sphi 0, %s84
      %s102 = sphi 0, %s102
      %s104 = sphi 0, %s102
      %s105 = sphi 0, %s104
      %s119 = sphi 0, %s105
      %s123 = sphi 0, %s123
      %s125 = sphi 0, %s123
      %s126 = sphi 0, %s125
      %s140 = sphi 0, %s126
      %s144 = sphi 0, %s144
      %s146 = sphi 0, %s144
      %s147 = sphi 0, %s146
      %s161 = sphi 0, %s147
      %s165 = sphi 0, %s165
      %s167 = sphi 0, %s165
      %s168 = sphi 0, %s167
      %s182 = sphi 0, %s168
      %s186 = sphi 0, %s186
      %s188 = sphi 0, %s186
      %s189 = sphi 0, %s188
      %s203 = sphi 0, %s189
      %s207 = sphi 0, %s207
      %s209 = sphi 0, %s207
      %s210 = sphi 0, %s209
      %s224 = sphi 0, %s210
      %s228 = sphi 0, %s228
      %s230 = sphi 0, %s228
      %s231 = sphi 0, %s230
      %s245 = sphi 0, %s231
      %s249 = sphi 0, %s249
      %s251 = sphi 0, %s249
      %s252 = sphi 0, %s251
      %s266 = sphi 0, %s252
      %s270 = sphi 0, %s270
      %s272 = sphi 0, %s270
      %s273 = sphi 0, %s272
      %s287 = sphi 0, %s273
      %s291 = sphi 0, %s291
      %s293 = sphi 0, %s291
      %s294 = sphi 0, %s293
      %s308 = sphi 0, %s294
      %s314 = sphi 0, %s316
      %s317 = sphi 0, %s314
      %s318 = sphi 0, %s317
      %s334 = sphi 0, %s318
    $region4: #{tpu_custom_call.1} parent=1 // loop_header_branch
      %29 = sbr.rel (%p27) target = $region8
    $region5: #{tpu_custom_call.1} parent=1 // loop_body
      %s31 = ssub.s32 %s26, 1
      %s32 = ssub.s32 %s26, 2
      %s33 = sadd.s32 %s26, 1
      %s34 = ssub.s32 %s26, %s33
      %p35 = scmp.eq.s32.totalorder %s34, 0
      %s37 = sadd.s32 %s36, 1
      %s38 = scalar_select %p35, %s36, %s37
      %p41 = pneg %p35
      %p42 = scmp.eq.s32.totalorder %s26, 1
      %p43 = por %p41, %p42
      %p44 = scmp.ne.s32.totalorder %s36, %s39
      %p45 = scmp.eq.s32.totalorder %s26, 0
      %p46 = por %p44, %p45
      %p47 = scmp.ne.s32.totalorder %s36, %s39
      %p48 = scmp.eq.s32.totalorder %s31, 1
      %p49 = por %p47, %p48
      %p50 = scmp.ne.s32.totalorder %s39, %s40
      %p51 = scmp.eq.s32.totalorder %s31, 0
      %p52 = por %p50, %p51
      %p53 = scmp.ne.s32.totalorder %s39, %s40
      %p54 = scmp.eq.s32.totalorder %s32, 1
      %p55 = por %p53, %p54
      %p57 = scmp.ne.s32.totalorder %s40, %s56
      %p58 = scmp.eq.s32.totalorder %s32, 0
      %p59 = por %p57, %p58
      %s61 = sadd.s32 %s60, 1
      %p64 = scmp.eq.s32.totalorder %s26, 1
      %p65 = scmp.ne.s32.totalorder %s60, %s62
      %p66 = scmp.eq.s32.totalorder %s26, 0
      %p67 = por %p65, %p66
      %p68 = scmp.ne.s32.totalorder %s60, %s62
      %p69 = scmp.eq.s32.totalorder %s31, 1
      %p70 = por %p68, %p69
      %p71 = scmp.ne.s32.totalorder %s62, %s63
      %p72 = scmp.eq.s32.totalorder %s31, 0
      %p73 = por %p71, %p72
      %p74 = scmp.ne.s32.totalorder %s62, %s63
      %p75 = scmp.eq.s32.totalorder %s32, 1
      %p76 = por %p74, %p75
      %p78 = scmp.ne.s32.totalorder %s63, %s77
      %p79 = scmp.eq.s32.totalorder %s32, 0
      %p80 = por %p78, %p79
      %s82 = sadd.s32 %s81, 1
      %p85 = scmp.eq.s32.totalorder %s26, 1
      %p86 = scmp.ne.s32.totalorder %s81, %s83
      %p87 = scmp.eq.s32.totalorder %s26, 0
      %p88 = por %p86, %p87
      %p89 = scmp.ne.s32.totalorder %s81, %s83
      %p90 = scmp.eq.s32.totalorder %s31, 1
      %p91 = por %p89, %p90
      %p92 = scmp.ne.s32.totalorder %s83, %s84
      %p93 = scmp.eq.s32.totalorder %s31, 0
      %p94 = por %p92, %p93
      %p95 = scmp.ne.s32.totalorder %s83, %s84
      %p96 = scmp.eq.s32.totalorder %s32, 1
      %p97 = por %p95, %p96
      %p99 = scmp.ne.s32.totalorder %s84, %s98
      %p100 = scmp.eq.s32.totalorder %s32, 0
      %p101 = por %p99, %p100
      %s103 = sadd.s32 %s102, 1
      %p106 = scmp.eq.s32.totalorder %s26, 1
      %p107 = scmp.ne.s32.totalorder %s102, %s104
      %p108 = scmp.eq.s32.totalorder %s26, 0
      %p109 = por %p107, %p108
      %p110 = scmp.ne.s32.totalorder %s102, %s104
      %p111 = scmp.eq.s32.totalorder %s31, 1
      %p112 = por %p110, %p111
      %p113 = scmp.ne.s32.totalorder %s104, %s105
      %p114 = scmp.eq.s32.totalorder %s31, 0
      %p115 = por %p113, %p114
      %p116 = scmp.ne.s32.totalorder %s104, %s105
      %p117 = scmp.eq.s32.totalorder %s32, 1
      %p118 = por %p116, %p117
      %p120 = scmp.ne.s32.totalorder %s105, %s119
      %p121 = scmp.eq.s32.totalorder %s32, 0
      %p122 = por %p120, %p121
      %s124 = sadd.s32 %s123, 1
      %p127 = scmp.eq.s32.totalorder %s26, 1
      %p128 = scmp.ne.s32.totalorder %s123, %s125
      %p129 = scmp.eq.s32.totalorder %s26, 0
      %p130 = por %p128, %p129
      %p131 = scmp.ne.s32.totalorder %s123, %s125
      %p132 = scmp.eq.s32.totalorder %s31, 1
      %p133 = por %p131, %p132
      %p134 = scmp.ne.s32.totalorder %s125, %s126
      %p135 = scmp.eq.s32.totalorder %s31, 0
      %p136 = por %p134, %p135
      %p137 = scmp.ne.s32.totalorder %s125, %s126
      %p138 = scmp.eq.s32.totalorder %s32, 1
      %p139 = por %p137, %p138
      %p141 = scmp.ne.s32.totalorder %s126, %s140
      %p142 = scmp.eq.s32.totalorder %s32, 0
      %p143 = por %p141, %p142
      %s145 = sadd.s32 %s144, 1
      %p148 = scmp.eq.s32.totalorder %s26, 1
      %p149 = scmp.ne.s32.totalorder %s144, %s146
      %p150 = scmp.eq.s32.totalorder %s26, 0
      %p151 = por %p149, %p150
      %p152 = scmp.ne.s32.totalorder %s144, %s146
      %p153 = scmp.eq.s32.totalorder %s31, 1
      %p154 = por %p152, %p153
      %p155 = scmp.ne.s32.totalorder %s146, %s147
      %p156 = scmp.eq.s32.totalorder %s31, 0
      %p157 = por %p155, %p156
      %p158 = scmp.ne.s32.totalorder %s146, %s147
      %p159 = scmp.eq.s32.totalorder %s32, 1
      %p160 = por %p158, %p159
      %p162 = scmp.ne.s32.totalorder %s147, %s161
      %p163 = scmp.eq.s32.totalorder %s32, 0
      %p164 = por %p162, %p163
      %s166 = sadd.s32 %s165, 1
      %p169 = scmp.eq.s32.totalorder %s26, 1
      %p170 = scmp.ne.s32.totalorder %s165, %s167
      %p171 = scmp.eq.s32.totalorder %s26, 0
      %p172 = por %p170, %p171
      %p173 = scmp.ne.s32.totalorder %s165, %s167
      %p174 = scmp.eq.s32.totalorder %s31, 1
      %p175 = por %p173, %p174
      %p176 = scmp.ne.s32.totalorder %s167, %s168
      %p177 = scmp.eq.s32.totalorder %s31, 0
      %p178 = por %p176, %p177
      %p179 = scmp.ne.s32.totalorder %s167, %s168
      %p180 = scmp.eq.s32.totalorder %s32, 1
      %p181 = por %p179, %p180
      %p183 = scmp.ne.s32.totalorder %s168, %s182
      %p184 = scmp.eq.s32.totalorder %s32, 0
      %p185 = por %p183, %p184
      %s187 = sadd.s32 %s186, 1
      %p190 = scmp.eq.s32.totalorder %s26, 1
      %p191 = scmp.ne.s32.totalorder %s186, %s188
      %p192 = scmp.eq.s32.totalorder %s26, 0
      %p193 = por %p191, %p192
      %p194 = scmp.ne.s32.totalorder %s186, %s188
      %p195 = scmp.eq.s32.totalorder %s31, 1
      %p196 = por %p194, %p195
      %p197 = scmp.ne.s32.totalorder %s188, %s189
      %p198 = scmp.eq.s32.totalorder %s31, 0
      %p199 = por %p197, %p198
      %p200 = scmp.ne.s32.totalorder %s188, %s189
      %p201 = scmp.eq.s32.totalorder %s32, 1
      %p202 = por %p200, %p201
      %p204 = scmp.ne.s32.totalorder %s189, %s203
      %p205 = scmp.eq.s32.totalorder %s32, 0
      %p206 = por %p204, %p205
      %s208 = sadd.s32 %s207, 1
      %p211 = scmp.eq.s32.totalorder %s26, 1
      %p212 = scmp.ne.s32.totalorder %s207, %s209
      %p213 = scmp.eq.s32.totalorder %s26, 0
      %p214 = por %p212, %p213
      %p215 = scmp.ne.s32.totalorder %s207, %s209
      %p216 = scmp.eq.s32.totalorder %s31, 1
      %p217 = por %p215, %p216
      %p218 = scmp.ne.s32.totalorder %s209, %s210
      %p219 = scmp.eq.s32.totalorder %s31, 0
      %p220 = por %p218, %p219
      %p221 = scmp.ne.s32.totalorder %s209, %s210
      %p222 = scmp.eq.s32.totalorder %s32, 1
      %p223 = por %p221, %p222
      %p225 = scmp.ne.s32.totalorder %s210, %s224
      %p226 = scmp.eq.s32.totalorder %s32, 0
      %p227 = por %p225, %p226
      %s229 = sadd.s32 %s228, 1
      %p232 = scmp.eq.s32.totalorder %s26, 1
      %p233 = scmp.ne.s32.totalorder %s228, %s230
      %p234 = scmp.eq.s32.totalorder %s26, 0
      %p235 = por %p233, %p234
      %p236 = scmp.ne.s32.totalorder %s228, %s230
      %p237 = scmp.eq.s32.totalorder %s31, 1
      %p238 = por %p236, %p237
      %p239 = scmp.ne.s32.totalorder %s230, %s231
      %p240 = scmp.eq.s32.totalorder %s31, 0
      %p241 = por %p239, %p240
      %p242 = scmp.ne.s32.totalorder %s230, %s231
      %p243 = scmp.eq.s32.totalorder %s32, 1
      %p244 = por %p242, %p243
      %p246 = scmp.ne.s32.totalorder %s231, %s245
      %p247 = scmp.eq.s32.totalorder %s32, 0
      %p248 = por %p246, %p247
      %s250 = sadd.s32 %s249, 1
      %p253 = scmp.eq.s32.totalorder %s26, 1
      %p254 = scmp.ne.s32.totalorder %s249, %s251
      %p255 = scmp.eq.s32.totalorder %s26, 0
      %p256 = por %p254, %p255
      %p257 = scmp.ne.s32.totalorder %s249, %s251
      %p258 = scmp.eq.s32.totalorder %s31, 1
      %p259 = por %p257, %p258
      %p260 = scmp.ne.s32.totalorder %s251, %s252
      %p261 = scmp.eq.s32.totalorder %s31, 0
      %p262 = por %p260, %p261
      %p263 = scmp.ne.s32.totalorder %s251, %s252
      %p264 = scmp.eq.s32.totalorder %s32, 1
      %p265 = por %p263, %p264
      %p267 = scmp.ne.s32.totalorder %s252, %s266
      %p268 = scmp.eq.s32.totalorder %s32, 0
      %p269 = por %p267, %p268
      %s271 = sadd.s32 %s270, 1
      %p274 = scmp.eq.s32.totalorder %s26, 1
      %p275 = scmp.ne.s32.totalorder %s270, %s272
      %p276 = scmp.eq.s32.totalorder %s26, 0
      %p277 = por %p275, %p276
      %p278 = scmp.ne.s32.totalorder %s270, %s272
      %p279 = scmp.eq.s32.totalorder %s31, 1
      %p280 = por %p278, %p279
      %p281 = scmp.ne.s32.totalorder %s272, %s273
      %p282 = scmp.eq.s32.totalorder %s31, 0
      %p283 = por %p281, %p282
      %p284 = scmp.ne.s32.totalorder %s272, %s273
      %p285 = scmp.eq.s32.totalorder %s32, 1
      %p286 = por %p284, %p285
      %p288 = scmp.ne.s32.totalorder %s273, %s287
      %p289 = scmp.eq.s32.totalorder %s32, 0
      %p290 = por %p288, %p289
      %s292 = sadd.s32 %s291, 1
      %p295 = scmp.eq.s32.totalorder %s26, 1
      %p296 = scmp.ne.s32.totalorder %s291, %s293
      %p297 = scmp.eq.s32.totalorder %s26, 0
      %p298 = por %p296, %p297
      %p299 = scmp.ne.s32.totalorder %s291, %s293
      %p300 = scmp.eq.s32.totalorder %s31, 1
      %p301 = por %p299, %p300
      %p302 = scmp.ne.s32.totalorder %s293, %s294
      %p303 = scmp.eq.s32.totalorder %s31, 0
      %p304 = por %p302, %p303
      %p305 = scmp.ne.s32.totalorder %s293, %s294
      %p306 = scmp.eq.s32.totalorder %s32, 1
      %p307 = por %p305, %p306
      %p309 = scmp.ne.s32.totalorder %s294, %s308
      %p310 = scmp.eq.s32.totalorder %s32, 0
      %p311 = por %p309, %p310
      %s312 = ssub.s32 %s26, %s33
      %p313 = scmp.eq.s32.totalorder %s312, 0
      %s315 = sadd.s32 %s314, 1
      %s316 = scalar_select %p313, %s314, %s315
      %p319 = pneg %p313
      %p320 = scmp.eq.s32.totalorder %s26, 1
      %p321 = por %p319, %p320
      %p322 = scmp.ne.s32.totalorder %s314, %s317
      %p323 = scmp.eq.s32.totalorder %s26, 0
      %p324 = por %p322, %p323
      %p325 = scmp.ne.s32.totalorder %s314, %s317
      %p326 = scmp.eq.s32.totalorder %s31, 1
      %p327 = por %p325, %p326
      %p328 = scmp.ne.s32.totalorder %s317, %s318
      %p329 = scmp.eq.s32.totalorder %s31, 0
      %p330 = por %p328, %p329
      %p331 = scmp.ne.s32.totalorder %s317, %s318
      %p332 = scmp.eq.s32.totalorder %s32, 1
      %p333 = por %p331, %p332
      %p335 = scmp.ne.s32.totalorder %s318, %s334
      %p336 = scmp.eq.s32.totalorder %s32, 0
      %p337 = por %p335, %p336
      %p338 = scmp.le.s32.totalorder 1, %s26
      %p339 = scmp.lt.s32.totalorder %s26, 3
      %p340 = pnand %p338, %p339
      %p341 = pneg %p340
      // Predicated region
      $region9: #{tpu_custom_call.1} parent=5 // pred_check
        _
      $region10: #{tpu_custom_call.1} parent=5 // pred_check_branch
        %343 = sbr.rel (%p340) target = $region12
      $region11: #{tpu_custom_call.1} parent=5 // pred_region
        %s344 = ssub.s32 %s26, 1
        // Predicated region
        $region13: #{tpu_custom_call.1} parent=11 // pred_check
          %p345 = pneg %p73
        $region14: #{tpu_custom_call.1} parent=11 // pred_check_branch
          %347 = sbr.rel (%p345) target = $region16
        $region15: #{tpu_custom_call.1} parent=11 // pred_region
          _
        $region16: #{tpu_custom_call.1} parent=11 // pred_fallthru
          _
        // Predicated region
        $region17: #{tpu_custom_call.1} parent=11 // pred_check
          %p348 = pneg %p94
        $region18: #{tpu_custom_call.1} parent=11 // pred_check_branch
          %350 = sbr.rel (%p348) target = $region20
        $region19: #{tpu_custom_call.1} parent=11 // pred_region
          %s352 = ssub.s32 16, 16
          %353 = vsyncadd [#allocation3], %s352
          %s355 = sshll.u32 [#allocation2], 4
          %s356 = int_to_ptr.vmem [resolvable:$true] %s355
          %358 = dma.hbm_to_vmem [thread:$0]  %s2, 16, %s356, [#allocation3]
        $region20: #{tpu_custom_call.1} parent=11 // pred_fallthru
          _
        // Predicated region
        $region21: #{tpu_custom_call.1} parent=11 // pred_check
          %p359 = pneg %p115
        $region22: #{tpu_custom_call.1} parent=11 // pred_check_branch
          %361 = sbr.rel (%p359) target = $region24
        $region23: #{tpu_custom_call.1} parent=11 // pred_region
          _
        $region24: #{tpu_custom_call.1} parent=11 // pred_fallthru
          _
        // Predicated region
        $region25: #{tpu_custom_call.1} parent=11 // pred_check
          %p362 = pneg %p136
        $region26: #{tpu_custom_call.1} parent=11 // pred_check_branch
          %364 = sbr.rel (%p362) target = $region28
        $region27: #{tpu_custom_call.1} parent=11 // pred_region
          %s366 = ssub.s32 16, 16
          %367 = vsyncadd [#allocation6], %s366
          %s369 = sshll.u32 [#allocation5], 4
          %s370 = int_to_ptr.vmem [resolvable:$true] %s369
          %372 = dma.hbm_to_vmem [thread:$0]  %s4, 16, %s370, [#allocation6]
        $region28: #{tpu_custom_call.1} parent=11 // pred_fallthru
          _
        // Predicated region
        $region29: #{tpu_custom_call.1} parent=11 // pred_check
          %p373 = pneg %p157
        $region30: #{tpu_custom_call.1} parent=11 // pred_check_branch
          %375 = sbr.rel (%p373) target = $region32
        $region31: #{tpu_custom_call.1} parent=11 // pred_region
          %s377 = ssub.s32 16, 16
          %378 = vsyncadd [#allocation6], %s377
          %s380 = sshll.u32 [#allocation7], 4
          %s381 = int_to_ptr.vmem [resolvable:$true] %s380
          %383 = dma.hbm_to_vmem [thread:$0]  %s5, 16, %s381, [#allocation6]
        $region32: #{tpu_custom_call.1} parent=11 // pred_fallthru
          _
        // Predicated region
        $region33: #{tpu_custom_call.1} parent=11 // pred_check
          %p384 = pneg %p178
        $region34: #{tpu_custom_call.1} parent=11 // pred_check_branch
          %386 = sbr.rel (%p384) target = $region36
        $region35: #{tpu_custom_call.1} parent=11 // pred_region
          %s388 = ssub.s32 16, 16
          %389 = vsyncadd [#allocation9], %s388
          %s391 = sshll.u32 [#allocation8], 4
          %s392 = int_to_ptr.vmem [resolvable:$true] %s391
          %394 = dma.hbm_to_vmem [thread:$0]  %s6, 16, %s392, [#allocation9]
        $region36: #{tpu_custom_call.1} parent=11 // pred_fallthru
          _
        // Predicated region
        $region37: #{tpu_custom_call.1} parent=11 // pred_check
          %p395 = pneg %p199
        $region38: #{tpu_custom_call.1} parent=11 // pred_check_branch
          %397 = sbr.rel (%p395) target = $region40
        $region39: #{tpu_custom_call.1} parent=11 // pred_region
          %s399 = ssub.s32 256, 256
          %400 = vsyncadd [#allocation9], %s399
          %s401 = sshll.u32 [#allocation10], 4
          %s402 = int_to_ptr.vmem [resolvable:$true] %s401
          %407 = dma.hbm_to_vmem [thread:$0]  %s7, 256, %s402, [#allocation9], 64, 64, 4
        $region40: #{tpu_custom_call.1} parent=11 // pred_fallthru
          _
        // Predicated region
        $region41: #{tpu_custom_call.1} parent=11 // pred_check
          %p408 = pneg %p220
        $region42: #{tpu_custom_call.1} parent=11 // pred_check_branch
          %410 = sbr.rel (%p408) target = $region44
        $region43: #{tpu_custom_call.1} parent=11 // pred_region
          %s412 = ssub.s32 16, 16
          %413 = vsyncadd [#allocation12], %s412
          %s415 = sshll.u32 [#allocation11], 4
          %s416 = int_to_ptr.vmem [resolvable:$true] %s415
          %418 = dma.hbm_to_vmem [thread:$0]  %s8, 16, %s416, [#allocation12]
        $region44: #{tpu_custom_call.1} parent=11 // pred_fallthru
          _
        // Predicated region
        $region45: #{tpu_custom_call.1} parent=11 // pred_check
          %p419 = pneg %p241
        $region46: #{tpu_custom_call.1} parent=11 // pred_check_branch
          %421 = sbr.rel (%p419) target = $region48
        $region47: #{tpu_custom_call.1} parent=11 // pred_region
          _
        $region48: #{tpu_custom_call.1} parent=11 // pred_fallthru
          _
        // Predicated region
        $region49: #{tpu_custom_call.1} parent=11 // pred_check
          %p422 = pneg %p262
        $region50: #{tpu_custom_call.1} parent=11 // pred_check_branch
          %424 = sbr.rel (%p422) target = $region52
        $region51: #{tpu_custom_call.1} parent=11 // pred_region
          _
        $region52: #{tpu_custom_call.1} parent=11 // pred_fallthru
          _
        // Predicated region
        $region53: #{tpu_custom_call.1} parent=11 // pred_check
          %p425 = pneg %p283
        $region54: #{tpu_custom_call.1} parent=11 // pred_check_branch
          %427 = sbr.rel (%p425) target = $region56
        $region55: #{tpu_custom_call.1} parent=11 // pred_region
          _
        $region56: #{tpu_custom_call.1} parent=11 // pred_fallthru
          _
        // Predicated region
        $region57: #{tpu_custom_call.1} parent=11 // pred_check
          %p428 = pneg %p304
        $region58: #{tpu_custom_call.1} parent=11 // pred_check_branch
          %430 = sbr.rel (%p428) target = $region60
        $region59: #{tpu_custom_call.1} parent=11 // pred_region
          _
        $region60: #{tpu_custom_call.1} parent=11 // pred_fallthru
          _
      $region12: #{tpu_custom_call.1} parent=5 // pred_fallthru
        _
      %p431 = scmp.lt.s32.totalorder %s26, 2
      // Predicated region
      $region61: #{tpu_custom_call.1} parent=5 // pred_check
        %p432 = pneg %p431
      $region62: #{tpu_custom_call.1} parent=5 // pred_check_branch
        %434 = sbr.rel (%p432) target = $region64
      $region63: #{tpu_custom_call.1} parent=5 // pred_region
        // Predicated region
        $region65: #{tpu_custom_call.1} parent=63 // pred_check
          %p435 = pneg %p46
        $region66: #{tpu_custom_call.1} parent=63 // pred_check_branch
          %437 = sbr.rel (%p435) target = $region68
        $region67: #{tpu_custom_call.1} parent=63 // pred_region
          %p438 = scmp.lt.s32.totalorder %s26, 1
          %s439 = scalar_select %p438, %s26, 1
          %s440 = smul.addr %s439, 8
          %s441 = scalar_lea.vmem %s0, %s440
        $region68: #{tpu_custom_call.1} parent=63 // pred_fallthru
          _
      $region64: #{tpu_custom_call.1} parent=5 // pred_fallthru
        _
      %p442 = scmp.le.s32.totalorder 1, %s26
      %p443 = scmp.lt.s32.totalorder %s26, 3
      %p444 = pnand %p442, %p443
      %p445 = pneg %p444
      // Predicated region
      $region69: #{tpu_custom_call.1} parent=5 // pred_check
        _
      $region70: #{tpu_custom_call.1} parent=5 // pred_check_branch
        %447 = sbr.rel (%p444) target = $region72
      $region71: #{tpu_custom_call.1} parent=5 // pred_region
        %s448 = ssub.s32 %s26, 1
        // Predicated region
        $region73: #{tpu_custom_call.1} parent=71 // pred_check
          %p449 = pneg %p94
        $region74: #{tpu_custom_call.1} parent=71 // pred_check_branch
          %451 = sbr.rel (%p449) target = $region76
        $region75: #{tpu_custom_call.1} parent=71 // pred_region
          %452 = dma.done [#allocation3], 16
        $region76: #{tpu_custom_call.1} parent=71 // pred_fallthru
          _
        // Predicated region
        $region77: #{tpu_custom_call.1} parent=71 // pred_check
          %p453 = pneg %p136
        $region78: #{tpu_custom_call.1} parent=71 // pred_check_branch
          %455 = sbr.rel (%p453) target = $region80
        $region79: #{tpu_custom_call.1} parent=71 // pred_region
          %456 = dma.done [#allocation6], 16
        $region80: #{tpu_custom_call.1} parent=71 // pred_fallthru
          _
        // Predicated region
        $region81: #{tpu_custom_call.1} parent=71 // pred_check
          %p457 = pneg %p157
        $region82: #{tpu_custom_call.1} parent=71 // pred_check_branch
          %459 = sbr.rel (%p457) target = $region84
        $region83: #{tpu_custom_call.1} parent=71 // pred_region
          %460 = dma.done [#allocation6], 16
        $region84: #{tpu_custom_call.1} parent=71 // pred_fallthru
          _
        // Predicated region
        $region85: #{tpu_custom_call.1} parent=71 // pred_check
          %p461 = pneg %p178
        $region86: #{tpu_custom_call.1} parent=71 // pred_check_branch
          %463 = sbr.rel (%p461) target = $region88
        $region87: #{tpu_custom_call.1} parent=71 // pred_region
          %464 = dma.done [#allocation9], 16
        $region88: #{tpu_custom_call.1} parent=71 // pred_fallthru
          _
        // Predicated region
        $region89: #{tpu_custom_call.1} parent=71 // pred_check
          %p465 = pneg %p199
        $region90: #{tpu_custom_call.1} parent=71 // pred_check_branch
          %467 = sbr.rel (%p465) target = $region92
        $region91: #{tpu_custom_call.1} parent=71 // pred_region
          %468 = dma.done [#allocation9], 256
        $region92: #{tpu_custom_call.1} parent=71 // pred_fallthru
          _
        // Predicated region
        $region93: #{tpu_custom_call.1} parent=71 // pred_check
          %p469 = pneg %p220
        $region94: #{tpu_custom_call.1} parent=71 // pred_check_branch
          %471 = sbr.rel (%p469) target = $region96
        $region95: #{tpu_custom_call.1} parent=71 // pred_region
          %472 = dma.done [#allocation12], 16
        $region96: #{tpu_custom_call.1} parent=71 // pred_fallthru
          _
        %p473 = scmp.lt.s32.totalorder %s31, 1
        %s474 = scalar_select %p473, %s31, 1
        %s475 = smul.addr %s474, 8
        %s476 = scalar_lea.vmem %s0, %s475
        %p477 = pneg %p52
        %p478 = pneg %p49
        %p479 = pneg %p73
        %p480 = pneg %p70
        %p481 = pneg %p94
        %p482 = pneg %p91
        %p483 = pneg %p115
        %p484 = pneg %p112
        %p485 = pneg %p136
        %p486 = pneg %p133
        %p487 = pneg %p157
        %p488 = pneg %p154
        %p489 = pneg %p178
        %p490 = pneg %p175
        %p491 = pneg %p199
        %p492 = pneg %p196
        %p493 = pneg %p220
        %p494 = pneg %p217
        %p495 = pneg %p241
        %p496 = pneg %p238
        %p497 = pneg %p262
        %p498 = pneg %p259
        %p499 = pneg %p283
        %p500 = pneg %p280
        %p501 = pneg %p304
        %p502 = pneg %p301
        %p503 = pneg %p330
        %p504 = pneg %p327
        %s505 = sand.u32 %s317, 1
        %s506 = scalar_lea.sflag [#allocation4], %s505
        %s507 = sand.u32 %s317, 1
        %s508 = smul.addr %s507, 8
        %s509 = scalar_lea.vmem [#allocation13], %s508
        %p510 = scmp.lt.s32.totalorder %s31, 1
        %s511 = scalar_select %p510, %s31, 1
        %s512 = smul.addr %s511, 8
        %s513 = scalar_lea.vmem %s0, %s512
        %v515 = vld [vmem:[%s513] sm:$0xff]
        %v516 = vpack.c.bf16 %v515, %v515
        %v517 = vld [vmem:[%s1] sm:$0xf]
        %v518 = vld [vmem:[%s1 + $0x4] sm:$0xf]
        %v519 = vld [vmem:[%s1 + $0x8] sm:$0xf]
        %v520 = vld [vmem:[%s1 + $0xc] sm:$0xf]
        %v521 = vld [vmem:[#allocation2] sm:$0x1]
        %v523 = vlaneseq
        %v524 = vshrl.u32 %v523, 7
        %v525 = vsub.s32 0, %v524
        %v526 = vrot.slane %v521, %v525
        %v532 = vunpack.c.l.b16 %v517
        %v533 = vunpack.c.l.b16 %v518
        %v534 = vunpack.c.l.b16 %v519
        %v535 = vunpack.c.l.b16 %v520
        %v536 = vpack.c.b16 %v533, %v532
        %v537 = vpack.c.b16 %v535, %v534
        %vm540 = vcmask 261120
        %v542 = vsel %vm540, %v516, 0
        %544 = vmatprep.subr.bf16.mxu0 0
        %545 = vmatpush1.bf16.msra.mxu0 0
        %546 = vmatprep.subr.bf16.mxu0 0
        %547 = vmatpush1.bf16.msra.mxu0 0
        %548 = vmatprep.subr.bf16.mxu0 0
        %549 = vmatpush1.bf16.msra.mxu0 0
        %550 = vmatprep.subr.bf16.mxu0 0
        %551 = vmatpush1.bf16.msra.mxu0 0
        %552 = vmatprep.subr.bf16.mxu0 0
        %553 = vmatpush1.bf16.msra.mxu0 0
        %554 = vmatprep.subr.bf16.mxu0 0
        %555 = vmatpush1.bf16.msra.mxu0 0
        %556 = vmatprep.subr.bf16.mxu0 0
        %557 = vmatpush1.bf16.msra.mxu0 %v537
        %558 = vmatprep.subr.bf16.mxu0 0
        %559 = vmatpush1.bf16.msra.mxu0 %v536
        %560 = vmatprep.subr.bf16.mxu0 0
        %561 = vmatpush2.bf16.msra.mxu0 0
        %562 = vmatprep.subr.bf16.mxu0 0
        %563 = vmatpush2.bf16.msra.mxu0 0
        %564 = vmatprep.subr.bf16.mxu0 0
        %565 = vmatpush2.bf16.msra.mxu0 0
        %566 = vmatprep.subr.bf16.mxu0 0
        %567 = vmatpush2.bf16.msra.mxu0 0
        %568 = vmatprep.subr.bf16.mxu0 0
        %569 = vmatpush2.bf16.msra.mxu0 0
        %570 = vmatprep.subr.bf16.mxu0 0
        %571 = vmatpush2.bf16.msra.mxu0 0
        %572 = vmatprep.subr.bf16.mxu0 0
        %573 = vmatpush2.bf16.msra.mxu0 0
        %574 = vmatprep.subr.bf16.mxu0 0
        %575 = vmatpush2.bf16.msra.mxu0 0
        %576 = vmatprep.mubr.bf16.mxu0 0
        %577 = vmatmul.mubr.bf16.gmra.mxu0 %v542
        %v578 = vpop.f32.mrf.mxu0
        %v579 = vadd.f32 %v526, %v578
        %v580 = vpop.f32.mrf.mxu0
        %v581 = vpop.f32.mrf.mxu0
        %v582 = vpop.f32.mrf.mxu0
        %583 = vdwg.mxu0
        %v584 = vpack.c.bf16 %v579, %v579
        %586 = vrot.lane.b32.xlu0 %v584, 96
        %v587 = vpop.permute.xlu0 %586
        %vm588 = vcmask 64512
        %v590 = vsel %vm588, %v584, 0
        %v593 = vsel %vm588, %v587, 0
        %595 = vmatprep.subr.bf16.mxu0 0
        %596 = vmatpush1.bf16.xpose.msra.mxu0 0
        %597 = vmatprep.subr.bf16.mxu0 0
        %598 = vmatpush1.bf16.xpose.msra.mxu0 0
        %599 = vmatprep.subr.bf16.mxu0 0
        %600 = vmatpush1.bf16.xpose.msra.mxu0 0
        %601 = vmatprep.subr.bf16.mxu0 0
        %602 = vmatpush1.bf16.xpose.msra.mxu0 0
        %603 = vmatprep.subr.bf16.mxu0 0
        %604 = vmatpush1.bf16.xpose.msra.mxu0 0
        %605 = vmatprep.subr.bf16.mxu0 0
        %606 = vmatpush1.bf16.xpose.msra.mxu0 0
        %607 = vmatprep.subr.bf16.mxu0 0
        %608 = vmatpush1.bf16.xpose.msra.mxu0 0
        %609 = vmatprep.subr.bf16.mxu0 0
        %610 = vmatpush1.bf16.xpose.msra.mxu0 %v593
        %611 = vmatprep.subr.bf16.mxu0 0
        %612 = vmatpush2.bf16.xpose.msra.mxu0 0
        %613 = vmatprep.subr.bf16.mxu0 0
        %614 = vmatpush2.bf16.xpose.msra.mxu0 0
        %615 = vmatprep.subr.bf16.mxu0 0
        %616 = vmatpush2.bf16.xpose.msra.mxu0 0
        %617 = vmatprep.subr.bf16.mxu0 0
        %618 = vmatpush2.bf16.xpose.msra.mxu0 0
        %619 = vmatprep.subr.bf16.mxu0 0
        %620 = vmatpush2.bf16.xpose.msra.mxu0 0
        %621 = vmatprep.subr.bf16.mxu0 0
        %622 = vmatpush2.bf16.xpose.msra.mxu0 0
        %623 = vmatprep.subr.bf16.mxu0 0
        %624 = vmatpush2.bf16.xpose.msra.mxu0 0
        %625 = vmatprep.subr.bf16.mxu0 0
        %626 = vmatpush2.bf16.xpose.msra.mxu0 0
        %627 = vmatprep.mubr.bf16.mxu0 0
        %628 = vmatmul.mubr.bf16.gmra.mxu0 %v590
        %v629 = vpop.f32.mrf.mxu0
        %v630 = vadd.f32 0.0, %v629
        %v631 = vpop.f32.mrf.mxu0
        %v632 = vpop.f32.mrf.mxu0
        %v633 = vpop.f32.mrf.mxu0
        %634 = vdwg.mxu0
        %v635 = vsel %vm588, %v630, -inf
        %636 = vmax.xlane.f32.xlu0 %v635
        %v637 = vpop.xlane.xlu0 %636
        %v638 = vsub.f32 %v630, %v637
        %v639 = vmul.f32 %v638, 1.442695
        %v640 = vpow.pop %v639
        %v641 = vsel %vm588, %v640, 0.0
        %642 = vadd.xlane.f32.xlu0 %v641
        %v643 = vpop.xlane.xlu0 %642
        %v644 = vrcp.pop %v643
        %v645 = vmul.f32 %v640, %v644
        %v646 = vpack.c.bf16 %v645, %v645
        %647 = vrot.lane.b32.xlu0 %v584, 64
        %v648 = vpop.permute.xlu0 %647
        %v650 = vsel %vm588, %v646, 0
        %vm652 = vcmask 1043456
        %v654 = vsel %vm652, %v648, 0
        %656 = vmatprep.subr.bf16.mxu0 0
        %657 = vmatpush1.bf16.msra.mxu0 0
        %658 = vmatprep.subr.bf16.mxu0 0
        %659 = vmatpush1.bf16.msra.mxu0 0
        %660 = vmatprep.subr.bf16.mxu0 0
        %661 = vmatpush1.bf16.msra.mxu0 0
        %662 = vmatprep.subr.bf16.mxu0 0
        %663 = vmatpush1.bf16.msra.mxu0 0
        %664 = vmatprep.subr.bf16.mxu0 0
        %665 = vmatpush1.bf16.msra.mxu0 0
        %666 = vmatprep.subr.bf16.mxu0 0
        %667 = vmatpush1.bf16.msra.mxu0 0
        %668 = vmatprep.subr.bf16.mxu0 0
        %669 = vmatpush1.bf16.msra.mxu0 0
        %670 = vmatprep.subr.bf16.mxu0 0
        %671 = vmatpush1.bf16.msra.mxu0 %v654
        %672 = vmatprep.subr.bf16.mxu0 0
        %673 = vmatpush2.bf16.msra.mxu0 0
        %674 = vmatprep.subr.bf16.mxu0 0
        %675 = vmatpush2.bf16.msra.mxu0 0
        %676 = vmatprep.subr.bf16.mxu0 0
        %677 = vmatpush2.bf16.msra.mxu0 0
        %678 = vmatprep.subr.bf16.mxu0 0
        %679 = vmatpush2.bf16.msra.mxu0 0
        %680 = vmatprep.subr.bf16.mxu0 0
        %681 = vmatpush2.bf16.msra.mxu0 0
        %682 = vmatprep.subr.bf16.mxu0 0
        %683 = vmatpush2.bf16.msra.mxu0 0
        %684 = vmatprep.subr.bf16.mxu0 0
        %685 = vmatpush2.bf16.msra.mxu0 0
        %686 = vmatprep.subr.bf16.mxu0 0
        %687 = vmatpush2.bf16.msra.mxu0 0
        %688 = vmatprep.mubr.bf16.mxu0 0
        %689 = vmatmul.mubr.bf16.gmra.mxu0 %v650
        %v690 = vpop.f32.mrf.mxu0
        %v691 = vadd.f32 0.0, %v690
        %v692 = vpop.f32.mrf.mxu0
        %v693 = vpop.f32.mrf.mxu0
        %v694 = vpop.f32.mrf.mxu0
        %695 = vdwg.mxu0
        %696 = vrot.lane.b32.xlu0 %v584, 120
        %v697 = vpop.permute.xlu0 %696
        %698 = vrot.lane.b32.xlu0 %v584, 88
        %v699 = vpop.permute.xlu0 %698
        %v701 = vsel %vm588, %v697, 0
        %v704 = vsel %vm588, %v699, 0
        %706 = vmatprep.subr.bf16.mxu0 0
        %707 = vmatpush1.bf16.xpose.msra.mxu0 0
        %708 = vmatprep.subr.bf16.mxu0 0
        %709 = vmatpush1.bf16.xpose.msra.mxu0 0
        %710 = vmatprep.subr.bf16.mxu0 0
        %711 = vmatpush1.bf16.xpose.msra.mxu0 0
        %712 = vmatprep.subr.bf16.mxu0 0
        %713 = vmatpush1.bf16.xpose.msra.mxu0 0
        %714 = vmatprep.subr.bf16.mxu0 0
        %715 = vmatpush1.bf16.xpose.msra.mxu0 0
        %716 = vmatprep.subr.bf16.mxu0 0
        %717 = vmatpush1.bf16.xpose.msra.mxu0 0
        %718 = vmatprep.subr.bf16.mxu0 0
        %719 = vmatpush1.bf16.xpose.msra.mxu0 0
        %720 = vmatprep.subr.bf16.mxu0 0
        %721 = vmatpush1.bf16.xpose.msra.mxu0 %v704
        %722 = vmatprep.subr.bf16.mxu0 0
        %723 = vmatpush2.bf16.xpose.msra.mxu0 0
        %724 = vmatprep.subr.bf16.mxu0 0
        %725 = vmatpush2.bf16.xpose.msra.mxu0 0
        %726 = vmatprep.subr.bf16.mxu0 0
        %727 = vmatpush2.bf16.xpose.msra.mxu0 0
        %728 = vmatprep.subr.bf16.mxu0 0
        %729 = vmatpush2.bf16.xpose.msra.mxu0 0
        %730 = vmatprep.subr.bf16.mxu0 0
        %731 = vmatpush2.bf16.xpose.msra.mxu0 0
        %732 = vmatprep.subr.bf16.mxu0 0
        %733 = vmatpush2.bf16.xpose.msra.mxu0 0
        %734 = vmatprep.subr.bf16.mxu0 0
        %735 = vmatpush2.bf16.xpose.msra.mxu0 0
        %736 = vmatprep.subr.bf16.mxu0 0
        %737 = vmatpush2.bf16.xpose.msra.mxu0 0
        %738 = vmatprep.mubr.bf16.mxu0 0
        %739 = vmatmul.mubr.bf16.gmra.mxu0 %v701
        %v740 = vpop.f32.mrf.mxu0
        %v741 = vadd.f32 0.0, %v740
        %v742 = vpop.f32.mrf.mxu0
        %v743 = vpop.f32.mrf.mxu0
        %v744 = vpop.f32.mrf.mxu0
        %745 = vdwg.mxu0
        %v746 = vsel %vm588, %v741, -inf
        %747 = vmax.xlane.f32.xlu0 %v746
        %v748 = vpop.xlane.xlu0 %747
        %v749 = vsub.f32 %v741, %v748
        %v750 = vmul.f32 %v749, 1.442695
        %v751 = vpow.pop %v750
        %v752 = vsel %vm588, %v751, 0.0
        %753 = vadd.xlane.f32.xlu0 %v752
        %v754 = vpop.xlane.xlu0 %753
        %v755 = vrcp.pop %v754
        %v756 = vmul.f32 %v751, %v755
        %v757 = vpack.c.bf16 %v756, %v756
        %758 = vrot.lane.b32.xlu0 %v584, 56
        %v759 = vpop.permute.xlu0 %758
        %v761 = vsel %vm588, %v757, 0
        %v764 = vsel %vm652, %v759, 0
        %766 = vmatprep.subr.bf16.mxu0 0
        %767 = vmatpush1.bf16.msra.mxu0 0
        %768 = vmatprep.subr.bf16.mxu0 0
        %769 = vmatpush1.bf16.msra.mxu0 0
        %770 = vmatprep.subr.bf16.mxu0 0
        %771 = vmatpush1.bf16.msra.mxu0 0
        %772 = vmatprep.subr.bf16.mxu0 0
        %773 = vmatpush1.bf16.msra.mxu0 0
        %774 = vmatprep.subr.bf16.mxu0 0
        %775 = vmatpush1.bf16.msra.mxu0 0
        %776 = vmatprep.subr.bf16.mxu0 0
        %777 = vmatpush1.bf16.msra.mxu0 0
        %778 = vmatprep.subr.bf16.mxu0 0
        %779 = vmatpush1.bf16.msra.mxu0 0
        %780 = vmatprep.subr.bf16.mxu0 0
        %781 = vmatpush1.bf16.msra.mxu0 %v764
        %782 = vmatprep.subr.bf16.mxu0 0
        %783 = vmatpush2.bf16.msra.mxu0 0
        %784 = vmatprep.subr.bf16.mxu0 0
        %785 = vmatpush2.bf16.msra.mxu0 0
        %786 = vmatprep.subr.bf16.mxu0 0
        %787 = vmatpush2.bf16.msra.mxu0 0
        %788 = vmatprep.subr.bf16.mxu0 0
        %789 = vmatpush2.bf16.msra.mxu0 0
        %790 = vmatprep.subr.bf16.mxu0 0
        %791 = vmatpush2.bf16.msra.mxu0 0
        %792 = vmatprep.subr.bf16.mxu0 0
        %793 = vmatpush2.bf16.msra.mxu0 0
        %794 = vmatprep.subr.bf16.mxu0 0
        %795 = vmatpush2.bf16.msra.mxu0 0
        %796 = vmatprep.subr.bf16.mxu0 0
        %797 = vmatpush2.bf16.msra.mxu0 0
        %798 = vmatprep.mubr.bf16.mxu0 0
        %799 = vmatmul.mubr.bf16.gmra.mxu0 %v761
        %v800 = vpop.f32.mrf.mxu0
        %v801 = vadd.f32 0.0, %v800
        %v802 = vpop.f32.mrf.mxu0
        %v803 = vpop.f32.mrf.mxu0
        %v804 = vpop.f32.mrf.mxu0
        %805 = vdwg.mxu0
        %806 = vrot.lane.b32.xlu0 %v584, 112
        %v807 = vpop.permute.xlu0 %806
        %808 = vrot.lane.b32.xlu0 %v584, 80
        %v809 = vpop.permute.xlu0 %808
        %v811 = vsel %vm588, %v807, 0
        %v814 = vsel %vm588, %v809, 0
        %816 = vmatprep.subr.bf16.mxu0 0
        %817 = vmatpush1.bf16.xpose.msra.mxu0 0
        %818 = vmatprep.subr.bf16.mxu0 0
        %819 = vmatpush1.bf16.xpose.msra.mxu0 0
        %820 = vmatprep.subr.bf16.mxu0 0
        %821 = vmatpush1.bf16.xpose.msra.mxu0 0
        %822 = vmatprep.subr.bf16.mxu0 0
        %823 = vmatpush1.bf16.xpose.msra.mxu0 0
        %824 = vmatprep.subr.bf16.mxu0 0
        %825 = vmatpush1.bf16.xpose.msra.mxu0 0
        %826 = vmatprep.subr.bf16.mxu0 0
        %827 = vmatpush1.bf16.xpose.msra.mxu0 0
        %828 = vmatprep.subr.bf16.mxu0 0
        %829 = vmatpush1.bf16.xpose.msra.mxu0 0
        %830 = vmatprep.subr.bf16.mxu0 0
        %831 = vmatpush1.bf16.xpose.msra.mxu0 %v814
        %832 = vmatprep.subr.bf16.mxu0 0
        %833 = vmatpush2.bf16.xpose.msra.mxu0 0
        %834 = vmatprep.subr.bf16.mxu0 0
        %835 = vmatpush2.bf16.xpose.msra.mxu0 0
        %836 = vmatprep.subr.bf16.mxu0 0
        %837 = vmatpush2.bf16.xpose.msra.mxu0 0
        %838 = vmatprep.subr.bf16.mxu0 0
        %839 = vmatpush2.bf16.xpose.msra.mxu0 0
        %840 = vmatprep.subr.bf16.mxu0 0
        %841 = vmatpush2.bf16.xpose.msra.mxu0 0
        %842 = vmatprep.subr.bf16.mxu0 0
        %843 = vmatpush2.bf16.xpose.msra.mxu0 0
        %844 = vmatprep.subr.bf16.mxu0 0
        %845 = vmatpush2.bf16.xpose.msra.mxu0 0
        %846 = vmatprep.subr.bf16.mxu0 0
        %847 = vmatpush2.bf16.xpose.msra.mxu0 0
        %848 = vmatprep.mubr.bf16.mxu0 0
        %849 = vmatmul.mubr.bf16.gmra.mxu0 %v811
        %v850 = vpop.f32.mrf.mxu0
        %v851 = vadd.f32 0.0, %v850
        %v852 = vpop.f32.mrf.mxu0
        %v853 = vpop.f32.mrf.mxu0
        %v854 = vpop.f32.mrf.mxu0
        %855 = vdwg.mxu0
        %v856 = vsel %vm588, %v851, -inf
        %857 = vmax.xlane.f32.xlu0 %v856
        %v858 = vpop.xlane.xlu0 %857
        %v859 = vsub.f32 %v851, %v858
        %v860 = vmul.f32 %v859, 1.442695
        %v861 = vpow.pop %v860
        %v862 = vsel %vm588, %v861, 0.0
        %863 = vadd.xlane.f32.xlu0 %v862
        %v864 = vpop.xlane.xlu0 %863
        %v865 = vrcp.pop %v864
        %v866 = vmul.f32 %v861, %v865
        %v867 = vpack.c.bf16 %v866, %v866
        %868 = vrot.lane.b32.xlu0 %v584, 48
        %v869 = vpop.permute.xlu0 %868
        %v871 = vsel %vm588, %v867, 0
        %v874 = vsel %vm652, %v869, 0
        %876 = vmatprep.subr.bf16.mxu0 0
        %877 = vmatpush1.bf16.msra.mxu0 0
        %878 = vmatprep.subr.bf16.mxu0 0
        %879 = vmatpush1.bf16.msra.mxu0 0
        %880 = vmatprep.subr.bf16.mxu0 0
        %881 = vmatpush1.bf16.msra.mxu0 0
        %882 = vmatprep.subr.bf16.mxu0 0
        %883 = vmatpush1.bf16.msra.mxu0 0
        %884 = vmatprep.subr.bf16.mxu0 0
        %885 = vmatpush1.bf16.msra.mxu0 0
        %886 = vmatprep.subr.bf16.mxu0 0
        %887 = vmatpush1.bf16.msra.mxu0 0
        %888 = vmatprep.subr.bf16.mxu0 0
        %889 = vmatpush1.bf16.msra.mxu0 0
        %890 = vmatprep.subr.bf16.mxu0 0
        %891 = vmatpush1.bf16.msra.mxu0 %v874
        %892 = vmatprep.subr.bf16.mxu0 0
        %893 = vmatpush2.bf16.msra.mxu0 0
        %894 = vmatprep.subr.bf16.mxu0 0
        %895 = vmatpush2.bf16.msra.mxu0 0
        %896 = vmatprep.subr.bf16.mxu0 0
        %897 = vmatpush2.bf16.msra.mxu0 0
        %898 = vmatprep.subr.bf16.mxu0 0
        %899 = vmatpush2.bf16.msra.mxu0 0
        %900 = vmatprep.subr.bf16.mxu0 0
        %901 = vmatpush2.bf16.msra.mxu0 0
        %902 = vmatprep.subr.bf16.mxu0 0
        %903 = vmatpush2.bf16.msra.mxu0 0
        %904 = vmatprep.subr.bf16.mxu0 0
        %905 = vmatpush2.bf16.msra.mxu0 0
        %906 = vmatprep.subr.bf16.mxu0 0
        %907 = vmatpush2.bf16.msra.mxu0 0
        %908 = vmatprep.mubr.bf16.mxu0 0
        %909 = vmatmul.mubr.bf16.gmra.mxu0 %v871
        %v910 = vpop.f32.mrf.mxu0
        %v911 = vadd.f32 0.0, %v910
        %v912 = vpop.f32.mrf.mxu0
        %v913 = vpop.f32.mrf.mxu0
        %v914 = vpop.f32.mrf.mxu0
        %915 = vdwg.mxu0
        %916 = vrot.lane.b32.xlu0 %v584, 104
        %v917 = vpop.permute.xlu0 %916
        %918 = vrot.lane.b32.xlu0 %v584, 72
        %v919 = vpop.permute.xlu0 %918
        %v921 = vsel %vm588, %v917, 0
        %v924 = vsel %vm588, %v919, 0
        %926 = vmatprep.subr.bf16.mxu0 0
        %927 = vmatpush1.bf16.xpose.msra.mxu0 0
        %928 = vmatprep.subr.bf16.mxu0 0
        %929 = vmatpush1.bf16.xpose.msra.mxu0 0
        %930 = vmatprep.subr.bf16.mxu0 0
        %931 = vmatpush1.bf16.xpose.msra.mxu0 0
        %932 = vmatprep.subr.bf16.mxu0 0
        %933 = vmatpush1.bf16.xpose.msra.mxu0 0
        %934 = vmatprep.subr.bf16.mxu0 0
        %935 = vmatpush1.bf16.xpose.msra.mxu0 0
        %936 = vmatprep.subr.bf16.mxu0 0
        %937 = vmatpush1.bf16.xpose.msra.mxu0 0
        %938 = vmatprep.subr.bf16.mxu0 0
        %939 = vmatpush1.bf16.xpose.msra.mxu0 0
        %940 = vmatprep.subr.bf16.mxu0 0
        %941 = vmatpush1.bf16.xpose.msra.mxu0 %v924
        %942 = vmatprep.subr.bf16.mxu0 0
        %943 = vmatpush2.bf16.xpose.msra.mxu0 0
        %944 = vmatprep.subr.bf16.mxu0 0
        %945 = vmatpush2.bf16.xpose.msra.mxu0 0
        %946 = vmatprep.subr.bf16.mxu0 0
        %947 = vmatpush2.bf16.xpose.msra.mxu0 0
        %948 = vmatprep.subr.bf16.mxu0 0
        %949 = vmatpush2.bf16.xpose.msra.mxu0 0
        %950 = vmatprep.subr.bf16.mxu0 0
        %951 = vmatpush2.bf16.xpose.msra.mxu0 0
        %952 = vmatprep.subr.bf16.mxu0 0
        %953 = vmatpush2.bf16.xpose.msra.mxu0 0
        %954 = vmatprep.subr.bf16.mxu0 0
        %955 = vmatpush2.bf16.xpose.msra.mxu0 0
        %956 = vmatprep.subr.bf16.mxu0 0
        %957 = vmatpush2.bf16.xpose.msra.mxu0 0
        %958 = vmatprep.mubr.bf16.mxu0 0
        %959 = vmatmul.mubr.bf16.gmra.mxu0 %v921
        %v960 = vpop.f32.mrf.mxu0
        %v961 = vadd.f32 0.0, %v960
        %v962 = vpop.f32.mrf.mxu0
        %v963 = vpop.f32.mrf.mxu0
        %v964 = vpop.f32.mrf.mxu0
        %965 = vdwg.mxu0
        %v966 = vsel %vm588, %v961, -inf
        %967 = vmax.xlane.f32.xlu0 %v966
        %v968 = vpop.xlane.xlu0 %967
        %v969 = vsub.f32 %v961, %v968
        %v970 = vmul.f32 %v969, 1.442695
        %v971 = vpow.pop %v970
        %v972 = vsel %vm588, %v971, 0.0
        %973 = vadd.xlane.f32.xlu0 %v972
        %v974 = vpop.xlane.xlu0 %973
        %v975 = vrcp.pop %v974
        %v976 = vmul.f32 %v971, %v975
        %v977 = vpack.c.bf16 %v976, %v976
        %978 = vrot.lane.b32.xlu0 %v584, 40
        %v979 = vpop.permute.xlu0 %978
        %v981 = vsel %vm588, %v977, 0
        %v984 = vsel %vm652, %v979, 0
        %986 = vmatprep.subr.bf16.mxu0 0
        %987 = vmatpush1.bf16.msra.mxu0 0
        %988 = vmatprep.subr.bf16.mxu0 0
        %989 = vmatpush1.bf16.msra.mxu0 0
        %990 = vmatprep.subr.bf16.mxu0 0
        %991 = vmatpush1.bf16.msra.mxu0 0
        %992 = vmatprep.subr.bf16.mxu0 0
        %993 = vmatpush1.bf16.msra.mxu0 0
        %994 = vmatprep.subr.bf16.mxu0 0
        %995 = vmatpush1.bf16.msra.mxu0 0
        %996 = vmatprep.subr.bf16.mxu0 0
        %997 = vmatpush1.bf16.msra.mxu0 0
        %998 = vmatprep.subr.bf16.mxu0 0
        %999 = vmatpush1.bf16.msra.mxu0 0
        %1000 = vmatprep.subr.bf16.mxu0 0
        %1001 = vmatpush1.bf16.msra.mxu0 %v984
        %1002 = vmatprep.subr.bf16.mxu0 0
        %1003 = vmatpush2.bf16.msra.mxu0 0
        %1004 = vmatprep.subr.bf16.mxu0 0
        %1005 = vmatpush2.bf16.msra.mxu0 0
        %1006 = vmatprep.subr.bf16.mxu0 0
        %1007 = vmatpush2.bf16.msra.mxu0 0
        %1008 = vmatprep.subr.bf16.mxu0 0
        %1009 = vmatpush2.bf16.msra.mxu0 0
        %1010 = vmatprep.subr.bf16.mxu0 0
        %1011 = vmatpush2.bf16.msra.mxu0 0
        %1012 = vmatprep.subr.bf16.mxu0 0
        %1013 = vmatpush2.bf16.msra.mxu0 0
        %1014 = vmatprep.subr.bf16.mxu0 0
        %1015 = vmatpush2.bf16.msra.mxu0 0
        %1016 = vmatprep.subr.bf16.mxu0 0
        %1017 = vmatpush2.bf16.msra.mxu0 0
        %1018 = vmatprep.mubr.bf16.mxu0 0
        %1019 = vmatmul.mubr.bf16.gmra.mxu0 %v981
        %v1020 = vpop.f32.mrf.mxu0
        %v1021 = vadd.f32 0.0, %v1020
        %v1022 = vpop.f32.mrf.mxu0
        %v1023 = vpop.f32.mrf.mxu0
        %v1024 = vpop.f32.mrf.mxu0
        %1025 = vdwg.mxu0
        %1027 = vrot.lane.b32.xlu0 %v801, 8
        %v1028 = vpop.permute.xlu0 %1027
        %1031 = vrot.lane.b32.xlu0 %v911, 16
        %v1032 = vpop.permute.xlu0 %1031
        %1035 = vrot.lane.b32.xlu0 %v1021, 24
        %v1036 = vpop.permute.xlu0 %1035
        %v1038 = vsel %vm588, %v691, %v1028
        %vm1039 = vcmask 130048
        %v1040 = vsel %vm1039, %v1038, %v1032
        %vm1041 = vcmask 195584
        %v1042 = vsel %vm1041, %v1040, %v1036
        %v1043 = vpack.c.bf16 %v1042, %v1042
        %v1044 = vld [vmem:[%s3] sm:$0xf]
        %v1045 = vld [vmem:[%s3 + $0x4] sm:$0xf]
        %v1046 = vld [vmem:[%s3 + $0x8] sm:$0xf]
        %v1047 = vld [vmem:[%s3 + $0xc] sm:$0xf]
        %v1048 = vld [vmem:[#allocation5] sm:$0x1]
        %v1050 = vlaneseq
        %v1051 = vshrl.u32 %v1050, 7
        %v1052 = vsub.s32 0, %v1051
        %v1053 = vrot.slane %v1048, %v1052
        %v1059 = vunpack.c.l.b16 %v1044
        %v1060 = vunpack.c.l.b16 %v1045
        %v1061 = vunpack.c.l.b16 %v1046
        %v1062 = vunpack.c.l.b16 %v1047
        %v1063 = vpack.c.b16 %v1060, %v1059
        %v1064 = vpack.c.b16 %v1062, %v1061
        %v1068 = vsel %vm540, %v1043, 0
        %1070 = vmatprep.subr.bf16.mxu0 0
        %1071 = vmatpush1.bf16.msra.mxu0 0
        %1072 = vmatprep.subr.bf16.mxu0 0
        %1073 = vmatpush1.bf16.msra.mxu0 0
        %1074 = vmatprep.subr.bf16.mxu0 0
        %1075 = vmatpush1.bf16.msra.mxu0 0
        %1076 = vmatprep.subr.bf16.mxu0 0
        %1077 = vmatpush1.bf16.msra.mxu0 0
        %1078 = vmatprep.subr.bf16.mxu0 0
        %1079 = vmatpush1.bf16.msra.mxu0 0
        %1080 = vmatprep.subr.bf16.mxu0 0
        %1081 = vmatpush1.bf16.msra.mxu0 0
        %1082 = vmatprep.subr.bf16.mxu0 0
        %1083 = vmatpush1.bf16.msra.mxu0 %v1064
        %1084 = vmatprep.subr.bf16.mxu0 0
        %1085 = vmatpush1.bf16.msra.mxu0 %v1063
        %1086 = vmatprep.subr.bf16.mxu0 0
        %1087 = vmatpush2.bf16.msra.mxu0 0
        %1088 = vmatprep.subr.bf16.mxu0 0
        %1089 = vmatpush2.bf16.msra.mxu0 0
        %1090 = vmatprep.subr.bf16.mxu0 0
        %1091 = vmatpush2.bf16.msra.mxu0 0
        %1092 = vmatprep.subr.bf16.mxu0 0
        %1093 = vmatpush2.bf16.msra.mxu0 0
        %1094 = vmatprep.subr.bf16.mxu0 0
        %1095 = vmatpush2.bf16.msra.mxu0 0
        %1096 = vmatprep.subr.bf16.mxu0 0
        %1097 = vmatpush2.bf16.msra.mxu0 0
        %1098 = vmatprep.subr.bf16.mxu0 0
        %1099 = vmatpush2.bf16.msra.mxu0 0
        %1100 = vmatprep.subr.bf16.mxu0 0
        %1101 = vmatpush2.bf16.msra.mxu0 0
        %1102 = vmatprep.mubr.bf16.mxu0 0
        %1103 = vmatmul.mubr.bf16.gmra.mxu0 %v1068
        %v1104 = vpop.f32.mrf.mxu0
        %v1105 = vadd.f32 %v1053, %v1104
        %v1106 = vpop.f32.mrf.mxu0
        %v1107 = vpop.f32.mrf.mxu0
        %v1108 = vpop.f32.mrf.mxu0
        %1109 = vdwg.mxu0
        %v1110 = vadd.f32 %v515, %v1105
        %v1111 = vsel %vm540, %v1110, 0.0
        %1112 = vadd.xlane.f32.xlu0 %v1111
        %v1113 = vpop.xlane.xlu0 %1112
        %v1114 = vrcp.pop 32.0
        %v1115 = vmul.f32 %v1113, %v1114
        %v1116 = vsub.f32 %v1110, %v1115
        %v1117 = vmul.f32 %v1116, %v1116
        %v1118 = vsel %vm540, %v1117, 0.0
        %1119 = vadd.xlane.f32.xlu0 %v1118
        %v1120 = vpop.xlane.xlu0 %1119
        %v1121 = vmul.f32 %v1120, %v1114
        %v1122 = vadd.f32 %v1121, 1e-05
        %v1123 = vrsqrt.pop %v1122
        %v1124 = vmul.f32 %v1116, %v1123
        %v1125 = vld [vmem:[#allocation7] sm:$0x1]
        %v1127 = vlaneseq
        %v1128 = vshrl.u32 %v1127, 7
        %v1129 = vsub.s32 0, %v1128
        %v1130 = vrot.slane %v1125, %v1129
        %v1132 = vmul.f32 %v1124, %v1130
        %v1133 = vld [vmem:[#allocation8] sm:$0x1]
        %v1135 = vlaneseq
        %v1136 = vshrl.u32 %v1135, 7
        %v1137 = vsub.s32 0, %v1136
        %v1138 = vrot.slane %v1133, %v1137
        %v1140 = vadd.f32 %v1132, %v1138
        %v1141 = vpack.c.bf16 %v1140, %v1140
        %v1142 = vld [vmem:[#allocation10] sm:$0xf]
        %v1143 = vld [vmem:[#allocation10 + $0x4] sm:$0xf]
        %v1144 = vld [vmem:[#allocation10 + $0x8] sm:$0xf]
        %v1145 = vld [vmem:[#allocation10 + $0xc] sm:$0xf]
        %v1146 = vld [vmem:[#allocation11] sm:$0x1]
        %v1148 = vlaneseq
        %v1149 = vshrl.u32 %v1148, 7
        %v1150 = vsub.s32 0, %v1149
        %v1151 = vrot.slane %v1146, %v1150
        %v1157 = vunpack.c.l.b16 %v1142
        %v1158 = vunpack.c.l.b16 %v1143
        %v1159 = vunpack.c.l.b16 %v1144
        %v1160 = vunpack.c.l.b16 %v1145
        %v1161 = vpack.c.b16 %v1158, %v1157
        %v1162 = vpack.c.b16 %v1160, %v1159
        %v1166 = vsel %vm540, %v1141, 0
        %1168 = vmatprep.subr.bf16.mxu0 0
        %1169 = vmatpush1.bf16.msra.mxu0 0
        %1170 = vmatprep.subr.bf16.mxu0 0
        %1171 = vmatpush1.bf16.msra.mxu0 0
        %1172 = vmatprep.subr.bf16.mxu0 0
        %1173 = vmatpush1.bf16.msra.mxu0 0
        %1174 = vmatprep.subr.bf16.mxu0 0
        %1175 = vmatpush1.bf16.msra.mxu0 0
        %1176 = vmatprep.subr.bf16.mxu0 0
        %1177 = vmatpush1.bf16.msra.mxu0 0
        %1178 = vmatprep.subr.bf16.mxu0 0
        %1179 = vmatpush1.bf16.msra.mxu0 0
        %1180 = vmatprep.subr.bf16.mxu0 0
        %1181 = vmatpush1.bf16.msra.mxu0 %v1162
        %1182 = vmatprep.subr.bf16.mxu0 0
        %1183 = vmatpush1.bf16.msra.mxu0 %v1161
        %1184 = vmatprep.subr.bf16.mxu0 0
        %1185 = vmatpush2.bf16.msra.mxu0 0
        %1186 = vmatprep.subr.bf16.mxu0 0
        %1187 = vmatpush2.bf16.msra.mxu0 0
        %1188 = vmatprep.subr.bf16.mxu0 0
        %1189 = vmatpush2.bf16.msra.mxu0 0
        %1190 = vmatprep.subr.bf16.mxu0 0
        %1191 = vmatpush2.bf16.msra.mxu0 0
        %1192 = vmatprep.subr.bf16.mxu0 0
        %1193 = vmatpush2.bf16.msra.mxu0 0
        %1194 = vmatprep.subr.bf16.mxu0 0
        %1195 = vmatpush2.bf16.msra.mxu0 0
        %1196 = vmatprep.subr.bf16.mxu0 0
        %1197 = vmatpush2.bf16.msra.mxu0 0
        %1198 = vmatprep.subr.bf16.mxu0 0
        %1199 = vmatpush2.bf16.msra.mxu0 0
        %1200 = vmatprep.mubr.bf16.mxu0 0
        %1201 = vmatmul.mubr.bf16.gmra.mxu0 %v1166
        %v1202 = vpop.f32.mrf.mxu0
        %v1203 = vadd.f32 %v1151, %v1202
        %v1204 = vpop.f32.mrf.mxu0
        %v1205 = vpop.f32.mrf.mxu0
        %v1206 = vpop.f32.mrf.mxu0
        %1207 = vdwg.mxu0
        %v1208 = vmax.f32 %v1203, 0.0
        %v1209 = vpack.c.bf16 %v1208, %v1208
        %v1210 = vld [vmem:[%s9] sm:$0xf]
        %v1211 = vld [vmem:[%s9 + $0x4] sm:$0xf]
        %v1212 = vld [vmem:[%s9 + $0x8] sm:$0xf]
        %v1213 = vld [vmem:[%s9 + $0xc] sm:$0xf]
        %v1214 = vld [vmem:[%s9 + $0x10] sm:$0xf]
        %v1215 = vld [vmem:[%s9 + $0x14] sm:$0xf]
        %v1216 = vld [vmem:[%s9 + $0x18] sm:$0xf]
        %v1217 = vld [vmem:[%s9 + $0x1c] sm:$0xf]
        %v1218 = vld [vmem:[%s10] sm:$0x1]
        %v1220 = vlaneseq
        %v1221 = vshrl.u32 %v1220, 7
        %v1222 = vsub.s32 0, %v1221
        %v1223 = vrot.slane %v1218, %v1222
        %v1233 = vunpack.c.l.b16 %v1210
        %v1234 = vunpack.c.l.b16 %v1211
        %v1235 = vunpack.c.l.b16 %v1212
        %v1236 = vunpack.c.l.b16 %v1213
        %v1237 = vunpack.c.l.b16 %v1214
        %v1238 = vunpack.c.l.b16 %v1215
        %v1239 = vunpack.c.l.b16 %v1216
        %v1240 = vunpack.c.l.b16 %v1217
        %v1241 = vpack.c.b16 %v1234, %v1233
        %v1242 = vpack.c.b16 %v1236, %v1235
        %v1243 = vpack.c.b16 %v1238, %v1237
        %v1244 = vpack.c.b16 %v1240, %v1239
        %vm1249 = vcmask 523264
        %v1251 = vsel %vm1249, %v1209, 0
        %1253 = vmatprep.subr.bf16.mxu0 0
        %1254 = vmatpush1.bf16.msra.mxu0 0
        %1255 = vmatprep.subr.bf16.mxu0 0
        %1256 = vmatpush1.bf16.msra.mxu0 0
        %1257 = vmatprep.subr.bf16.mxu0 0
        %1258 = vmatpush1.bf16.msra.mxu0 0
        %1259 = vmatprep.subr.bf16.mxu0 0
        %1260 = vmatpush1.bf16.msra.mxu0 0
        %1261 = vmatprep.subr.bf16.mxu0 0
        %1262 = vmatpush1.bf16.msra.mxu0 %v1244
        %1263 = vmatprep.subr.bf16.mxu0 0
        %1264 = vmatpush1.bf16.msra.mxu0 %v1243
        %1265 = vmatprep.subr.bf16.mxu0 0
        %1266 = vmatpush1.bf16.msra.mxu0 %v1242
        %1267 = vmatprep.subr.bf16.mxu0 0
        %1268 = vmatpush1.bf16.msra.mxu0 %v1241
        %1269 = vmatprep.subr.bf16.mxu0 0
        %1270 = vmatpush2.bf16.msra.mxu0 0
        %1271 = vmatprep.subr.bf16.mxu0 0
        %1272 = vmatpush2.bf16.msra.mxu0 0
        %1273 = vmatprep.subr.bf16.mxu0 0
        %1274 = vmatpush2.bf16.msra.mxu0 0
        %1275 = vmatprep.subr.bf16.mxu0 0
        %1276 = vmatpush2.bf16.msra.mxu0 0
        %1277 = vmatprep.subr.bf16.mxu0 0
        %1278 = vmatpush2.bf16.msra.mxu0 0
        %1279 = vmatprep.subr.bf16.mxu0 0
        %1280 = vmatpush2.bf16.msra.mxu0 0
        %1281 = vmatprep.subr.bf16.mxu0 0
        %1282 = vmatpush2.bf16.msra.mxu0 0
        %1283 = vmatprep.subr.bf16.mxu0 0
        %1284 = vmatpush2.bf16.msra.mxu0 0
        %1285 = vmatprep.mubr.bf16.mxu0 0
        %1286 = vmatmul.mubr.bf16.gmra.mxu0 %v1251
        %v1287 = vpop.f32.mrf.mxu0
        %v1288 = vadd.f32 %v1223, %v1287
        %v1289 = vpop.f32.mrf.mxu0
        %v1290 = vpop.f32.mrf.mxu0
        %v1291 = vpop.f32.mrf.mxu0
        %1292 = vdwg.mxu0
        %v1293 = vadd.f32 %v1110, %v1288
        %v1294 = vsel %vm540, %v1293, 0.0
        %1295 = vadd.xlane.f32.xlu0 %v1294
        %v1296 = vpop.xlane.xlu0 %1295
        %v1297 = vmul.f32 %v1296, %v1114
        %v1298 = vsub.f32 %v1293, %v1297
        %v1299 = vmul.f32 %v1298, %v1298
        %v1300 = vsel %vm540, %v1299, 0.0
        %1301 = vadd.xlane.f32.xlu0 %v1300
        %v1302 = vpop.xlane.xlu0 %1301
        %v1303 = vmul.f32 %v1302, %v1114
        %v1304 = vadd.f32 %v1303, 1e-05
        %v1305 = vrsqrt.pop %v1304
        %v1306 = vmul.f32 %v1298, %v1305
        %v1307 = vld [vmem:[%s11] sm:$0x1]
        %v1309 = vlaneseq
        %v1310 = vshrl.u32 %v1309, 7
        %v1311 = vsub.s32 0, %v1310
        %v1312 = vrot.slane %v1307, %v1311
        %v1314 = vmul.f32 %v1306, %v1312
        %v1315 = vld [vmem:[%s12] sm:$0x1]
        %v1317 = vlaneseq
        %v1318 = vshrl.u32 %v1317, 7
        %v1319 = vsub.s32 0, %v1318
        %v1320 = vrot.slane %v1315, %v1319
        %v1322 = vadd.f32 %v1314, %v1320
        %1323 = vst.msk [vmem:[%s509] sm:$0xff] %vm540, %v1322
        %s1324 = sand.u32 %s317, 1
        %s1325 = scalar_lea.sflag [#allocation4], %s1324
        %s1326 = sand.u32 %s317, 1
        %s1327 = smul.addr %s1326, 8
        %s1328 = scalar_lea.vmem [#allocation13], %s1327
        // Predicated region
        $region97: #{tpu_custom_call.1} parent=71 // pred_check
          %p1329 = pneg %p327
        $region98: #{tpu_custom_call.1} parent=71 // pred_check_branch
          %1331 = sbr.rel (%p1329) target = $region100
        $region99: #{tpu_custom_call.1} parent=71 // pred_region
          %s1333 = ssub.s32 128, 128
          %1334 = vsyncadd %s1325, %s1333
          %s1335 = smul.addr %s31, 128
          %s1336 = scalar_lea.hbm %s13, %s1335
          %s1338 = sshll.u32 %s1328, 4
          %s1339 = int_to_ptr.vmem [resolvable:$true] %s1338
          %1341 = dma.vmem_to_hbm [thread:$0]  %s1339, 128, %s1336, %s1325
        $region100: #{tpu_custom_call.1} parent=71 // pred_fallthru
          _
      $region72: #{tpu_custom_call.1} parent=5 // pred_fallthru
        _
      %p1342 = scmp.le.s32.totalorder 2, %s26
      // Predicated region
      $region101: #{tpu_custom_call.1} parent=5 // pred_check
        %p1343 = pneg %p1342
      $region102: #{tpu_custom_call.1} parent=5 // pred_check_branch
        %1345 = sbr.rel (%p1343) target = $region104
      $region103: #{tpu_custom_call.1} parent=5 // pred_region
        %s1346 = ssub.s32 %s26, 2
        // Predicated region
        $region105: #{tpu_custom_call.1} parent=103 // pred_check
          %p1347 = pneg %p333
        $region106: #{tpu_custom_call.1} parent=103 // pred_check_branch
          %1349 = sbr.rel (%p1347) target = $region108
        $region107: #{tpu_custom_call.1} parent=103 // pred_region
          %s1350 = sand.u32 %s318, 1
          %s1351 = scalar_lea.sflag [#allocation4], %s1350
          %s1352 = sand.u32 %s318, 1
          %s1353 = smul.addr %s1352, 8
          %s1354 = scalar_lea.vmem [#allocation13], %s1353
          %1355 = dma.done %s1351, 128
        $region108: #{tpu_custom_call.1} parent=103 // pred_fallthru
          _
      $region104: #{tpu_custom_call.1} parent=5 // pred_fallthru
        _
    $region6: #{tpu_custom_call.1} parent=1 // loop_footer
      %s30 = sadd.s32 1, %s26
    $region7: #{tpu_custom_call.1} parent=1 // loop_footer_branch
      %25 = sbr.rel target = $region3
    $region8: #{tpu_custom_call.1} parent=1 // loop_exit
      _
    %1356 = vsyncpa [#allocation3], 1
    %s1357 = scalar_lea.sflag [#allocation3], 1
    %1358 = vsyncpa %s1357, 1
    %1359 = vsyncpa [#allocation6], 1
    %1360 = vsyncpa [#allocation9], 1
    %1361 = vsyncpa [#allocation12], 1
    %1362 = vsyncpa [#allocation4], 1
    %s1363 = scalar_lea.sflag [#allocation4], 1
    %1364 = vsyncpa %s1363, 1

// kernel: tpu_custom_call.1
$region0: #{tpu_custom_call.1}
  #allocation0 [shape = 'u32[]', space=smem, size = 0x4, offset = 0x4, fixed_abs, tag = 'smem constant byte address 0x4 - core index']
  #allocation1 [shape = 'u32[144,128]{1,0:T(1,128)}', space=vmem, size = 0x12000, scoped, tag = 'internal scratch']
  %s0 = inlined_call_operand.vmem [shape: f32[2,8,32], index: 0, kind: input, shape index: {}]
  %s1 = inlined_call_operand.vmem [shape: bf16[32,96], index: 1, kind: input, shape index: {}]
  %s2 = inlined_call_operand.hbm [shape: f32[1,96], index: 2, kind: input, shape index: {}]
  %s3 = inlined_call_operand.vmem [shape: bf16[32,32], index: 3, kind: input, shape index: {}]
  %s4 = inlined_call_operand.hbm [shape: f32[1,32], index: 4, kind: input, shape index: {}]
  %s5 = inlined_call_operand.hbm [shape: f32[1,32], index: 5, kind: input, shape index: {}]
  %s6 = inlined_call_operand.hbm [shape: f32[1,32], index: 6, kind: input, shape index: {}]
  %s7 = inlined_call_operand.hbm [shape: bf16[32,64], index: 7, kind: input, shape index: {}]
  %s8 = inlined_call_operand.hbm [shape: f32[1,64], index: 8, kind: input, shape index: {}]
  %s9 = inlined_call_operand.vmem [shape: bf16[64,32], index: 9, kind: input, shape index: {}]
  %s10 = inlined_call_operand.vmem [shape: f32[1,32], index: 10, kind: input, shape index: {}]
  %s11 = inlined_call_operand.vmem [shape: f32[1,32], index: 11, kind: input, shape index: {}]
  %s12 = inlined_call_operand.vmem [shape: f32[1,32], index: 12, kind: input, shape index: {}]
  %s13 = inlined_call_operand.hbm [shape: f32[2,8,32], index: 13, kind: output, shape index: {}]
  %s14 = sld [smem:[#allocation0]]
  $region109: #{tpu_custom_call.1} parent=0
    _
  %s16 = ssub.s32 1, %s14
  %s17 = scalar_select 0, %s16, %s14
  $region1: #{tpu_custom_call.1} parent=0
    #allocation2 [shape = 'u8[512]{0}', space=vmem, size = 0x400, scoped, tag = 'input window, operand 2, single buffered']
    #allocation3 [shape = 's32[2]{0}', space=sflag, size = 0x8, scoped, tag = 'scoped memory for tpu_custom_call.1']
    #allocation4 [shape = 's32[2]{0}', space=sflag, size = 0x8, scoped, tag = 'scoped memory for tpu_custom_call.1']
    #allocation5 [shape = 'u8[512]{0}', space=vmem, size = 0x400, scoped, tag = 'input window, operand 4, single buffered']
    #allocation6 [shape = 's32[1]{0}', space=sflag, size = 0x4, scoped, tag = 'scoped memory for tpu_custom_call.1']
    #allocation7 [shape = 'u8[512]{0}', space=vmem, size = 0x400, scoped, tag = 'input window, operand 5, single buffered']
    #allocation8 [shape = 'u8[512]{0}', space=vmem, size = 0x400, scoped, tag = 'input window, operand 6, single buffered']
    #allocation9 [shape = 's32[1]{0}', space=sflag, size = 0x4, scoped, tag = 'scoped memory for tpu_custom_call.1']
    #allocation10 [shape = 'u8[8192]{0}', space=vmem, size = 0x2000, scoped, tag = 'input window, operand 7, single buffered']
    #allocation11 [shape = 'u8[512]{0}', space=vmem, size = 0x400, scoped, tag = 'input window, operand 8, single buffered']
    #allocation12 [shape = 's32[1]{0}', space=sflag, size = 0x4, scoped, tag = 'scoped memory for tpu_custom_call.1']
    #allocation13 [shape = 'u8[8192]{0}', space=vmem, size = 0x2000, scoped, tag = 'output window, operand 0']
    %18 = vsyncpa [#allocation3], 0
    %19 = vsyncpa [#allocation6], 0
    %20 = vsyncpa [#allocation9], 0
    %21 = vsyncpa [#allocation12], 0
    %22 = vsyncpa [#allocation4], 0
    %s23 = scalar_lea.sflag [#allocation4], 1
    %24 = vsyncpa %s23, 0
    loop: start=0, step=1, limit=4
    $region2: #{tpu_custom_call.1} parent=1 // loop_pre_header
      _
    $region3: #{tpu_custom_call.1} parent=1 // loop_header
      %s26 = sphi 0, %s30
      %p27 = scmp.ge.s32.totalorder %s26, 4
      %s36 = sphi 0, %s38
      %s39 = sphi 0, %s36
      %s40 = sphi 0, %s39
      %s56 = sphi 0, %s40
      %s60 = sphi 0, %s60
      %s62 = sphi 0, %s60
      %s63 = sphi 0, %s62
      %s77 = sphi 0, %s63
      %s81 = sphi 0, %s81
      %s83 = sphi 0, %s81
      %s84 = sphi 0, %s83
      %s98 = sphi 0, %s84
      %s102 = sphi 0, %s102
      %s104 = sphi 0, %s102
      %s105 = sphi 0, %s104
      %s119 = sphi 0, %s105
      %s123 = sphi 0, %s123
      %s125 = sphi 0, %s123
      %s126 = sphi 0, %s125
      %s140 = sphi 0, %s126
      %s144 = sphi 0, %s144
      %s146 = sphi 0, %s144
      %s147 = sphi 0, %s146
      %s161 = sphi 0, %s147
      %s165 = sphi 0, %s165
      %s167 = sphi 0, %s165
      %s168 = sphi 0, %s167
      %s182 = sphi 0, %s168
      %s186 = sphi 0, %s186
      %s188 = sphi 0, %s186
      %s189 = sphi 0, %s188
      %s203 = sphi 0, %s189
      %s207 = sphi 0, %s207
      %s209 = sphi 0, %s207
      %s210 = sphi 0, %s209
      %s224 = sphi 0, %s210
      %s228 = sphi 0, %s228
      %s230 = sphi 0, %s228
      %s231 = sphi 0, %s230
      %s245 = sphi 0, %s231
      %s249 = sphi 0, %s249
      %s251 = sphi 0, %s249
      %s252 = sphi 0, %s251
      %s266 = sphi 0, %s252
      %s270 = sphi 0, %s270
      %s272 = sphi 0, %s270
      %s273 = sphi 0, %s272
      %s287 = sphi 0, %s273
      %s291 = sphi 0, %s291
      %s293 = sphi 0, %s291
      %s294 = sphi 0, %s293
      %s308 = sphi 0, %s294
      %s314 = sphi 0, %s316
      %s317 = sphi 0, %s314
      %s318 = sphi 0, %s317
      %s334 = sphi 0, %s318
    $region4: #{tpu_custom_call.1} parent=1 // loop_header_branch
      %29 = sbr.rel (%p27) target = $region8
    $region5: #{tpu_custom_call.1} parent=1 // loop_body
      %s31 = ssub.s32 %s26, 1
      %s32 = ssub.s32 %s26, 2
      %s33 = sadd.s32 %s26, 1
      %s34 = ssub.s32 %s26, %s33
      %p35 = scmp.eq.s32.totalorder %s34, 0
      %s37 = sadd.s32 %s36, 1
      %s38 = scalar_select %p35, %s36, %s37
      %p41 = pneg %p35
      %p42 = scmp.eq.s32.totalorder %s26, 1
      %p43 = por %p41, %p42
      %p44 = scmp.ne.s32.totalorder %s36, %s39
      %p45 = scmp.eq.s32.totalorder %s26, 0
      %p46 = por %p44, %p45
      %p47 = scmp.ne.s32.totalorder %s36, %s39
      %p48 = scmp.eq.s32.totalorder %s31, 1
      %p49 = por %p47, %p48
      %p50 = scmp.ne.s32.totalorder %s39, %s40
      %p51 = scmp.eq.s32.totalorder %s31, 0
      %p52 = por %p50, %p51
      %p53 = scmp.ne.s32.totalorder %s39, %s40
      %p54 = scmp.eq.s32.totalorder %s32, 1
      %p55 = por %p53, %p54
      %p57 = scmp.ne.s32.totalorder %s40, %s56
      %p58 = scmp.eq.s32.totalorder %s32, 0
      %p59 = por %p57, %p58
      %s61 = sadd.s32 %s60, 1
      %p64 = scmp.eq.s32.totalorder %s26, 1
      %p65 = scmp.ne.s32.totalorder %s60, %s62
      %p66 = scmp.eq.s32.totalorder %s26, 0
      %p67 = por %p65, %p66
      %p68 = scmp.ne.s32.totalorder %s60, %s62
      %p69 = scmp.eq.s32.totalorder %s31, 1
      %p70 = por %p68, %p69
      %p71 = scmp.ne.s32.totalorder %s62, %s63
      %p72 = scmp.eq.s32.totalorder %s31, 0
      %p73 = por %p71, %p72
      %p74 = scmp.ne.s32.totalorder %s62, %s63
      %p75 = scmp.eq.s32.totalorder %s32, 1
      %p76 = por %p74, %p75
      %p78 = scmp.ne.s32.totalorder %s63, %s77
      %p79 = scmp.eq.s32.totalorder %s32, 0
      %p80 = por %p78, %p79
      %s82 = sadd.s32 %s81, 1
      %p85 = scmp.eq.s32.totalorder %s26, 1
      %p86 = scmp.ne.s32.totalorder %s81, %s83
      %p87 = scmp.eq.s32.totalorder %s26, 0
      %p88 = por %p86, %p87
      %p89 = scmp.ne.s32.totalorder %s81, %s83
      %p90 = scmp.eq.s32.totalorder %s31, 1
      %p91 = por %p89, %p90
      %p92 = scmp.ne.s32.totalorder %s83, %s84
      %p93 = scmp.eq.s32.totalorder %s31, 0
      %p94 = por %p92, %p93
      %p95 = scmp.ne.s32.totalorder %s83, %s84
      %p96 = scmp.eq.s32.totalorder %s32, 1
      %p97 = por %p95, %p96
      %p99 = scmp.ne.s32.totalorder %s84, %s98
      %p100 = scmp.eq.s32.totalorder %s32, 0
      %p101 = por %p99, %p100
      %s103 = sadd.s32 %s102, 1
      %p106 = scmp.eq.s32.totalorder %s26, 1
      %p107 = scmp.ne.s32.totalorder %s102, %s104
      %p108 = scmp.eq.s32.totalorder %s26, 0
      %p109 = por %p107, %p108
      %p110 = scmp.ne.s32.totalorder %s102, %s104
      %p111 = scmp.eq.s32.totalorder %s31, 1
      %p112 = por %p110, %p111
      %p113 = scmp.ne.s32.totalorder %s104, %s105
      %p114 = scmp.eq.s32.totalorder %s31, 0
      %p115 = por %p113, %p114
      %p116 = scmp.ne.s32.totalorder %s104, %s105
      %p117 = scmp.eq.s32.totalorder %s32, 1
      %p118 = por %p116, %p117
      %p120 = scmp.ne.s32.totalorder %s105, %s119
      %p121 = scmp.eq.s32.totalorder %s32, 0
      %p122 = por %p120, %p121
      %s124 = sadd.s32 %s123, 1
      %p127 = scmp.eq.s32.totalorder %s26, 1
      %p128 = scmp.ne.s32.totalorder %s123, %s125
      %p129 = scmp.eq.s32.totalorder %s26, 0
      %p130 = por %p128, %p129
      %p131 = scmp.ne.s32.totalorder %s123, %s125
      %p132 = scmp.eq.s32.totalorder %s31, 1
      %p133 = por %p131, %p132
      %p134 = scmp.ne.s32.totalorder %s125, %s126
      %p135 = scmp.eq.s32.totalorder %s31, 0
      %p136 = por %p134, %p135
      %p137 = scmp.ne.s32.totalorder %s125, %s126
      %p138 = scmp.eq.s32.totalorder %s32, 1
      %p139 = por %p137, %p138
      %p141 = scmp.ne.s32.totalorder %s126, %s140
      %p142 = scmp.eq.s32.totalorder %s32, 0
      %p143 = por %p141, %p142
      %s145 = sadd.s32 %s144, 1
      %p148 = scmp.eq.s32.totalorder %s26, 1
      %p149 = scmp.ne.s32.totalorder %s144, %s146
      %p150 = scmp.eq.s32.totalorder %s26, 0
      %p151 = por %p149, %p150
      %p152 = scmp.ne.s32.totalorder %s144, %s146
      %p153 = scmp.eq.s32.totalorder %s31, 1
      %p154 = por %p152, %p153
      %p155 = scmp.ne.s32.totalorder %s146, %s147
      %p156 = scmp.eq.s32.totalorder %s31, 0
      %p157 = por %p155, %p156
      %p158 = scmp.ne.s32.totalorder %s146, %s147
      %p159 = scmp.eq.s32.totalorder %s32, 1
      %p160 = por %p158, %p159
      %p162 = scmp.ne.s32.totalorder %s147, %s161
      %p163 = scmp.eq.s32.totalorder %s32, 0
      %p164 = por %p162, %p163
      %s166 = sadd.s32 %s165, 1
      %p169 = scmp.eq.s32.totalorder %s26, 1
      %p170 = scmp.ne.s32.totalorder %s165, %s167
      %p171 = scmp.eq.s32.totalorder %s26, 0
      %p172 = por %p170, %p171
      %p173 = scmp.ne.s32.totalorder %s165, %s167
      %p174 = scmp.eq.s32.totalorder %s31, 1
      %p175 = por %p173, %p174
      %p176 = scmp.ne.s32.totalorder %s167, %s168
      %p177 = scmp.eq.s32.totalorder %s31, 0
      %p178 = por %p176, %p177
      %p179 = scmp.ne.s32.totalorder %s167, %s168
      %p180 = scmp.eq.s32.totalorder %s32, 1
      %p181 = por %p179, %p180
      %p183 = scmp.ne.s32.totalorder %s168, %s182
      %p184 = scmp.eq.s32.totalorder %s32, 0
      %p185 = por %p183, %p184
      %s187 = sadd.s32 %s186, 1
      %p190 = scmp.eq.s32.totalorder %s26, 1
      %p191 = scmp.ne.s32.totalorder %s186, %s188
      %p192 = scmp.eq.s32.totalorder %s26, 0
      %p193 = por %p191, %p192
      %p194 = scmp.ne.s32.totalorder %s186, %s188
      %p195 = scmp.eq.s32.totalorder %s31, 1
      %p196 = por %p194, %p195
      %p197 = scmp.ne.s32.totalorder %s188, %s189
      %p198 = scmp.eq.s32.totalorder %s31, 0
      %p199 = por %p197, %p198
      %p200 = scmp.ne.s32.totalorder %s188, %s189
      %p201 = scmp.eq.s32.totalorder %s32, 1
      %p202 = por %p200, %p201
      %p204 = scmp.ne.s32.totalorder %s189, %s203
      %p205 = scmp.eq.s32.totalorder %s32, 0
      %p206 = por %p204, %p205
      %s208 = sadd.s32 %s207, 1
      %p211 = scmp.eq.s32.totalorder %s26, 1
      %p212 = scmp.ne.s32.totalorder %s207, %s209
      %p213 = scmp.eq.s32.totalorder %s26, 0
      %p214 = por %p212, %p213
      %p215 = scmp.ne.s32.totalorder %s207, %s209
      %p216 = scmp.eq.s32.totalorder %s31, 1
      %p217 = por %p215, %p216
      %p218 = scmp.ne.s32.totalorder %s209, %s210
      %p219 = scmp.eq.s32.totalorder %s31, 0
      %p220 = por %p218, %p219
      %p221 = scmp.ne.s32.totalorder %s209, %s210
      %p222 = scmp.eq.s32.totalorder %s32, 1
      %p223 = por %p221, %p222
      %p225 = scmp.ne.s32.totalorder %s210, %s224
      %p226 = scmp.eq.s32.totalorder %s32, 0
      %p227 = por %p225, %p226
      %s229 = sadd.s32 %s228, 1
      %p232 = scmp.eq.s32.totalorder %s26, 1
      %p233 = scmp.ne.s32.totalorder %s228, %s230
      %p234 = scmp.eq.s32.totalorder %s26, 0
      %p235 = por %p233, %p234
      %p236 = scmp.ne.s32.totalorder %s228, %s230
      %p237 = scmp.eq.s32.totalorder %s31, 1
      %p238 = por %p236, %p237
      %p239 = scmp.ne.s32.totalorder %s230, %s231
      %p240 = scmp.eq.s32.totalorder %s31, 0
      %p241 = por %p239, %p240
      %p242 = scmp.ne.s32.totalorder %s230, %s231
      %p243 = scmp.eq.s32.totalorder %s32, 1
      %p244 = por %p242, %p243
      %p246 = scmp.ne.s32.totalorder %s231, %s245
      %p247 = scmp.eq.s32.totalorder %s32, 0
      %p248 = por %p246, %p247
      %s250 = sadd.s32 %s249, 1
      %p253 = scmp.eq.s32.totalorder %s26, 1
      %p254 = scmp.ne.s32.totalorder %s249, %s251
      %p255 = scmp.eq.s32.totalorder %s26, 0
      %p256 = por %p254, %p255
      %p257 = scmp.ne.s32.totalorder %s249, %s251
      %p258 = scmp.eq.s32.totalorder %s31, 1
      %p259 = por %p257, %p258
      %p260 = scmp.ne.s32.totalorder %s251, %s252
      %p261 = scmp.eq.s32.totalorder %s31, 0
      %p262 = por %p260, %p261
      %p263 = scmp.ne.s32.totalorder %s251, %s252
      %p264 = scmp.eq.s32.totalorder %s32, 1
      %p265 = por %p263, %p264
      %p267 = scmp.ne.s32.totalorder %s252, %s266
      %p268 = scmp.eq.s32.totalorder %s32, 0
      %p269 = por %p267, %p268
      %s271 = sadd.s32 %s270, 1
      %p274 = scmp.eq.s32.totalorder %s26, 1
      %p275 = scmp.ne.s32.totalorder %s270, %s272
      %p276 = scmp.eq.s32.totalorder %s26, 0
      %p277 = por %p275, %p276
      %p278 = scmp.ne.s32.totalorder %s270, %s272
      %p279 = scmp.eq.s32.totalorder %s31, 1
      %p280 = por %p278, %p279
      %p281 = scmp.ne.s32.totalorder %s272, %s273
      %p282 = scmp.eq.s32.totalorder %s31, 0
      %p283 = por %p281, %p282
      %p284 = scmp.ne.s32.totalorder %s272, %s273
      %p285 = scmp.eq.s32.totalorder %s32, 1
      %p286 = por %p284, %p285
      %p288 = scmp.ne.s32.totalorder %s273, %s287
      %p289 = scmp.eq.s32.totalorder %s32, 0
      %p290 = por %p288, %p289
      %s292 = sadd.s32 %s291, 1
      %p295 = scmp.eq.s32.totalorder %s26, 1
      %p296 = scmp.ne.s32.totalorder %s291, %s293
      %p297 = scmp.eq.s32.totalorder %s26, 0
      %p298 = por %p296, %p297
      %p299 = scmp.ne.s32.totalorder %s291, %s293
      %p300 = scmp.eq.s32.totalorder %s31, 1
      %p301 = por %p299, %p300
      %p302 = scmp.ne.s32.totalorder %s293, %s294
      %p303 = scmp.eq.s32.totalorder %s31, 0
      %p304 = por %p302, %p303
      %p305 = scmp.ne.s32.totalorder %s293, %s294
      %p306 = scmp.eq.s32.totalorder %s32, 1
      %p307 = por %p305, %p306
      %p309 = scmp.ne.s32.totalorder %s294, %s308
      %p310 = scmp.eq.s32.totalorder %s32, 0
      %p311 = por %p309, %p310
      %s312 = ssub.s32 %s26, %s33
      %p313 = scmp.eq.s32.totalorder %s312, 0
      %s315 = sadd.s32 %s314, 1
      %s316 = scalar_select %p313, %s314, %s315
      %p319 = pneg %p313
      %p320 = scmp.eq.s32.totalorder %s26, 1
      %p321 = por %p319, %p320
      %p322 = scmp.ne.s32.totalorder %s314, %s317
      %p323 = scmp.eq.s32.totalorder %s26, 0
      %p324 = por %p322, %p323
      %p325 = scmp.ne.s32.totalorder %s314, %s317
      %p326 = scmp.eq.s32.totalorder %s31, 1
      %p327 = por %p325, %p326
      %p328 = scmp.ne.s32.totalorder %s317, %s318
      %p329 = scmp.eq.s32.totalorder %s31, 0
      %p330 = por %p328, %p329
      %p331 = scmp.ne.s32.totalorder %s317, %s318
      %p332 = scmp.eq.s32.totalorder %s32, 1
      %p333 = por %p331, %p332
      %p335 = scmp.ne.s32.totalorder %s318, %s334
      %p336 = scmp.eq.s32.totalorder %s32, 0
      %p337 = por %p335, %p336
      %p338 = scmp.le.s32.totalorder 1, %s26
      %p339 = scmp.lt.s32.totalorder %s26, 3
      %p340 = pnand %p338, %p339
      %p341 = pneg %p340
      // Predicated region
      $region9: #{tpu_custom_call.1} parent=5 // pred_check
        _
      $region10: #{tpu_custom_call.1} parent=5 // pred_check_branch
        %343 = sbr.rel (%p340) target = $region12
      $region11: #{tpu_custom_call.1} parent=5 // pred_region
        %s344 = ssub.s32 %s26, 1
        // Predicated region
        $region13: #{tpu_custom_call.1} parent=11 // pred_check
          %p345 = pneg %p73
        $region14: #{tpu_custom_call.1} parent=11 // pred_check_branch
          %347 = sbr.rel (%p345) target = $region16
        $region15: #{tpu_custom_call.1} parent=11 // pred_region
          _
        $region16: #{tpu_custom_call.1} parent=11 // pred_fallthru
          _
        // Predicated region
        $region17: #{tpu_custom_call.1} parent=11 // pred_check
          %p348 = pneg %p94
        $region18: #{tpu_custom_call.1} parent=11 // pred_check_branch
          %350 = sbr.rel (%p348) target = $region20
        $region19: #{tpu_custom_call.1} parent=11 // pred_region
          %s352 = ssub.s32 16, 16
          %353 = vsyncadd [#allocation3], %s352
          %s355 = sshll.u32 [#allocation2], 4
          %s356 = int_to_ptr.vmem [resolvable:$true] %s355
          %358 = dma.hbm_to_vmem [thread:$0]  %s2, 16, %s356, [#allocation3]
        $region20: #{tpu_custom_call.1} parent=11 // pred_fallthru
          _
        // Predicated region
        $region21: #{tpu_custom_call.1} parent=11 // pred_check
          %p359 = pneg %p115
        $region22: #{tpu_custom_call.1} parent=11 // pred_check_branch
          %361 = sbr.rel (%p359) target = $region24
        $region23: #{tpu_custom_call.1} parent=11 // pred_region
          _
        $region24: #{tpu_custom_call.1} parent=11 // pred_fallthru
          _
        // Predicated region
        $region25: #{tpu_custom_call.1} parent=11 // pred_check
          %p362 = pneg %p136
        $region26: #{tpu_custom_call.1} parent=11 // pred_check_branch
          %364 = sbr.rel (%p362) target = $region28
        $region27: #{tpu_custom_call.1} parent=11 // pred_region
          %s366 = ssub.s32 16, 16
          %367 = vsyncadd [#allocation6], %s366
          %s369 = sshll.u32 [#allocation5], 4
          %s370 = int_to_ptr.vmem [resolvable:$true] %s369
          %372 = dma.hbm_to_vmem [thread:$0]  %s4, 16, %s370, [#allocation6]
        $region28: #{tpu_custom_call.1} parent=11 // pred_fallthru
          _
        // Predicated region
        $region29: #{tpu_custom_call.1} parent=11 // pred_check
          %p373 = pneg %p157
        $region30: #{tpu_custom_call.1} parent=11 // pred_check_branch
          %375 = sbr.rel (%p373) target = $region32
        $region31: #{tpu_custom_call.1} parent=11 // pred_region
          %s377 = ssub.s32 16, 16
          %378 = vsyncadd [#allocation6], %s377
          %s380 = sshll.u32 [#allocation7], 4
          %s381 = int_to_ptr.vmem [resolvable:$true] %s380
          %383 = dma.hbm_to_vmem [thread:$0]  %s5, 16, %s381, [#allocation6]
        $region32: #{tpu_custom_call.1} parent=11 // pred_fallthru
          _
        // Predicated region
        $region33: #{tpu_custom_call.1} parent=11 // pred_check
          %p384 = pneg %p178
        $region34: #{tpu_custom_call.1} parent=11 // pred_check_branch
          %386 = sbr.rel (%p384) target = $region36
        $region35: #{tpu_custom_call.1} parent=11 // pred_region
          %s388 = ssub.s32 16, 16
          %389 = vsyncadd [#allocation9], %s388
          %s391 = sshll.u32 [#allocation8], 4
          %s392 = int_to_ptr.vmem [resolvable:$true] %s391
          %394 = dma.hbm_to_vmem [thread:$0]  %s6, 16, %s392, [#allocation9]
        $region36: #{tpu_custom_call.1} parent=11 // pred_fallthru
          _
        // Predicated region
        $region37: #{tpu_custom_call.1} parent=11 // pred_check
          %p395 = pneg %p199
        $region38: #{tpu_custom_call.1} parent=11 // pred_check_branch
          %397 = sbr.rel (%p395) target = $region40
        $region39: #{tpu_custom_call.1} parent=11 // pred_region
          %s399 = ssub.s32 256, 256
          %400 = vsyncadd [#allocation9], %s399
          %s401 = sshll.u32 [#allocation10], 4
          %s402 = int_to_ptr.vmem [resolvable:$true] %s401
          %407 = dma.hbm_to_vmem [thread:$0]  %s7, 256, %s402, [#allocation9], 64, 64, 4
        $region40: #{tpu_custom_call.1} parent=11 // pred_fallthru
          _
        // Predicated region
        $region41: #{tpu_custom_call.1} parent=11 // pred_check
          %p408 = pneg %p220
        $region42: #{tpu_custom_call.1} parent=11 // pred_check_branch
          %410 = sbr.rel (%p408) target = $region44
        $region43: #{tpu_custom_call.1} parent=11 // pred_region
          %s412 = ssub.s32 16, 16
          %413 = vsyncadd [#allocation12], %s412
          %s415 = sshll.u32 [#allocation11], 4
          %s416 = int_to_ptr.vmem [resolvable:$true] %s415
          %418 = dma.hbm_to_vmem [thread:$0]  %s8, 16, %s416, [#allocation12]
        $region44: #{tpu_custom_call.1} parent=11 // pred_fallthru
          _
        // Predicated region
        $region45: #{tpu_custom_call.1} parent=11 // pred_check
          %p419 = pneg %p241
        $region46: #{tpu_custom_call.1} parent=11 // pred_check_branch
          %421 = sbr.rel (%p419) target = $region48
        $region47: #{tpu_custom_call.1} parent=11 // pred_region
          _
        $region48: #{tpu_custom_call.1} parent=11 // pred_fallthru
          _
        // Predicated region
        $region49: #{tpu_custom_call.1} parent=11 // pred_check
          %p422 = pneg %p262
        $region50: #{tpu_custom_call.1} parent=11 // pred_check_branch
          %424 = sbr.rel (%p422) target = $region52
        $region51: #{tpu_custom_call.1} parent=11 // pred_region
          _
        $region52: #{tpu_custom_call.1} parent=11 // pred_fallthru
          _
        // Predicated region
        $region53: #{tpu_custom_call.1} parent=11 // pred_check
          %p425 = pneg %p283
        $region54: #{tpu_custom_call.1} parent=11 // pred_check_branch
          %427 = sbr.rel (%p425) target = $region56
        $region55: #{tpu_custom_call.1} parent=11 // pred_region
          _
        $region56: #{tpu_custom_call.1} parent=11 // pred_fallthru
          _
        // Predicated region
        $region57: #{tpu_custom_call.1} parent=11 // pred_check
          %p428 = pneg %p304
        $region58: #{tpu_custom_call.1} parent=11 // pred_check_branch
          %430 = sbr.rel (%p428) target = $region60
        $region59: #{tpu_custom_call.1} parent=11 // pred_region
          _
        $region60: #{tpu_custom_call.1} parent=11 // pred_fallthru
          _
      $region12: #{tpu_custom_call.1} parent=5 // pred_fallthru
        _
      %p431 = scmp.lt.s32.totalorder %s26, 2
      // Predicated region
      $region61: #{tpu_custom_call.1} parent=5 // pred_check
        %p432 = pneg %p431
      $region62: #{tpu_custom_call.1} parent=5 // pred_check_branch
        %434 = sbr.rel (%p432) target = $region64
      $region63: #{tpu_custom_call.1} parent=5 // pred_region
        // Predicated region
        $region65: #{tpu_custom_call.1} parent=63 // pred_check
          %p435 = pneg %p46
        $region66: #{tpu_custom_call.1} parent=63 // pred_check_branch
          %437 = sbr.rel (%p435) target = $region68
        $region67: #{tpu_custom_call.1} parent=63 // pred_region
          %p438 = scmp.lt.s32.totalorder %s26, 1
          %s439 = scalar_select %p438, %s26, 1
          %s440 = smul.addr %s439, 8
          %s441 = scalar_lea.vmem %s0, %s440
        $region68: #{tpu_custom_call.1} parent=63 // pred_fallthru
          _
      $region64: #{tpu_custom_call.1} parent=5 // pred_fallthru
        _
      %p442 = scmp.le.s32.totalorder 1, %s26
      %p443 = scmp.lt.s32.totalorder %s26, 3
      %p444 = pnand %p442, %p443
      %p445 = pneg %p444
      // Predicated region
      $region69: #{tpu_custom_call.1} parent=5 // pred_check
        _
      $region70: #{tpu_custom_call.1} parent=5 // pred_check_branch
        %447 = sbr.rel (%p444) target = $region72
      $region71: #{tpu_custom_call.1} parent=5 // pred_region
        %s448 = ssub.s32 %s26, 1
        // Predicated region
        $region73: #{tpu_custom_call.1} parent=71 // pred_check
          %p449 = pneg %p94
        $region74: #{tpu_custom_call.1} parent=71 // pred_check_branch
          %451 = sbr.rel (%p449) target = $region76
        $region75: #{tpu_custom_call.1} parent=71 // pred_region
          %452 = dma.done [#allocation3], 16
        $region76: #{tpu_custom_call.1} parent=71 // pred_fallthru
          _
        // Predicated region
        $region77: #{tpu_custom_call.1} parent=71 // pred_check
          %p453 = pneg %p136
        $region78: #{tpu_custom_call.1} parent=71 // pred_check_branch
          %455 = sbr.rel (%p453) target = $region80
        $region79: #{tpu_custom_call.1} parent=71 // pred_region
          %456 = dma.done [#allocation6], 16
        $region80: #{tpu_custom_call.1} parent=71 // pred_fallthru
          _
        // Predicated region
        $region81: #{tpu_custom_call.1} parent=71 // pred_check
          %p457 = pneg %p157
        $region82: #{tpu_custom_call.1} parent=71 // pred_check_branch
          %459 = sbr.rel (%p457) target = $region84
        $region83: #{tpu_custom_call.1} parent=71 // pred_region
          %460 = dma.done [#allocation6], 16
        $region84: #{tpu_custom_call.1} parent=71 // pred_fallthru
          _
        // Predicated region
        $region85: #{tpu_custom_call.1} parent=71 // pred_check
          %p461 = pneg %p178
        $region86: #{tpu_custom_call.1} parent=71 // pred_check_branch
          %463 = sbr.rel (%p461) target = $region88
        $region87: #{tpu_custom_call.1} parent=71 // pred_region
          %464 = dma.done [#allocation9], 16
        $region88: #{tpu_custom_call.1} parent=71 // pred_fallthru
          _
        // Predicated region
        $region89: #{tpu_custom_call.1} parent=71 // pred_check
          %p465 = pneg %p199
        $region90: #{tpu_custom_call.1} parent=71 // pred_check_branch
          %467 = sbr.rel (%p465) target = $region92
        $region91: #{tpu_custom_call.1} parent=71 // pred_region
          %468 = dma.done [#allocation9], 256
        $region92: #{tpu_custom_call.1} parent=71 // pred_fallthru
          _
        // Predicated region
        $region93: #{tpu_custom_call.1} parent=71 // pred_check
          %p469 = pneg %p220
        $region94: #{tpu_custom_call.1} parent=71 // pred_check_branch
          %471 = sbr.rel (%p469) target = $region96
        $region95: #{tpu_custom_call.1} parent=71 // pred_region
          %472 = dma.done [#allocation12], 16
        $region96: #{tpu_custom_call.1} parent=71 // pred_fallthru
          _
        %p473 = scmp.lt.s32.totalorder %s31, 1
        %s474 = scalar_select %p473, %s31, 1
        %s475 = smul.addr %s474, 8
        %s476 = scalar_lea.vmem %s0, %s475
        %p477 = pneg %p52
        %p478 = pneg %p49
        %p479 = pneg %p73
        %p480 = pneg %p70
        %p481 = pneg %p94
        %p482 = pneg %p91
        %p483 = pneg %p115
        %p484 = pneg %p112
        %p485 = pneg %p136
        %p486 = pneg %p133
        %p487 = pneg %p157
        %p488 = pneg %p154
        %p489 = pneg %p178
        %p490 = pneg %p175
        %p491 = pneg %p199
        %p492 = pneg %p196
        %p493 = pneg %p220
        %p494 = pneg %p217
        %p495 = pneg %p241
        %p496 = pneg %p238
        %p497 = pneg %p262
        %p498 = pneg %p259
        %p499 = pneg %p283
        %p500 = pneg %p280
        %p501 = pneg %p304
        %p502 = pneg %p301
        %p503 = pneg %p330
        %p504 = pneg %p327
        %s505 = sand.u32 %s317, 1
        %s506 = scalar_lea.sflag [#allocation4], %s505
        %s507 = sand.u32 %s317, 1
        %s508 = smul.addr %s507, 8
        %s509 = scalar_lea.vmem [#allocation13], %s508
        %p510 = scmp.lt.s32.totalorder %s31, 1
        %s511 = scalar_select %p510, %s31, 1
        %s512 = smul.addr %s511, 8
        %s513 = scalar_lea.vmem %s0, %s512
        %v515 = vld [vmem:[%s513] sm:$0xff]
        %v516 = vpack.c.bf16 %v515, %v515
        %v517 = vld [vmem:[%s1] sm:$0xf]
        %v518 = vld [vmem:[%s1 + $0x4] sm:$0xf]
        %v519 = vld [vmem:[%s1 + $0x8] sm:$0xf]
        %v520 = vld [vmem:[%s1 + $0xc] sm:$0xf]
        %v521 = vld [vmem:[#allocation2] sm:$0x1]
        %v523 = vlaneseq
        %v524 = vshrl.u32 %v523, 7
        %v525 = vsub.s32 0, %v524
        %v526 = vrot.slane %v521, %v525
        %v532 = vunpack.c.l.b16 %v517
        %v533 = vunpack.c.l.b16 %v518
        %v534 = vunpack.c.l.b16 %v519
        %v535 = vunpack.c.l.b16 %v520
        %v536 = vpack.c.b16 %v533, %v532
        %v537 = vpack.c.b16 %v535, %v534
        %vm540 = vcmask 261120
        %v542 = vsel %vm540, %v516, 0
        %544 = vmatprep.subr.bf16.mxu0 0
        %545 = vmatpush1.bf16.msra.mxu0 0
        %546 = vmatprep.subr.bf16.mxu0 0
        %547 = vmatpush1.bf16.msra.mxu0 0
        %548 = vmatprep.subr.bf16.mxu0 0
        %549 = vmatpush1.bf16.msra.mxu0 0
        %550 = vmatprep.subr.bf16.mxu0 0
        %551 = vmatpush1.bf16.msra.mxu0 0
        %552 = vmatprep.subr.bf16.mxu0 0
        %553 = vmatpush1.bf16.msra.mxu0 0
        %554 = vmatprep.subr.bf16.mxu0 0
        %555 = vmatpush1.bf16.msra.mxu0 0
        %556 = vmatprep.subr.bf16.mxu0 0
        %557 = vmatpush1.bf16.msra.mxu0 %v537
        %558 = vmatprep.subr.bf16.mxu0 0
        %559 = vmatpush1.bf16.msra.mxu0 %v536
        %560 = vmatprep.subr.bf16.mxu0 0
        %561 = vmatpush2.bf16.msra.mxu0 0
        %562 = vmatprep.subr.bf16.mxu0 0
        %563 = vmatpush2.bf16.msra.mxu0 0
        %564 = vmatprep.subr.bf16.mxu0 0
        %565 = vmatpush2.bf16.msra.mxu0 0
        %566 = vmatprep.subr.bf16.mxu0 0
        %567 = vmatpush2.bf16.msra.mxu0 0
        %568 = vmatprep.subr.bf16.mxu0 0
        %569 = vmatpush2.bf16.msra.mxu0 0
        %570 = vmatprep.subr.bf16.mxu0 0
        %571 = vmatpush2.bf16.msra.mxu0 0
        %572 = vmatprep.subr.bf16.mxu0 0
        %573 = vmatpush2.bf16.msra.mxu0 0
        %574 = vmatprep.subr.bf16.mxu0 0
        %575 = vmatpush2.bf16.msra.mxu0 0
        %576 = vmatprep.mubr.bf16.mxu0 0
        %577 = vmatmul.mubr.bf16.gmra.mxu0 %v542
        %v578 = vpop.f32.mrf.mxu0
        %v579 = vadd.f32 %v526, %v578
        %v580 = vpop.f32.mrf.mxu0
        %v581 = vpop.f32.mrf.mxu0
        %v582 = vpop.f32.mrf.mxu0
        %583 = vdwg.mxu0
        %v584 = vpack.c.bf16 %v579, %v579
        %586 = vrot.lane.b32.xlu0 %v584, 96
        %v587 = vpop.permute.xlu0 %586
        %vm588 = vcmask 64512
        %v590 = vsel %vm588, %v584, 0
        %v593 = vsel %vm588, %v587, 0
        %595 = vmatprep.subr.bf16.mxu0 0
        %596 = vmatpush1.bf16.xpose.msra.mxu0 0
        %597 = vmatprep.subr.bf16.mxu0 0
        %598 = vmatpush1.bf16.xpose.msra.mxu0 0
        %599 = vmatprep.subr.bf16.mxu0 0
        %600 = vmatpush1.bf16.xpose.msra.mxu0 0
        %601 = vmatprep.subr.bf16.mxu0 0
        %602 = vmatpush1.bf16.xpose.msra.mxu0 0
        %603 = vmatprep.subr.bf16.mxu0 0
        %604 = vmatpush1.bf16.xpose.msra.mxu0 0
        %605 = vmatprep.subr.bf16.mxu0 0
        %606 = vmatpush1.bf16.xpose.msra.mxu0 0
        %607 = vmatprep.subr.bf16.mxu0 0
        %608 = vmatpush1.bf16.xpose.msra.mxu0 0
        %609 = vmatprep.subr.bf16.mxu0 0
        %610 = vmatpush1.bf16.xpose.msra.mxu0 %v593
        %611 = vmatprep.subr.bf16.mxu0 0
        %612 = vmatpush2.bf16.xpose.msra.mxu0 0
        %613 = vmatprep.subr.bf16.mxu0 0
        %614 = vmatpush2.bf16.xpose.msra.mxu0 0
        %615 = vmatprep.subr.bf16.mxu0 0
        %616 = vmatpush2.bf16.xpose.msra.mxu0 0
        %617 = vmatprep.subr.bf16.mxu0 0
        %618 = vmatpush2.bf16.xpose.msra.mxu0 0
        %619 = vmatprep.subr.bf16.mxu0 0
        %620 = vmatpush2.bf16.xpose.msra.mxu0 0
        %621 = vmatprep.subr.bf16.mxu0 0
        %622 = vmatpush2.bf16.xpose.msra.mxu0 0
        %623 = vmatprep.subr.bf16.mxu0 0
        %624 = vmatpush2.bf16.xpose.msra.mxu0 0
        %625 = vmatprep.subr.bf16.mxu0 0
        %626 = vmatpush2.bf16.xpose.msra.mxu0 0
        %627 = vmatprep.mubr.bf16.mxu0 0
        %628 = vmatmul.mubr.bf16.gmra.mxu0 %v590
        %v629 = vpop.f32.mrf.mxu0
        %v630 = vadd.f32 0.0, %v629
        %v631 = vpop.f32.mrf.mxu0
        %v632 = vpop.f32.mrf.mxu0
        %v633 = vpop.f32.mrf.mxu0
        %634 = vdwg.mxu0
        %v635 = vsel %vm588, %v630, -inf
        %636 = vmax.xlane.f32.xlu0 %v635
        %v637 = vpop.xlane.xlu0 %636
        %v638 = vsub.f32 %v630, %v637
        %v639 = vmul.f32 %v638, 1.442695
        %v640 = vpow.pop %v639
        %v641 = vsel %vm588, %v640, 0.0
        %642 = vadd.xlane.f32.xlu0 %v641
        %v643 = vpop.xlane.xlu0 %642
        %v644 = vrcp.pop %v643
        %v645 = vmul.f32 %v640, %v644
        %v646 = vpack.c.bf16 %v645, %v645
        %647 = vrot.lane.b32.xlu0 %v584, 64
        %v648 = vpop.permute.xlu0 %647
        %v650 = vsel %vm588, %v646, 0
        %vm652 = vcmask 1043456
        %v654 = vsel %vm652, %v648, 0
        %656 = vmatprep.subr.bf16.mxu0 0
        %657 = vmatpush1.bf16.msra.mxu0 0
        %658 = vmatprep.subr.bf16.mxu0 0
        %659 = vmatpush1.bf16.msra.mxu0 0
        %660 = vmatprep.subr.bf16.mxu0 0
        %661 = vmatpush1.bf16.msra.mxu0 0
        %662 = vmatprep.subr.bf16.mxu0 0
        %663 = vmatpush1.bf16.msra.mxu0 0
        %664 = vmatprep.subr.bf16.mxu0 0
        %665 = vmatpush1.bf16.msra.mxu0 0
        %666 = vmatprep.subr.bf16.mxu0 0
        %667 = vmatpush1.bf16.msra.mxu0 0
        %668 = vmatprep.subr.bf16.mxu0 0
        %669 = vmatpush1.bf16.msra.mxu0 0
        %670 = vmatprep.subr.bf16.mxu0 0
        %671 = vmatpush1.bf16.msra.mxu0 %v654
        %672 = vmatprep.subr.bf16.mxu0 0
        %673 = vmatpush2.bf16.msra.mxu0 0
        %674 = vmatprep.subr.bf16.mxu0 0
        %675 = vmatpush2.bf16.msra.mxu0 0
        %676 = vmatprep.subr.bf16.mxu0 0
        %677 = vmatpush2.bf16.msra.mxu0 0
        %678 = vmatprep.subr.bf16.mxu0 0
        %679 = vmatpush2.bf16.msra.mxu0 0
        %680 = vmatprep.subr.bf16.mxu0 0
        %681 = vmatpush2.bf16.msra.mxu0 0
        %682 = vmatprep.subr.bf16.mxu0 0
        %683 = vmatpush2.bf16.msra.mxu0 0
        %684 = vmatprep.subr.bf16.mxu0 0
        %685 = vmatpush2.bf16.msra.mxu0 0
        %686 = vmatprep.subr.bf16.mxu0 0
        %687 = vmatpush2.bf16.msra.mxu0 0
        %688 = vmatprep.mubr.bf16.mxu0 0
        %689 = vmatmul.mubr.bf16.gmra.mxu0 %v650
        %v690 = vpop.f32.mrf.mxu0
        %v691 = vadd.f32 0.0, %v690
        %v692 = vpop.f32.mrf.mxu0
        %v693 = vpop.f32.mrf.mxu0
        %v694 = vpop.f32.mrf.mxu0
        %695 = vdwg.mxu0
        %696 = vrot.lane.b32.xlu0 %v584, 120
        %v697 = vpop.permute.xlu0 %696
        %698 = vrot.lane.b32.xlu0 %v584, 88
        %v699 = vpop.permute.xlu0 %698
        %v701 = vsel %vm588, %v697, 0
        %v704 = vsel %vm588, %v699, 0
        %706 = vmatprep.subr.bf16.mxu0 0
        %707 = vmatpush1.bf16.xpose.msra.mxu0 0
        %708 = vmatprep.subr.bf16.mxu0 0
        %709 = vmatpush1.bf16.xpose.msra.mxu0 0
        %710 = vmatprep.subr.bf16.mxu0 0
        %711 = vmatpush1.bf16.xpose.msra.mxu0 0
        %712 = vmatprep.subr.bf16.mxu0 0
        %713 = vmatpush1.bf16.xpose.msra.mxu0 0
        %714 = vmatprep.subr.bf16.mxu0 0
        %715 = vmatpush1.bf16.xpose.msra.mxu0 0
        %716 = vmatprep.subr.bf16.mxu0 0
        %717 = vmatpush1.bf16.xpose.msra.mxu0 0
        %718 = vmatprep.subr.bf16.mxu0 0
        %719 = vmatpush1.bf16.xpose.msra.mxu0 0
        %720 = vmatprep.subr.bf16.mxu0 0
        %721 = vmatpush1.bf16.xpose.msra.mxu0 %v704
        %722 = vmatprep.subr.bf16.mxu0 0
        %723 = vmatpush2.bf16.xpose.msra.mxu0 0
        %724 = vmatprep.subr.bf16.mxu0 0
        %725 = vmatpush2.bf16.xpose.msra.mxu0 0
        %726 = vmatprep.subr.bf16.mxu0 0
        %727 = vmatpush2.bf16.xpose.msra.mxu0 0
        %728 = vmatprep.subr.bf16.mxu0 0
        %729 = vmatpush2.bf16.xpose.msra.mxu0 0
        %730 = vmatprep.subr.bf16.mxu0 0
        %731 = vmatpush2.bf16.xpose.msra.mxu0 0
        %732 = vmatprep.subr.bf16.mxu0 0
        %733 = vmatpush2.bf16.xpose.msra.mxu0 0
        %734 = vmatprep.subr.bf16.mxu0 0
        %735 = vmatpush2.bf16.xpose.msra.mxu0 0
        %736 = vmatprep.subr.bf16.mxu0 0
        %737 = vmatpush2.bf16.xpose.msra.mxu0 0
        %738 = vmatprep.mubr.bf16.mxu0 0
        %739 = vmatmul.mubr.bf16.gmra.mxu0 %v701
        %v740 = vpop.f32.mrf.mxu0
        %v741 = vadd.f32 0.0, %v740
        %v742 = vpop.f32.mrf.mxu0
        %v743 = vpop.f32.mrf.mxu0
        %v744 = vpop.f32.mrf.mxu0
        %745 = vdwg.mxu0
        %v746 = vsel %vm588, %v741, -inf
        %747 = vmax.xlane.f32.xlu0 %v746
        %v748 = vpop.xlane.xlu0 %747
        %v749 = vsub.f32 %v741, %v748
        %v750 = vmul.f32 %v749, 1.442695
        %v751 = vpow.pop %v750
        %v752 = vsel %vm588, %v751, 0.0
        %753 = vadd.xlane.f32.xlu0 %v752
        %v754 = vpop.xlane.xlu0 %753
        %v755 = vrcp.pop %v754
        %v756 = vmul.f32 %v751, %v755
        %v757 = vpack.c.bf16 %v756, %v756
        %758 = vrot.lane.b32.xlu0 %v584, 56
        %v759 = vpop.permute.xlu0 %758
        %v761 = vsel %vm588, %v757, 0
        %v764 = vsel %vm652, %v759, 0
        %766 = vmatprep.subr.bf16.mxu0 0
        %767 = vmatpush1.bf16.msra.mxu0 0
        %768 = vmatprep.subr.bf16.mxu0 0
        %769 = vmatpush1.bf16.msra.mxu0 0
        %770 = vmatprep.subr.bf16.mxu0 0
        %771 = vmatpush1.bf16.msra.mxu0 0
        %772 = vmatprep.subr.bf16.mxu0 0
        %773 = vmatpush1.bf16.msra.mxu0 0
        %774 = vmatprep.subr.bf16.mxu0 0
        %775 = vmatpush1.bf16.msra.mxu0 0
        %776 = vmatprep.subr.bf16.mxu0 0
        %777 = vmatpush1.bf16.msra.mxu0 0
        %778 = vmatprep.subr.bf16.mxu0 0
        %779 = vmatpush1.bf16.msra.mxu0 0
        %780 = vmatprep.subr.bf16.mxu0 0
        %781 = vmatpush1.bf16.msra.mxu0 %v764
        %782 = vmatprep.subr.bf16.mxu0 0
        %783 = vmatpush2.bf16.msra.mxu0 0
        %784 = vmatprep.subr.bf16.mxu0 0
        %785 = vmatpush2.bf16.msra.mxu0 0
        %786 = vmatprep.subr.bf16.mxu0 0
        %787 = vmatpush2.bf16.msra.mxu0 0
        %788 = vmatprep.subr.bf16.mxu0 0
        %789 = vmatpush2.bf16.msra.mxu0 0
        %790 = vmatprep.subr.bf16.mxu0 0
        %791 = vmatpush2.bf16.msra.mxu0 0
        %792 = vmatprep.subr.bf16.mxu0 0
        %793 = vmatpush2.bf16.msra.mxu0 0
        %794 = vmatprep.subr.bf16.mxu0 0
        %795 = vmatpush2.bf16.msra.mxu0 0
        %796 = vmatprep.subr.bf16.mxu0 0
        %797 = vmatpush2.bf16.msra.mxu0 0
        %798 = vmatprep.mubr.bf16.mxu0 0
        %799 = vmatmul.mubr.bf16.gmra.mxu0 %v761
        %v800 = vpop.f32.mrf.mxu0
        %v801 = vadd.f32 0.0, %v800
        %v802 = vpop.f32.mrf.mxu0
        %v803 = vpop.f32.mrf.mxu0
        %v804 = vpop.f32.mrf.mxu0
        %805 = vdwg.mxu0
        %806 = vrot.lane.b32.xlu0 %v584, 112
        %v807 = vpop.permute.xlu0 %806
        %808 = vrot.lane.b32.xlu0 %v584, 80
        %v809 = vpop.permute.xlu0 %808
        %v811 = vsel %vm588, %v807, 0
        %v814 = vsel %vm588, %v809, 0
        %816 = vmatprep.subr.bf16.mxu0 0
        %817 = vmatpush1.bf16.xpose.msra.mxu0 0
        %818 = vmatprep.subr.bf16.mxu0 0
        %819 = vmatpush1.bf16.xpose.msra.mxu0 0
        %820 = vmatprep.subr.bf16.mxu0 0
        %821 = vmatpush1.bf16.xpose.msra.mxu0 0
        %822 = vmatprep.subr.bf16.mxu0 0
        %823 = vmatpush1.bf16.xpose.msra.mxu0 0
        %824 = vmatprep.subr.bf16.mxu0 0
        %825 = vmatpush1.bf16.xpose.msra.mxu0 0
        %826 = vmatprep.subr.bf16.mxu0 0
        %827 = vmatpush1.bf16.xpose.msra.mxu0 0
        %828 = vmatprep.subr.bf16.mxu0 0
        %829 = vmatpush1.bf16.xpose.msra.mxu0 0
        %830 = vmatprep.subr.bf16.mxu0 0
        %831 = vmatpush1.bf16.xpose.msra.mxu0 %v814
        %832 = vmatprep.subr.bf16.mxu0 0
        %833 = vmatpush2.bf16.xpose.msra.mxu0 0
        %834 = vmatprep.subr.bf16.mxu0 0
        %835 = vmatpush2.bf16.xpose.msra.mxu0 0
        %836 = vmatprep.subr.bf16.mxu0 0
        %837 = vmatpush2.bf16.xpose.msra.mxu0 0
        %838 = vmatprep.subr.bf16.mxu0 0
        %839 = vmatpush2.bf16.xpose.msra.mxu0 0
        %840 = vmatprep.subr.bf16.mxu0 0
        %841 = vmatpush2.bf16.xpose.msra.mxu0 0
        %842 = vmatprep.subr.bf16.mxu0 0
        %843 = vmatpush2.bf16.xpose.msra.mxu0 0
        %844 = vmatprep.subr.bf16.mxu0 0
        %845 = vmatpush2.bf16.xpose.msra.mxu0 0
        %846 = vmatprep.subr.bf16.mxu0 0
        %847 = vmatpush2.bf16.xpose.msra.mxu0 0
        %848 = vmatprep.mubr.bf16.mxu0 0
        %849 = vmatmul.mubr.bf16.gmra.mxu0 %v811
        %v850 = vpop.f32.mrf.mxu0
        %v851 = vadd.f32 0.0, %v850
        %v852 = vpop.f32.mrf.mxu0
        %v853 = vpop.f32.mrf.mxu0
        %v854 = vpop.f32.mrf.mxu0
        %855 = vdwg.mxu0
        %v856 = vsel %vm588, %v851, -inf
        %857 = vmax.xlane.f32.xlu0 %v856
        %v858 = vpop.xlane.xlu0 %857
        %v859 = vsub.f32 %v851, %v858
        %v860 = vmul.f32 %v859, 1.442695
        %v861 = vpow.pop %v860
        %v862 = vsel %vm588, %v861, 0.0
        %863 = vadd.xlane.f32.xlu0 %v862
        %v864 = vpop.xlane.xlu0 %863
        %v865 = vrcp.pop %v864
        %v866 = vmul.f32 %v861, %v865
        %v867 = vpack.c.bf16 %v866, %v866
        %868 = vrot.lane.b32.xlu0 %v584, 48
        %v869 = vpop.permute.xlu0 %868
        %v871 = vsel %vm588, %v867, 0
        %v874 = vsel %vm652, %v869, 0
        %876 = vmatprep.subr.bf16.mxu0 0
        %877 = vmatpush1.bf16.msra.mxu0 0
        %878 = vmatprep.subr.bf16.mxu0 0
        %879 = vmatpush1.bf16.msra.mxu0 0
        %880 = vmatprep.subr.bf16.mxu0 0
        %881 = vmatpush1.bf16.msra.mxu0 0
        %882 = vmatprep.subr.bf16.mxu0 0
        %883 = vmatpush1.bf16.msra.mxu0 0
        %884 = vmatprep.subr.bf16.mxu0 0
        %885 = vmatpush1.bf16.msra.mxu0 0
        %886 = vmatprep.subr.bf16.mxu0 0
        %887 = vmatpush1.bf16.msra.mxu0 0
        %888 = vmatprep.subr.bf16.mxu0 0
        %889 = vmatpush1.bf16.msra.mxu0 0
        %890 = vmatprep.subr.bf16.mxu0 0
        %891 = vmatpush1.bf16.msra.mxu0 %v874
        %892 = vmatprep.subr.bf16.mxu0 0
        %893 = vmatpush2.bf16.msra.mxu0 0
        %894 = vmatprep.subr.bf16.mxu0 0
        %895 = vmatpush2.bf16.msra.mxu0 0
        %896 = vmatprep.subr.bf16.mxu0 0
        %897 = vmatpush2.bf16.msra.mxu0 0
        %898 = vmatprep.subr.bf16.mxu0 0
        %899 = vmatpush2.bf16.msra.mxu0 0
        %900 = vmatprep.subr.bf16.mxu0 0
        %901 = vmatpush2.bf16.msra.mxu0 0
        %902 = vmatprep.subr.bf16.mxu0 0
        %903 = vmatpush2.bf16.msra.mxu0 0
        %904 = vmatprep.subr.bf16.mxu0 0
        %905 = vmatpush2.bf16.msra.mxu0 0
        %906 = vmatprep.subr.bf16.mxu0 0
        %907 = vmatpush2.bf16.msra.mxu0 0
        %908 = vmatprep.mubr.bf16.mxu0 0
        %909 = vmatmul.mubr.bf16.gmra.mxu0 %v871
        %v910 = vpop.f32.mrf.mxu0
        %v911 = vadd.f32 0.0, %v910
        %v912 = vpop.f32.mrf.mxu0
        %v913 = vpop.f32.mrf.mxu0
        %v914 = vpop.f32.mrf.mxu0
        %915 = vdwg.mxu0
        %916 = vrot.lane.b32.xlu0 %v584, 104
        %v917 = vpop.permute.xlu0 %916
        %918 = vrot.lane.b32.xlu0 %v584, 72
        %v919 = vpop.permute.xlu0 %918
        %v921 = vsel %vm588, %v917, 0
        %v924 = vsel %vm588, %v919, 0
        %926 = vmatprep.subr.bf16.mxu0 0
        %927 = vmatpush1.bf16.xpose.msra.mxu0 0
        %928 = vmatprep.subr.bf16.mxu0 0
        %929 = vmatpush1.bf16.xpose.msra.mxu0 0
        %930 = vmatprep.subr.bf16.mxu0 0
        %931 = vmatpush1.bf16.xpose.msra.mxu0 0
        %932 = vmatprep.subr.bf16.mxu0 0
        %933 = vmatpush1.bf16.xpose.msra.mxu0 0
        %934 = vmatprep.subr.bf16.mxu0 0
        %935 = vmatpush1.bf16.xpose.msra.mxu0 0
        %936 = vmatprep.subr.bf16.mxu0 0
        %937 = vmatpush1.bf16.xpose.msra.mxu0 0
        %938 = vmatprep.subr.bf16.mxu0 0
        %939 = vmatpush1.bf16.xpose.msra.mxu0 0
        %940 = vmatprep.subr.bf16.mxu0 0
        %941 = vmatpush1.bf16.xpose.msra.mxu0 %v924
        %942 = vmatprep.subr.bf16.mxu0 0
        %943 = vmatpush2.bf16.xpose.msra.mxu0 0
        %944 = vmatprep.subr.bf16.mxu0 0
        %945 = vmatpush2.bf16.xpose.msra.mxu0 0
        %946 = vmatprep.subr.bf16.mxu0 0
        %947 = vmatpush2.bf16.xpose.msra.mxu0 0
        %948 = vmatprep.subr.bf16.mxu0 0
        %949 = vmatpush2.bf16.xpose.msra.mxu0 0
        %950 = vmatprep.subr.bf16.mxu0 0
        %951 = vmatpush2.bf16.xpose.msra.mxu0 0
        %952 = vmatprep.subr.bf16.mxu0 0
        %953 = vmatpush2.bf16.xpose.msra.mxu0 0
        %954 = vmatprep.subr.bf16.mxu0 0
        %955 = vmatpush2.bf16.xpose.msra.mxu0 0
        %956 = vmatprep.subr.bf16.mxu0 0
        %957 = vmatpush2.bf16.xpose.msra.mxu0 0
        %958 = vmatprep.mubr.bf16.mxu0 0
        %959 = vmatmul.mubr.bf16.gmra.mxu0 %v921
        %v960 = vpop.f32.mrf.mxu0
        %v961 = vadd.f32 0.0, %v960
        %v962 = vpop.f32.mrf.mxu0
        %v963 = vpop.f32.mrf.mxu0
        %v964 = vpop.f32.mrf.mxu0
        %965 = vdwg.mxu0
        %v966 = vsel %vm588, %v961, -inf
        %967 = vmax.xlane.f32.xlu0 %v966
        %v968 = vpop.xlane.xlu0 %967
        %v969 = vsub.f32 %v961, %v968
        %v970 = vmul.f32 %v969, 1.442695
        %v971 = vpow.pop %v970
        %v972 = vsel %vm588, %v971, 0.0
        %973 = vadd.xlane.f32.xlu0 %v972
        %v974 = vpop.xlane.xlu0 %973
        %v975 = vrcp.pop %v974
        %v976 = vmul.f32 %v971, %v975
        %v977 = vpack.c.bf16 %v976, %v976
        %978 = vrot.lane.b32.xlu0 %v584, 40
        %v979 = vpop.permute.xlu0 %978
        %v981 = vsel %vm588, %v977, 0
        %v984 = vsel %vm652, %v979, 0
        %986 = vmatprep.subr.bf16.mxu0 0
        %987 = vmatpush1.bf16.msra.mxu0 0
        %988 = vmatprep.subr.bf16.mxu0 0
        %989 = vmatpush1.bf16.msra.mxu0 0
        %990 = vmatprep.subr.bf16.mxu0 0
        %991 = vmatpush1.bf16.msra.mxu0 0
        %992 = vmatprep.subr.bf16.mxu0 0
        %993 = vmatpush1.bf16.msra.mxu0 0
        %994 = vmatprep.subr.bf16.mxu0 0
        %995 = vmatpush1.bf16.msra.mxu0 0
        %996 = vmatprep.subr.bf16.mxu0 0
        %997 = vmatpush1.bf16.msra.mxu0 0
        %998 = vmatprep.subr.bf16.mxu0 0
        %999 = vmatpush1.bf16.msra.mxu0 0
        %1000 = vmatprep.subr.bf16.mxu0 0
        %1001 = vmatpush1.bf16.msra.mxu0 %v984
        %1002 = vmatprep.subr.bf16.mxu0 0
        %1003 = vmatpush2.bf16.msra.mxu0 0
        %1004 = vmatprep.subr.bf16.mxu0 0
        %1005 = vmatpush2.bf16.msra.mxu0 0
        %1006 = vmatprep.subr.bf16.mxu0 0
        %1007 = vmatpush2.bf16.msra.mxu0 0
        %1008 = vmatprep.subr.bf16.mxu0 0
        %1009 = vmatpush2.bf16.msra.mxu0 0
        %1010 = vmatprep.subr.bf16.mxu0 0
        %1011 = vmatpush2.bf16.msra.mxu0 0
        %1012 = vmatprep.subr.bf16.mxu0 0
        %1013 = vmatpush2.bf16.msra.mxu0 0
        %1014 = vmatprep.subr.bf16.mxu0 0
        %1015 = vmatpush2.bf16.msra.mxu0 0
        %1016 = vmatprep.subr.bf16.mxu0 0
        %1017 = vmatpush2.bf16.msra.mxu0 0
        %1018 = vmatprep.mubr.bf16.mxu0 0
        %1019 = vmatmul.mubr.bf16.gmra.mxu0 %v981
        %v1020 = vpop.f32.mrf.mxu0
        %v1021 = vadd.f32 0.0, %v1020
        %v1022 = vpop.f32.mrf.mxu0
        %v1023 = vpop.f32.mrf.mxu0
        %v1024 = vpop.f32.mrf.mxu0
        %1025 = vdwg.mxu0
        %1027 = vrot.lane.b32.xlu0 %v801, 8
        %v1028 = vpop.permute.xlu0 %1027
        %1031 = vrot.lane.b32.xlu0 %v911, 16
        %v1032 = vpop.permute.xlu0 %1031
        %1035 = vrot.lane.b32.xlu0 %v1021, 24
        %v1036 = vpop.permute.xlu0 %1035
        %v1038 = vsel %vm588, %v691, %v1028
        %vm1039 = vcmask 130048
        %v1040 = vsel %vm1039, %v1038, %v1032
        %vm1041 = vcmask 195584
        %v1042 = vsel %vm1041, %v1040, %v1036
        %v1043 = vpack.c.bf16 %v1042, %v1042
        %v1044 = vld [vmem:[%s3] sm:$0xf]
        %v1045 = vld [vmem:[%s3 + $0x4] sm:$0xf]
        %v1046 = vld [vmem:[%s3 + $0x8] sm:$0xf]
        %v1047 = vld [vmem:[%s3 + $0xc] sm:$0xf]
        %v1048 = vld [vmem:[#allocation5] sm:$0x1]
        %v1050 = vlaneseq
        %v1051 = vshrl.u32 %v1050, 7
        %v1052 = vsub.s32 0, %v1051
        %v1053 = vrot.slane %v1048, %v1052
        %v1059 = vunpack.c.l.b16 %v1044
        %v1060 = vunpack.c.l.b16 %v1045
        %v1061 = vunpack.c.l.b16 %v1046
        %v1062 = vunpack.c.l.b16 %v1047
        %v1063 = vpack.c.b16 %v1060, %v1059
        %v1064 = vpack.c.b16 %v1062, %v1061
        %v1068 = vsel %vm540, %v1043, 0
        %1070 = vmatprep.subr.bf16.mxu0 0
        %1071 = vmatpush1.bf16.msra.mxu0 0
        %1072 = vmatprep.subr.bf16.mxu0 0
        %1073 = vmatpush1.bf16.msra.mxu0 0
        %1074 = vmatprep.subr.bf16.mxu0 0
        %1075 = vmatpush1.bf16.msra.mxu0 0
        %1076 = vmatprep.subr.bf16.mxu0 0
        %1077 = vmatpush1.bf16.msra.mxu0 0
        %1078 = vmatprep.subr.bf16.mxu0 0
        %1079 = vmatpush1.bf16.msra.mxu0 0
        %1080 = vmatprep.subr.bf16.mxu0 0
        %1081 = vmatpush1.bf16.msra.mxu0 0
        %1082 = vmatprep.subr.bf16.mxu0 0
        %1083 = vmatpush1.bf16.msra.mxu0 %v1064
        %1084 = vmatprep.subr.bf16.mxu0 0
        %1085 = vmatpush1.bf16.msra.mxu0 %v1063
        %1086 = vmatprep.subr.bf16.mxu0 0
        %1087 = vmatpush2.bf16.msra.mxu0 0
        %1088 = vmatprep.subr.bf16.mxu0 0
        %1089 = vmatpush2.bf16.msra.mxu0 0
        %1090 = vmatprep.subr.bf16.mxu0 0
        %1091 = vmatpush2.bf16.msra.mxu0 0
        %1092 = vmatprep.subr.bf16.mxu0 0
        %1093 = vmatpush2.bf16.msra.mxu0 0
        %1094 = vmatprep.subr.bf16.mxu0 0
        %1095 = vmatpush2.bf16.msra.mxu0 0
        %1096 = vmatprep.subr.bf16.mxu0 0
        %1097 = vmatpush2.bf16.msra.mxu0 0
        %1098 = vmatprep.subr.bf16.mxu0 0
        %1099 = vmatpush2.bf16.msra.mxu0 0
        %1100 = vmatprep.subr.bf16.mxu0 0
        %1101 = vmatpush2.bf16.msra.mxu0 0
        %1102 = vmatprep.mubr.bf16.mxu0 0
        %1103 = vmatmul.mubr.bf16.gmra.mxu0 %v1068
        %v1104 = vpop.f32.mrf.mxu0
        %v1105 = vadd.f32 %v1053, %v1104
        %v1106 = vpop.f32.mrf.mxu0
        %v1107 = vpop.f32.mrf.mxu0
        %v1108 = vpop.f32.mrf.mxu0
        %1109 = vdwg.mxu0
        %v1110 = vadd.f32 %v515, %v1105
        %v1111 = vsel %vm540, %v1110, 0.0
        %1112 = vadd.xlane.f32.xlu0 %v1111
        %v1113 = vpop.xlane.xlu0 %1112
        %v1114 = vrcp.pop 32.0
        %v1115 = vmul.f32 %v1113, %v1114
        %v1116 = vsub.f32 %v1110, %v1115
        %v1117 = vmul.f32 %v1116, %v1116
        %v1118 = vsel %vm540, %v1117, 0.0
        %1119 = vadd.xlane.f32.xlu0 %v1118
        %v1120 = vpop.xlane.xlu0 %1119
        %v1121 = vmul.f32 %v1120, %v1114
        %v1122 = vadd.f32 %v1121, 1e-05
        %v1123 = vrsqrt.pop %v1122
        %v1124 = vmul.f32 %v1116, %v1123
        %v1125 = vld [vmem:[#allocation7] sm:$0x1]
        %v1127 = vlaneseq
        %v1128 = vshrl.u32 %v1127, 7
        %v1129 = vsub.s32 0, %v1128
        %v1130 = vrot.slane %v1125, %v1129
        %v1132 = vmul.f32 %v1124, %v1130
        %v1133 = vld [vmem:[#allocation8] sm:$0x1]
        %v1135 = vlaneseq
        %v1136 = vshrl.u32 %v1135, 7
        %v1137 = vsub.s32 0, %v1136
        %v1138 = vrot.slane %v1133, %v1137
        %v1140 = vadd.f32 %v1132, %v1138
        %v1141 = vpack.c.bf16 %v1140, %v1140
        %v1142 = vld [vmem:[#allocation10] sm:$0xf]
        %v1143 = vld [vmem:[#allocation10 + $0x4] sm:$0xf]
        %v1144 = vld [vmem:[#allocation10 + $0x8] sm:$0xf]
        %v1145 = vld [vmem:[#allocation10 + $0xc] sm:$0xf]
        %v1146 = vld [vmem:[#allocation11] sm:$0x1]
        %v1148 = vlaneseq
        %v1149 = vshrl.u32 %v1148, 7
        %v1150 = vsub.s32 0, %v1149
        %v1151 = vrot.slane %v1146, %v1150
        %v1157 = vunpack.c.l.b16 %v1142
        %v1158 = vunpack.c.l.b16 %v1143
        %v1159 = vunpack.c.l.b16 %v1144
        %v1160 = vunpack.c.l.b16 %v1145
        %v1161 = vpack.c.b16 %v1158, %v1157
        %v1162 = vpack.c.b16 %v1160, %v1159
        %v1166 = vsel %vm540, %v1141, 0
        %1168 = vmatprep.subr.bf16.mxu0 0
        %1169 = vmatpush1.bf16.msra.mxu0 0
        %1170 = vmatprep.subr.bf16.mxu0 0
        %1171 = vmatpush1.bf16.msra.mxu0 0
        %1172 = vmatprep.subr.bf16.mxu0 0
        %1173 = vmatpush1.bf16.msra.mxu0 0
        %1174 = vmatprep.subr.bf16.mxu0 0
        %1175 = vmatpush1.bf16.msra.mxu0 0
        %1176 = vmatprep.subr.bf16.mxu0 0
        %1177 = vmatpush1.bf16.msra.mxu0 0
        %1178 = vmatprep.subr.bf16.mxu0 0
        %1179 = vmatpush1.bf16.msra.mxu0 0
        %1180 = vmatprep.subr.bf16.mxu0 0
        %1181 = vmatpush1.bf16.msra.mxu0 %v1162
        %1182 = vmatprep.subr.bf16.mxu0 0
        %1183 = vmatpush1.bf16.msra.mxu0 %v1161
        %1184 = vmatprep.subr.bf16.mxu0 0
        %1185 = vmatpush2.bf16.msra.mxu0 0
        %1186 = vmatprep.subr.bf16.mxu0 0
        %1187 = vmatpush2.bf16.msra.mxu0 0
        %1188 = vmatprep.subr.bf16.mxu0 0
        %1189 = vmatpush2.bf16.msra.mxu0 0
        %1190 = vmatprep.subr.bf16.mxu0 0
        %1191 = vmatpush2.bf16.msra.mxu0 0
        %1192 = vmatprep.subr.bf16.mxu0 0
        %1193 = vmatpush2.bf16.msra.mxu0 0
        %1194 = vmatprep.subr.bf16.mxu0 0
        %1195 = vmatpush2.bf16.msra.mxu0 0
        %1196 = vmatprep.subr.bf16.mxu0 0
        %1197 = vmatpush2.bf16.msra.mxu0 0
        %1198 = vmatprep.subr.bf16.mxu0 0
        %1199 = vmatpush2.bf16.msra.mxu0 0
        %1200 = vmatprep.mubr.bf16.mxu0 0
        %1201 = vmatmul.mubr.bf16.gmra.mxu0 %v1166
        %v1202 = vpop.f32.mrf.mxu0
        %v1203 = vadd.f32 %v1151, %v1202
        %v1204 = vpop.f32.mrf.mxu0
        %v1205 = vpop.f32.mrf.mxu0
        %v1206 = vpop.f32.mrf.mxu0
        %1207 = vdwg.mxu0
        %v1208 = vmax.f32 %v1203, 0.0
        %v1209 = vpack.c.bf16 %v1208, %v1208
        %v1210 = vld [vmem:[%s9] sm:$0xf]
        %v1211 = vld [vmem:[%s9 + $0x4] sm:$0xf]
        %v1212 = vld [vmem:[%s9 + $0x8] sm:$0xf]
        %v1213 = vld [vmem:[%s9 + $0xc] sm:$0xf]
        %v1214 = vld [vmem:[%s9 + $0x10] sm:$0xf]
        %v1215 = vld [vmem:[%s9 + $0x14] sm:$0xf]
        %v1216 = vld [vmem:[%s9 + $0x18] sm:$0xf]
        %v1217 = vld [vmem:[%s9 + $0x1c] sm:$0xf]
        %v1218 = vld [vmem:[%s10] sm:$0x1]
        %v1220 = vlaneseq
        %v1221 = vshrl.u32 %v1220, 7
        %v1222 = vsub.s32 0, %v1221
        %v1223 = vrot.slane %v1218, %v1222
        %v1233 = vunpack.c.l.b16 %v1210
        %v1234 = vunpack.c.l.b16 %v1211
        %v1235 = vunpack.c.l.b16 %v1212
        %v1236 = vunpack.c.l.b16 %v1213
        %v1237 = vunpack.c.l.b16 %v1214
        %v1238 = vunpack.c.l.b16 %v1215
        %v1239 = vunpack.c.l.b16 %v1216
        %v1240 = vunpack.c.l.b16 %v1217
        %v1241 = vpack.c.b16 %v1234, %v1233
        %v1242 = vpack.c.b16 %v1236, %v1235
        %v1243 = vpack.c.b16 %v1238, %v1237
        %v1244 = vpack.c.b16 %v1240, %v1239
        %vm1249 = vcmask 523264
        %v1251 = vsel %vm1249, %v1209, 0
        %1253 = vmatprep.subr.bf16.mxu0 0
        %1254 = vmatpush1.bf16.msra.mxu0 0
        %1255 = vmatprep.subr.bf16.mxu0 0
        %1256 = vmatpush1.bf16.msra.mxu0 0
        %1257 = vmatprep.subr.bf16.mxu0 0
        %1258 = vmatpush1.bf16.msra.mxu0 0
        %1259 = vmatprep.subr.bf16.mxu0 0
        %1260 = vmatpush1.bf16.msra.mxu0 0
        %1261 = vmatprep.subr.bf16.mxu0 0
        %1262 = vmatpush1.bf16.msra.mxu0 %v1244
        %1263 = vmatprep.subr.bf16.mxu0 0
        %1264 = vmatpush1.bf16.msra.mxu0 %v1243
        %1265 = vmatprep.subr.bf16.mxu0 0
        %1266 = vmatpush1.bf16.msra.mxu0 %v1242
        %1267 = vmatprep.subr.bf16.mxu0 0
        %1268 = vmatpush1.bf16.msra.mxu0 %v1241
        %1269 = vmatprep.subr.bf16.mxu0 0
        %1270 = vmatpush2.bf16.msra.mxu0 0
        %1271 = vmatprep.subr.bf16.mxu0 0
        %1272 = vmatpush2.bf16.msra.mxu0 0
        %1273 = vmatprep.subr.bf16.mxu0 0
        %1274 = vmatpush2.bf16.msra.mxu0 0
        %1275 = vmatprep.subr.bf16.mxu0 0
        %1276 = vmatpush2.bf16.msra.mxu0 0
        %1277 = vmatprep.subr.bf16.mxu0 0
        %1278 = vmatpush2.bf16.msra.mxu0 0
        %1279 = vmatprep.subr.bf16.mxu0 0
        %1280 = vmatpush2.bf16.msra.mxu0 0
        %1281 = vmatprep.subr.bf16.mxu0 0
        %1282 = vmatpush2.bf16.msra.mxu0 0
        %1283 = vmatprep.subr.bf16.mxu0 0
        %1284 = vmatpush2.bf16.msra.mxu0 0
        %1285 = vmatprep.mubr.bf16.mxu0 0
        %1286 = vmatmul.mubr.bf16.gmra.mxu0 %v1251
        %v1287 = vpop.f32.mrf.mxu0
        %v1288 = vadd.f32 %v1223, %v1287
        %v1289 = vpop.f32.mrf.mxu0
        %v1290 = vpop.f32.mrf.mxu0
        %v1291 = vpop.f32.mrf.mxu0
        %1292 = vdwg.mxu0
        %v1293 = vadd.f32 %v1110, %v1288
        %v1294 = vsel %vm540, %v1293, 0.0
        %1295 = vadd.xlane.f32.xlu0 %v1294
        %v1296 = vpop.xlane.xlu0 %1295
        %v1297 = vmul.f32 %v1296, %v1114
        %v1298 = vsub.f32 %v1293, %v1297
        %v1299 = vmul.f32 %v1298, %v1298
        %v1300 = vsel %vm540, %v1299, 0.0
        %1301 = vadd.xlane.f32.xlu0 %v1300
        %v1302 = vpop.xlane.xlu0 %1301
        %v1303 = vmul.f32 %v1302, %v1114
        %v1304 = vadd.f32 %v1303, 1e-05
        %v1305 = vrsqrt.pop %v1304
        %v1306 = vmul.f32 %v1298, %v1305
        %v1307 = vld [vmem:[%s11] sm:$0x1]
        %v1309 = vlaneseq
        %v1310 = vshrl.u32 %v1309, 7
        %v1311 = vsub.s32 0, %v1310
        %v1312 = vrot.slane %v1307, %v1311
        %v1314 = vmul.f32 %v1306, %v1312
        %v1315 = vld [vmem:[%s12] sm:$0x1]
        %v1317 = vlaneseq
        %v1318 = vshrl.u32 %v1317, 7
        %v1319 = vsub.s32 0, %v1318
        %v1320 = vrot.slane %v1315, %v1319
        %v1322 = vadd.f32 %v1314, %v1320
        %1323 = vst.msk [vmem:[%s509] sm:$0xff] %vm540, %v1322
        %s1324 = sand.u32 %s317, 1
        %s1325 = scalar_lea.sflag [#allocation4], %s1324
        %s1326 = sand.u32 %s317, 1
        %s1327 = smul.addr %s1326, 8
        %s1328 = scalar_lea.vmem [#allocation13], %s1327
        // Predicated region
        $region97: #{tpu_custom_call.1} parent=71 // pred_check
          %p1329 = pneg %p327
        $region98: #{tpu_custom_call.1} parent=71 // pred_check_branch
          %1331 = sbr.rel (%p1329) target = $region100
        $region99: #{tpu_custom_call.1} parent=71 // pred_region
          %s1333 = ssub.s32 128, 128
          %1334 = vsyncadd %s1325, %s1333
          %s1335 = smul.addr %s31, 128
          %s1336 = scalar_lea.hbm %s13, %s1335
          %s1338 = sshll.u32 %s1328, 4
          %s1339 = int_to_ptr.vmem [resolvable:$true] %s1338
          %1341 = dma.vmem_to_hbm [thread:$0]  %s1339, 128, %s1336, %s1325
        $region100: #{tpu_custom_call.1} parent=71 // pred_fallthru
          _
      $region72: #{tpu_custom_call.1} parent=5 // pred_fallthru
        _
      %p1342 = scmp.le.s32.totalorder 2, %s26
      // Predicated region
      $region101: #{tpu_custom_call.1} parent=5 // pred_check
        %p1343 = pneg %p1342
      $region102: #{tpu_custom_call.1} parent=5 // pred_check_branch
        %1345 = sbr.rel (%p1343) target = $region104
      $region103: #{tpu_custom_call.1} parent=5 // pred_region
        %s1346 = ssub.s32 %s26, 2
        // Predicated region
        $region105: #{tpu_custom_call.1} parent=103 // pred_check
          %p1347 = pneg %p333
        $region106: #{tpu_custom_call.1} parent=103 // pred_check_branch
          %1349 = sbr.rel (%p1347) target = $region108
        $region107: #{tpu_custom_call.1} parent=103 // pred_region
          %s1350 = sand.u32 %s318, 1
          %s1351 = scalar_lea.sflag [#allocation4], %s1350
          %s1352 = sand.u32 %s318, 1
          %s1353 = smul.addr %s1352, 8
          %s1354 = scalar_lea.vmem [#allocation13], %s1353
          %1355 = dma.done %s1351, 128
        $region108: #{tpu_custom_call.1} parent=103 // pred_fallthru
          _
      $region104: #{tpu_custom_call.1} parent=5 // pred_fallthru
        _
    $region6: #{tpu_custom_call.1} parent=1 // loop_footer
      %s30 = sadd.s32 1, %s26
    $region7: #{tpu_custom_call.1} parent=1 // loop_footer_branch
      %25 = sbr.rel target = $region3
    $region8: #{tpu_custom_call.1} parent=1 // loop_exit
      _
    %1356 = vsyncpa [#allocation3], 1
    %s1357 = scalar_lea.sflag [#allocation3], 1
    %1358 = vsyncpa %s1357, 1
    %1359 = vsyncpa [#allocation6], 1
    %1360 = vsyncpa [#allocation9], 1
    %1361 = vsyncpa [#allocation12], 1
    %1362 = vsyncpa [#allocation4], 1
    %s1363 = scalar_lea.sflag [#allocation4], 1
    %1364 = vsyncpa %s1363, 1

</llo_original>
